<compile_context>
chip_gen: v7x
topology: tpu7x:2x2x1
jax: 0.10.0
libtpu: 0.0.40
codegen_flags: <defaults>
</compile_context>

<pallas_src>
import numpy as np

import jax
import jax.numpy as jnp
from jax.experimental import pallas as pl
from jax.experimental.pallas import tpu as pltpu

H_IN = 28          # 28 -> 13 -> 6 ; 64*6*6 = 2304 = Linear in_features
H1, H2 = 13, 6
C1, C2 = 64, 64


# ----------------------------------------------------------------------------
# Fused kernel: conv1 + leaky, conv2 + leaky, linear + sigmoid per image.
# ----------------------------------------------------------------------------
def _row_select(n_out, n_in, offset, stride=2):
    """One-hot matrix S such that (S @ X)[i] = X[stride*i + offset]."""
    r = jax.lax.broadcasted_iota(jnp.int32, (n_out, n_in), 0)
    c = jax.lax.broadcasted_iota(jnp.int32, (n_out, n_in), 1)
    return (c == stride * r + offset).astype(jnp.float32)


def _disc_kernel(x_ref, w1_ref, b1_ref, w2_ref, b2_ref, wl_ref, bl_ref, o_ref):
    f32 = jnp.float32
    x = x_ref[...]                                            # [28, 28]

    # ---- Conv2d(1, 64, 3, stride=2) + LeakyReLU(0.2) -> y1 [13, 13*64] ----
    y1 = jnp.zeros((H1, H1 * C1), f32)
    for kh in range(3):
        xr = jnp.dot(_row_select(H1, H_IN, kh), x,
                     preferred_element_type=f32)              # rows kh, kh+2, ...
        y1 = y1 + jnp.dot(xr, w1_ref[kh], preferred_element_type=f32)
    y1 = y1 + b1_ref[...]
    y1 = jnp.maximum(y1, 0.2 * y1)                            # LeakyReLU(0.2)

    # ---- Conv2d(64, 64, 3, stride=2) + LeakyReLU(0.2) -> y2 [6, 6*64] ----
    y2 = jnp.zeros((H2, H2 * C2), f32)
    for kh in range(3):
        yr = jnp.dot(_row_select(H2, H1, kh), y1,
                     preferred_element_type=f32)
        y2 = y2 + jnp.dot(yr, w2_ref[kh], preferred_element_type=f32)
    y2 = y2 + b2_ref[...]
    y2 = jnp.maximum(y2, 0.2 * y2)

    # ---- Flatten + Linear(2304, 1) + sigmoid (VPU mul + XLU reduction) ----
    logit = jnp.sum(y2 * wl_ref[...], axis=1, keepdims=True)  # [6, 1]
    logit = jnp.sum(logit, axis=0, keepdims=True) + bl_ref[...]  # [1, 1]
    o_ref[...] = (1.0 / (1.0 + jnp.exp(-logit))).astype(o_ref.dtype)


# ----------------------------------------------------------------------------
# One-time host-side parameter repacking (torch layouts -> kernel layouts).
# ----------------------------------------------------------------------------
def _conv_as_matmul_weight(w, w_in, w_out, stride=2):
    """Pack torch OIHW conv weights into per-kh matmul weights.

    W[kh, win*Cin + ci, wo*Cout + co] = w[co, ci, kh, win - stride*wo]
    (zero when win - stride*wo is outside [0, KW)).
    """
    w = np.asarray(w, np.float32)
    cout, cin, KH, KW = w.shape
    mat = np.zeros((KH, w_in * cin, w_out * cout), np.float32)
    for kh in range(KH):
        for kw in range(KW):
            for wo in range(w_out):
                win = stride * wo + kw
                mat[kh,
                    win * cin:(win + 1) * cin,
                    wo * cout:(wo + 1) * cout] = w[:, :, kh, kw].T
    return mat


def prepare_params(params):
    """Host-side, call once: repack PyTorch parameters for the fused kernel."""
    w1, b1, w2, b2, wl, bl = params
    W1 = _conv_as_matmul_weight(w1, H_IN, H1)                  # [3, 28, 832]
    W2 = _conv_as_matmul_weight(w2, H1, H2)                    # [3, 832, 384]
    b1t = np.tile(np.asarray(b1, np.float32), H1)[None, :]     # [1, 832]
    b2t = np.tile(np.asarray(b2, np.float32), H2)[None, :]     # [1, 384]
    # torch Flatten is (c, h, w)-major; the kernel keeps y2 as [h, w*64 + c].
    wlr = (np.asarray(wl, np.float32)
           .reshape(C2, H2, H2).transpose(1, 2, 0).reshape(H2, H2 * C2))
    blr = np.asarray(bl, np.float32).reshape(1, 1)
    return tuple(jnp.asarray(a) for a in (W1, b1t, W2, b2t, wlr, blr))


# ----------------------------------------------------------------------------
# Forward pass: a single pallas_call, grid over the batch.
# ----------------------------------------------------------------------------
@jax.jit
def discriminator_forward(x, prepped):
    W1, b1t, W2, b2t, wlr, blr = prepped
    n = x.shape[0]
    x2d = x.reshape(n, H_IN, H_IN)          # Cin == 1: drop the channel dim
    out = pl.pallas_call(
        _disc_kernel,
        out_shape=jax.ShapeDtypeStruct((n, 1, 1), jnp.float32),
        grid=(n,),
        in_specs=[
            pl.BlockSpec((None, H_IN, H_IN), lambda i: (i, 0, 0)),       # x
            pl.BlockSpec((3, H_IN, H1 * C1), lambda i: (0, 0, 0)),       # W1
            pl.BlockSpec((1, H1 * C1), lambda i: (0, 0)),                # b1
            pl.BlockSpec((3, H1 * C1, H2 * C2), lambda i: (0, 0, 0)),    # W2
            pl.BlockSpec((1, H2 * C2), lambda i: (0, 0)),                # b2
            pl.BlockSpec((H2, H2 * C2), lambda i: (0, 0)),               # wl
            pl.BlockSpec((1, 1), lambda i: (0, 0)),                      # bl
        ],
        out_specs=pl.BlockSpec((None, 1, 1), lambda i: (i, 0, 0)),
        compiler_params=pltpu.CompilerParams(
            dimension_semantics=("parallel",)),
    )(x2d, W1, b1t, W2, b2t, wlr, blr)
    return out.reshape(n, 1)


# ----------------------------------------------------------------------------
# Pure-JAX reference (torch semantics) for correctness checking.
# ----------------------------------------------------------------------------
def reference_forward(x, params):
    w1, b1, w2, b2, wl, bl = params
    dn = ("NCHW", "OIHW", "NCHW")
    y = jax.lax.conv_general_dilated(x, w1, (2, 2), "VALID", dimension_numbers=dn)
    y = y + b1[None, :, None, None]
    y = jnp.where(y > 0, y, 0.2 * y)
    y = jax.lax.conv_general_dilated(y, w2, (2, 2), "VALID", dimension_numbers=dn)
    y = y + b2[None, :, None, None]
    y = jnp.where(y > 0, y, 0.2 * y)
    y = y.reshape(y.shape[0], -1) @ wl.T + bl
    return jax.nn.sigmoid(y)


def init_params(key):
    k1, k2, k3, k4, k5, k6 = jax.random.split(key, 6)
    w1 = jax.random.normal(k1, (64, 1, 3, 3), jnp.float32) * 0.1    # Conv2d(1,64,3)
    b1 = jax.random.normal(k2, (64,), jnp.float32) * 0.1
    w2 = jax.random.normal(k3, (64, 64, 3, 3), jnp.float32) * 0.05  # Conv2d(64,64,3)
    b2 = jax.random.normal(k4, (64,), jnp.float32) * 0.1
    wl = jax.random.normal(k5, (1, 2304), jnp.float32) * 0.02       # Linear(2304,1)
    bl = jax.random.normal(k6, (1,), jnp.float32) * 0.1
    return (w1, b1, w2, b2, wl, bl)


if __name__ == "__main__":
    key = jax.random.PRNGKey(0)
    kx, kp = jax.random.split(key)
    params = init_params(kp)
    prepped = prepare_params(params)

    # Input: batch=2, single-channel 28x28 image (forced by Linear(2304, 1)).
    x = jax.random.normal(kx, (2, 1, 28, 28), jnp.float32)

    out = jax.block_until_ready(discriminator_forward(x, prepped))
    ref = jax.block_until_ready(reference_forward(x, params))

    assert out.shape == (2, 1), out.shape
    assert jnp.allclose(out, ref, atol=1e-3, rtol=1e-3), (out, ref)

    print("KERNEL_OK")
</pallas_src>

<mosaic_0001>
module attributes {stable_mosaic.version = 11 : i64} {
  func.func @_disc_kernel(%arg0: i32, %arg1: memref<1x28x28xf32, #tpu.memory_space<vmem>>, %arg2: memref<3x28x832xf32, #tpu.memory_space<vmem>>, %arg3: memref<1x832xf32, #tpu.memory_space<vmem>>, %arg4: memref<3x832x384xf32, #tpu.memory_space<vmem>>, %arg5: memref<1x384xf32, #tpu.memory_space<vmem>>, %arg6: memref<6x384xf32, #tpu.memory_space<vmem>>, %arg7: memref<1x1xf32, #tpu.memory_space<vmem>>, %arg8: memref<1x1x1xf32, #tpu.memory_space<vmem>>) attributes {dimension_semantics = [#tpu.dimension_semantics<parallel>], iteration_bounds = array<i64: 2>, scalar_prefetch = 0 : i64, scratch_operands = 0 : i64, tpu.core_type = #tpu.core_type<tc>, window_params = [{transform_indices = @transform_0, window_bounds = array<i64: 1, 28, 28>}, {pipeline_mode = #tpu.pipeline_mode<synchronous>, transform_indices = @transform_1, window_bounds = array<i64: 3, 28, 832>}, {pipeline_mode = #tpu.pipeline_mode<synchronous>, transform_indices = @transform_2, window_bounds = array<i64: 1, 832>}, {pipeline_mode = #tpu.pipeline_mode<synchronous>, transform_indices = @transform_3, window_bounds = array<i64: 3, 832, 384>}, {pipeline_mode = #tpu.pipeline_mode<synchronous>, transform_indices = @transform_4, window_bounds = array<i64: 1, 384>}, {pipeline_mode = #tpu.pipeline_mode<synchronous>, transform_indices = @transform_5, window_bounds = array<i64: 6, 384>}, {pipeline_mode = #tpu.pipeline_mode<synchronous>, transform_indices = @transform_6, window_bounds = array<i64: 1, 1>}, {transform_indices = @transform_7, window_bounds = array<i64: 1, 1, 1>}]} {
    %c0 = arith.constant 0 : index
    %c0_0 = arith.constant 0 : index
    %c0_1 = arith.constant 0 : index
    %0 = vector.load %arg1[%c0, %c0_0, %c0_1] : memref<1x28x28xf32, #tpu.memory_space<vmem>>, vector<1x28x28xf32>
    %1 = vector.shape_cast %0 : vector<1x28x28xf32> to vector<28x28xf32>
    %cst = arith.constant 0.000000e+00 : f32
    %2 = vector.broadcast %cst : f32 to vector<13x832xf32>
    %3 = tpu.iota {dimensions = array<i32: 0>} : vector<13x28xi32>
    %4 = tpu.iota {dimensions = array<i32: 1>} : vector<13x28xi32>
    %c2_i32 = arith.constant 2 : i32
    %5 = vector.broadcast %c2_i32 : i32 to vector<13x28xi32>
    %6 = arith.muli %5, %3 : vector<13x28xi32>
    %c0_i32 = arith.constant 0 : i32
    %7 = vector.broadcast %c0_i32 : i32 to vector<13x28xi32>
    %8 = arith.addi %6, %7 : vector<13x28xi32>
    %9 = arith.cmpi eq, %4, %8 : vector<13x28xi32>
    %10 = arith.extui %9 : vector<13x28xi1> to vector<13x28xi32>
    %11 = arith.sitofp %10 : vector<13x28xi32> to vector<13x28xf32>
    %cst_2 = arith.constant dense<0.000000e+00> : vector<13x28xf32>
    %12 = tpu.matmul %11, %1, %cst_2 {dimension_numbers = #tpu.dot_dimension_numbers<[1], [0], [0], [1], [0, 0, 1, 1], [], []>} : vector<13x28xf32>, vector<28x28xf32>, vector<13x28xf32> -> vector<13x28xf32>
    %c0_3 = arith.constant 0 : index
    %c0_4 = arith.constant 0 : index
    %c0_5 = arith.constant 0 : index
    %13 = vector.load %arg2[%c0_3, %c0_4, %c0_5] : memref<3x28x832xf32, #tpu.memory_space<vmem>>, vector<1x28x832xf32>
    %14 = vector.shape_cast %13 : vector<1x28x832xf32> to vector<28x832xf32>
    %cst_6 = arith.constant dense<0.000000e+00> : vector<13x832xf32>
    %15 = tpu.matmul %12, %14, %cst_6 {dimension_numbers = #tpu.dot_dimension_numbers<[1], [0], [0], [1], [0, 0, 1, 1], [], []>} : vector<13x28xf32>, vector<28x832xf32>, vector<13x832xf32> -> vector<13x832xf32>
    %16 = arith.addf %2, %15 : vector<13x832xf32>
    %17 = tpu.iota {dimensions = array<i32: 0>} : vector<13x28xi32>
    %18 = tpu.iota {dimensions = array<i32: 1>} : vector<13x28xi32>
    %c2_i32_7 = arith.constant 2 : i32
    %19 = vector.broadcast %c2_i32_7 : i32 to vector<13x28xi32>
    %20 = arith.muli %19, %17 : vector<13x28xi32>
    %c1_i32 = arith.constant 1 : i32
    %21 = vector.broadcast %c1_i32 : i32 to vector<13x28xi32>
    %22 = arith.addi %20, %21 : vector<13x28xi32>
    %23 = arith.cmpi eq, %18, %22 : vector<13x28xi32>
    %24 = arith.extui %23 : vector<13x28xi1> to vector<13x28xi32>
    %25 = arith.sitofp %24 : vector<13x28xi32> to vector<13x28xf32>
    %cst_8 = arith.constant dense<0.000000e+00> : vector<13x28xf32>
    %26 = tpu.matmul %25, %1, %cst_8 {dimension_numbers = #tpu.dot_dimension_numbers<[1], [0], [0], [1], [0, 0, 1, 1], [], []>} : vector<13x28xf32>, vector<28x28xf32>, vector<13x28xf32> -> vector<13x28xf32>
    %c1 = arith.constant 1 : index
    %c0_9 = arith.constant 0 : index
    %c0_10 = arith.constant 0 : index
    %27 = vector.load %arg2[%c1, %c0_9, %c0_10] : memref<3x28x832xf32, #tpu.memory_space<vmem>>, vector<1x28x832xf32>
    %28 = vector.shape_cast %27 : vector<1x28x832xf32> to vector<28x832xf32>
    %cst_11 = arith.constant dense<0.000000e+00> : vector<13x832xf32>
    %29 = tpu.matmul %26, %28, %cst_11 {dimension_numbers = #tpu.dot_dimension_numbers<[1], [0], [0], [1], [0, 0, 1, 1], [], []>} : vector<13x28xf32>, vector<28x832xf32>, vector<13x832xf32> -> vector<13x832xf32>
    %30 = arith.addf %16, %29 : vector<13x832xf32>
    %31 = tpu.iota {dimensions = array<i32: 0>} : vector<13x28xi32>
    %32 = tpu.iota {dimensions = array<i32: 1>} : vector<13x28xi32>
    %c2_i32_12 = arith.constant 2 : i32
    %33 = vector.broadcast %c2_i32_12 : i32 to vector<13x28xi32>
    %34 = arith.muli %33, %31 : vector<13x28xi32>
    %c2_i32_13 = arith.constant 2 : i32
    %35 = vector.broadcast %c2_i32_13 : i32 to vector<13x28xi32>
    %36 = arith.addi %34, %35 : vector<13x28xi32>
    %37 = arith.cmpi eq, %32, %36 : vector<13x28xi32>
    %38 = arith.extui %37 : vector<13x28xi1> to vector<13x28xi32>
    %39 = arith.sitofp %38 : vector<13x28xi32> to vector<13x28xf32>
    %cst_14 = arith.constant dense<0.000000e+00> : vector<13x28xf32>
    %40 = tpu.matmul %39, %1, %cst_14 {dimension_numbers = #tpu.dot_dimension_numbers<[1], [0], [0], [1], [0, 0, 1, 1], [], []>} : vector<13x28xf32>, vector<28x28xf32>, vector<13x28xf32> -> vector<13x28xf32>
    %c2 = arith.constant 2 : index
    %c0_15 = arith.constant 0 : index
    %c0_16 = arith.constant 0 : index
    %41 = vector.load %arg2[%c2, %c0_15, %c0_16] : memref<3x28x832xf32, #tpu.memory_space<vmem>>, vector<1x28x832xf32>
    %42 = vector.shape_cast %41 : vector<1x28x832xf32> to vector<28x832xf32>
    %cst_17 = arith.constant dense<0.000000e+00> : vector<13x832xf32>
    %43 = tpu.matmul %40, %42, %cst_17 {dimension_numbers = #tpu.dot_dimension_numbers<[1], [0], [0], [1], [0, 0, 1, 1], [], []>} : vector<13x28xf32>, vector<28x832xf32>, vector<13x832xf32> -> vector<13x832xf32>
    %44 = arith.addf %30, %43 : vector<13x832xf32>
    %c0_18 = arith.constant 0 : index
    %c0_19 = arith.constant 0 : index
    %45 = vector.load %arg3[%c0_18, %c0_19] : memref<1x832xf32, #tpu.memory_space<vmem>>, vector<1x832xf32>
    %46 = vector.broadcast %45 : vector<1x832xf32> to vector<13x832xf32>
    %47 = arith.addf %44, %46 : vector<13x832xf32>
    %cst_20 = arith.constant 2.000000e-01 : f32
    %48 = vector.broadcast %cst_20 : f32 to vector<13x832xf32>
    %49 = arith.mulf %48, %47 : vector<13x832xf32>
    %50 = arith.maximumf %47, %49 : vector<13x832xf32>
    %cst_21 = arith.constant 0.000000e+00 : f32
    %51 = vector.broadcast %cst_21 : f32 to vector<6x384xf32>
    %52 = tpu.iota {dimensions = array<i32: 0>} : vector<6x13xi32>
    %53 = tpu.iota {dimensions = array<i32: 1>} : vector<6x13xi32>
    %c2_i32_22 = arith.constant 2 : i32
    %54 = vector.broadcast %c2_i32_22 : i32 to vector<6x13xi32>
    %55 = arith.muli %54, %52 : vector<6x13xi32>
    %c0_i32_23 = arith.constant 0 : i32
    %56 = vector.broadcast %c0_i32_23 : i32 to vector<6x13xi32>
    %57 = arith.addi %55, %56 : vector<6x13xi32>
    %58 = arith.cmpi eq, %53, %57 : vector<6x13xi32>
    %59 = arith.extui %58 : vector<6x13xi1> to vector<6x13xi32>
    %60 = arith.sitofp %59 : vector<6x13xi32> to vector<6x13xf32>
    %cst_24 = arith.constant dense<0.000000e+00> : vector<6x832xf32>
    %61 = tpu.matmul %60, %50, %cst_24 {dimension_numbers = #tpu.dot_dimension_numbers<[1], [0], [0], [1], [0, 0, 1, 1], [], []>} : vector<6x13xf32>, vector<13x832xf32>, vector<6x832xf32> -> vector<6x832xf32>
    %c0_25 = arith.constant 0 : index
    %c0_26 = arith.constant 0 : index
    %c0_27 = arith.constant 0 : index
    %62 = vector.load %arg4[%c0_25, %c0_26, %c0_27] : memref<3x832x384xf32, #tpu.memory_space<vmem>>, vector<1x832x384xf32>
    %63 = vector.shape_cast %62 : vector<1x832x384xf32> to vector<832x384xf32>
    %cst_28 = arith.constant dense<0.000000e+00> : vector<6x384xf32>
    %64 = tpu.matmul %61, %63, %cst_28 {dimension_numbers = #tpu.dot_dimension_numbers<[1], [0], [0], [1], [0, 0, 1, 1], [], []>} : vector<6x832xf32>, vector<832x384xf32>, vector<6x384xf32> -> vector<6x384xf32>
    %65 = arith.addf %51, %64 : vector<6x384xf32>
    %66 = tpu.iota {dimensions = array<i32: 0>} : vector<6x13xi32>
    %67 = tpu.iota {dimensions = array<i32: 1>} : vector<6x13xi32>
    %c2_i32_29 = arith.constant 2 : i32
    %68 = vector.broadcast %c2_i32_29 : i32 to vector<6x13xi32>
    %69 = arith.muli %68, %66 : vector<6x13xi32>
    %c1_i32_30 = arith.constant 1 : i32
    %70 = vector.broadcast %c1_i32_30 : i32 to vector<6x13xi32>
    %71 = arith.addi %69, %70 : vector<6x13xi32>
    %72 = arith.cmpi eq, %67, %71 : vector<6x13xi32>
    %73 = arith.extui %72 : vector<6x13xi1> to vector<6x13xi32>
    %74 = arith.sitofp %73 : vector<6x13xi32> to vector<6x13xf32>
    %cst_31 = arith.constant dense<0.000000e+00> : vector<6x832xf32>
    %75 = tpu.matmul %74, %50, %cst_31 {dimension_numbers = #tpu.dot_dimension_numbers<[1], [0], [0], [1], [0, 0, 1, 1], [], []>} : vector<6x13xf32>, vector<13x832xf32>, vector<6x832xf32> -> vector<6x832xf32>
    %c1_32 = arith.constant 1 : index
    %c0_33 = arith.constant 0 : index
    %c0_34 = arith.constant 0 : index
    %76 = vector.load %arg4[%c1_32, %c0_33, %c0_34] : memref<3x832x384xf32, #tpu.memory_space<vmem>>, vector<1x832x384xf32>
    %77 = vector.shape_cast %76 : vector<1x832x384xf32> to vector<832x384xf32>
    %cst_35 = arith.constant dense<0.000000e+00> : vector<6x384xf32>
    %78 = tpu.matmul %75, %77, %cst_35 {dimension_numbers = #tpu.dot_dimension_numbers<[1], [0], [0], [1], [0, 0, 1, 1], [], []>} : vector<6x832xf32>, vector<832x384xf32>, vector<6x384xf32> -> vector<6x384xf32>
    %79 = arith.addf %65, %78 : vector<6x384xf32>
    %80 = tpu.iota {dimensions = array<i32: 0>} : vector<6x13xi32>
    %81 = tpu.iota {dimensions = array<i32: 1>} : vector<6x13xi32>
    %c2_i32_36 = arith.constant 2 : i32
    %82 = vector.broadcast %c2_i32_36 : i32 to vector<6x13xi32>
    %83 = arith.muli %82, %80 : vector<6x13xi32>
    %c2_i32_37 = arith.constant 2 : i32
    %84 = vector.broadcast %c2_i32_37 : i32 to vector<6x13xi32>
    %85 = arith.addi %83, %84 : vector<6x13xi32>
    %86 = arith.cmpi eq, %81, %85 : vector<6x13xi32>
    %87 = arith.extui %86 : vector<6x13xi1> to vector<6x13xi32>
    %88 = arith.sitofp %87 : vector<6x13xi32> to vector<6x13xf32>
    %cst_38 = arith.constant dense<0.000000e+00> : vector<6x832xf32>
    %89 = tpu.matmul %88, %50, %cst_38 {dimension_numbers = #tpu.dot_dimension_numbers<[1], [0], [0], [1], [0, 0, 1, 1], [], []>} : vector<6x13xf32>, vector<13x832xf32>, vector<6x832xf32> -> vector<6x832xf32>
    %c2_39 = arith.constant 2 : index
    %c0_40 = arith.constant 0 : index
    %c0_41 = arith.constant 0 : index
    %90 = vector.load %arg4[%c2_39, %c0_40, %c0_41] : memref<3x832x384xf32, #tpu.memory_space<vmem>>, vector<1x832x384xf32>
    %91 = vector.shape_cast %90 : vector<1x832x384xf32> to vector<832x384xf32>
    %cst_42 = arith.constant dense<0.000000e+00> : vector<6x384xf32>
    %92 = tpu.matmul %89, %91, %cst_42 {dimension_numbers = #tpu.dot_dimension_numbers<[1], [0], [0], [1], [0, 0, 1, 1], [], []>} : vector<6x832xf32>, vector<832x384xf32>, vector<6x384xf32> -> vector<6x384xf32>
    %93 = arith.addf %79, %92 : vector<6x384xf32>
    %c0_43 = arith.constant 0 : index
    %c0_44 = arith.constant 0 : index
    %94 = vector.load %arg5[%c0_43, %c0_44] : memref<1x384xf32, #tpu.memory_space<vmem>>, vector<1x384xf32>
    %95 = vector.broadcast %94 : vector<1x384xf32> to vector<6x384xf32>
    %96 = arith.addf %93, %95 : vector<6x384xf32>
    %cst_45 = arith.constant 2.000000e-01 : f32
    %97 = vector.broadcast %cst_45 : f32 to vector<6x384xf32>
    %98 = arith.mulf %97, %96 : vector<6x384xf32>
    %99 = arith.maximumf %96, %98 : vector<6x384xf32>
    %c0_46 = arith.constant 0 : index
    %c0_47 = arith.constant 0 : index
    %100 = vector.load %arg6[%c0_46, %c0_47] : memref<6x384xf32, #tpu.memory_space<vmem>>, vector<6x384xf32>
    %101 = arith.mulf %99, %100 : vector<6x384xf32>
    %cst_48 = arith.constant dense<0.000000e+00> : vector<6xf32>
    %102 = vector.multi_reduction <add>, %101, %cst_48 [1] : vector<6x384xf32> to vector<6xf32>
    %103 = vector.shape_cast %102 : vector<6xf32> to vector<6x1xf32>
    %cst_49 = arith.constant dense<0.000000e+00> : vector<1xf32>
    %104 = vector.multi_reduction <add>, %103, %cst_49 [0] : vector<6x1xf32> to vector<1xf32>
    %105 = vector.shape_cast %104 : vector<1xf32> to vector<1x1xf32>
    %c0_50 = arith.constant 0 : index
    %c0_51 = arith.constant 0 : index
    %106 = vector.load %arg7[%c0_50, %c0_51] : memref<1x1xf32, #tpu.memory_space<vmem>>, vector<1x1xf32>
    %107 = arith.addf %105, %106 : vector<1x1xf32>
    %cst_52 = arith.constant 0.000000e+00 : f32
    %108 = vector.broadcast %cst_52 : f32 to vector<1x1xf32>
    %109 = arith.subf %108, %107 : vector<1x1xf32>
    %110 = math.exp %109 : vector<1x1xf32>
    %cst_53 = arith.constant 1.000000e+00 : f32
    %111 = vector.broadcast %cst_53 : f32 to vector<1x1xf32>
    %112 = arith.addf %111, %110 : vector<1x1xf32>
    %cst_54 = arith.constant 1.000000e+00 : f32
    %113 = vector.broadcast %cst_54 : f32 to vector<1x1xf32>
    %114 = arith.divf %113, %112 : vector<1x1xf32>
    %c0_55 = arith.constant 0 : index
    %c0_56 = arith.constant 0 : index
    %c0_57 = arith.constant 0 : index
    %115 = vector.load %arg8[%c0_55, %c0_56, %c0_57] : memref<1x1x1xf32, #tpu.memory_space<vmem>>, vector<1x1x1xf32>
    %116 = vector.shape_cast %115 : vector<1x1x1xf32> to vector<1x1xf32>
    %117 = vector.shape_cast %114 : vector<1x1xf32> to vector<1x1x1xf32>
    tpu.vector_store %arg8[%c0_55, %c0_56, %c0_57], %117 {strides = array<i32>} : memref<1x1x1xf32, #tpu.memory_space<vmem>>, vector<1x1x1xf32>,
    return
  }
  func.func @transform_0(%arg0: i32) -> (i32, i32, i32) {
    %c0_i32 = arith.constant 0 : i32
    %c0_i32_0 = arith.constant 0 : i32
    %c0_i32_1 = arith.constant 0 : i32
    return %arg0, %c0_i32, %c0_i32_0 : i32, i32, i32
  }
  func.func @transform_1(%arg0: i32) -> (i32, i32, i32) {
    %c0_i32 = arith.constant 0 : i32
    %c0_i32_0 = arith.constant 0 : i32
    %c0_i32_1 = arith.constant 0 : i32
    %c0_i32_2 = arith.constant 0 : i32
    return %c0_i32, %c0_i32_0, %c0_i32_1 : i32, i32, i32
  }
  func.func @transform_2(%arg0: i32) -> (i32, i32) {
    %c0_i32 = arith.constant 0 : i32
    %c0_i32_0 = arith.constant 0 : i32
    %c0_i32_1 = arith.constant 0 : i32
    return %c0_i32, %c0_i32_0 : i32, i32
  }
  func.func @transform_3(%arg0: i32) -> (i32, i32, i32) {
    %c0_i32 = arith.constant 0 : i32
    %c0_i32_0 = arith.constant 0 : i32
    %c0_i32_1 = arith.constant 0 : i32
    %c0_i32_2 = arith.constant 0 : i32
    return %c0_i32, %c0_i32_0, %c0_i32_1 : i32, i32, i32
  }
  func.func @transform_4(%arg0: i32) -> (i32, i32) {
    %c0_i32 = arith.constant 0 : i32
    %c0_i32_0 = arith.constant 0 : i32
    %c0_i32_1 = arith.constant 0 : i32
    return %c0_i32, %c0_i32_0 : i32, i32
  }
  func.func @transform_5(%arg0: i32) -> (i32, i32) {
    %c0_i32 = arith.constant 0 : i32
    %c0_i32_0 = arith.constant 0 : i32
    %c0_i32_1 = arith.constant 0 : i32
    return %c0_i32, %c0_i32_0 : i32, i32
  }
  func.func @transform_6(%arg0: i32) -> (i32, i32) {
    %c0_i32 = arith.constant 0 : i32
    %c0_i32_0 = arith.constant 0 : i32
    %c0_i32_1 = arith.constant 0 : i32
    return %c0_i32, %c0_i32_0 : i32, i32
  }
  func.func @transform_7(%arg0: i32) -> (i32, i32, i32) {
    %c0_i32 = arith.constant 0 : i32
    %c0_i32_0 = arith.constant 0 : i32
    %c0_i32_1 = arith.constant 0 : i32
    return %arg0, %c0_i32, %c0_i32_0 : i32, i32, i32
  }
}

</mosaic_0001>

<llo_original>
// kernel: discriminator_forward.1
$region0: #{discriminator_forward.1}
  #allocation0 [shape = 'u32[]', space=smem, size = 0x4, offset = 0x4, fixed_abs, tag = 'smem constant byte address 0x4 - core index']
  #allocation1 [shape = 'u32[144,128]{1,0:T(1,128)}', space=vmem, size = 0x12000, scoped, tag = 'internal scratch']
  #allocation2 [shape = 'f32[1,1]{1,0:T(1,128)S(1)}', space=vmem, size = 0x200, scoped, tag = 'scoped memory for discriminator_forward.1']
  %s0 = inlined_call_operand.vmem [shape: f32[2,28,28], index: 0, kind: input, shape index: {}]
  %s1 = inlined_call_operand.hbm [shape: f32[3,28,832], index: 1, kind: input, shape index: {}]
  %s2 = inlined_call_operand.hbm [shape: f32[1,832], index: 2, kind: input, shape index: {}]
  %s3 = inlined_call_operand.hbm [shape: f32[3,832,384], index: 3, kind: input, shape index: {}]
  %s4 = inlined_call_operand.hbm [shape: f32[1,384], index: 4, kind: input, shape index: {}]
  %s5 = inlined_call_operand.hbm [shape: f32[6,384], index: 5, kind: input, shape index: {}]
  %s6 = inlined_call_operand.<no memory space> [shape: f32[1,1], index: 6, kind: input, shape index: {}]
  %s7 = inlined_call_operand.vmem [shape: f32[2,1,1], index: 7, kind: output, shape index: {}]
  %s8 = sld [smem:[#allocation0]]
  $region81: #{discriminator_forward.1} parent=0
    _
  %s10 = ssub.s32 1, %s8
  %s11 = scalar_select 0, %s10, %s8
  %v12 = vstv %s6
  %13 = vst [vmem:[#allocation2] sm:$0x1] %v12
  $region1: #{discriminator_forward.1} parent=0
    #allocation3 [shape = 'u8[344064]{0}', space=vmem, size = 0x54000, scoped, tag = 'input window, operand 1, single buffered']
    #allocation4 [shape = 's32[2]{0}', space=sflag, size = 0x8, scoped, tag = 'scoped memory for discriminator_forward.1']
    #allocation5 [shape = 'u8[3584]{0}', space=vmem, size = 0x1000, scoped, tag = 'input window, operand 2, single buffered']
    #allocation6 [shape = 's32[1]{0}', space=sflag, size = 0x4, scoped, tag = 'scoped memory for discriminator_forward.1']
    #allocation7 [shape = 'u8[3833856]{0}', space=vmem, size = 0x3a8000, scoped, tag = 'input window, operand 3, single buffered']
    #allocation8 [shape = 'u8[1536]{0}', space=vmem, size = 0x800, scoped, tag = 'input window, operand 4, single buffered']
    #allocation9 [shape = 's32[1]{0}', space=sflag, size = 0x4, scoped, tag = 'scoped memory for discriminator_forward.1']
    #allocation10 [shape = 'u8[12288]{0}', space=vmem, size = 0x3000, scoped, tag = 'input window, operand 5, single buffered']
    %14 = vsyncpa [#allocation4], 0
    %15 = vsyncpa [#allocation6], 0
    %16 = vsyncpa [#allocation9], 0
    loop: start=0, step=1, limit=4
    $region2: #{discriminator_forward.1} parent=1 // loop_pre_header
      _
    $region3: #{discriminator_forward.1} parent=1 // loop_header
      %s18 = sphi 0, %s22
      %p19 = scmp.ge.s32.totalorder %s18, 4
      %s28 = sphi 0, %s30
      %s31 = sphi 0, %s28
      %s32 = sphi 0, %s31
      %s48 = sphi 0, %s32
      %s52 = sphi 0, %s52
      %s54 = sphi 0, %s52
      %s55 = sphi 0, %s54
      %s69 = sphi 0, %s55
      %s73 = sphi 0, %s73
      %s75 = sphi 0, %s73
      %s76 = sphi 0, %s75
      %s90 = sphi 0, %s76
      %s94 = sphi 0, %s94
      %s96 = sphi 0, %s94
      %s97 = sphi 0, %s96
      %s111 = sphi 0, %s97
      %s115 = sphi 0, %s115
      %s117 = sphi 0, %s115
      %s118 = sphi 0, %s117
      %s132 = sphi 0, %s118
      %s136 = sphi 0, %s136
      %s138 = sphi 0, %s136
      %s139 = sphi 0, %s138
      %s153 = sphi 0, %s139
      %s157 = sphi 0, %s157
      %s159 = sphi 0, %s157
      %s160 = sphi 0, %s159
      %s174 = sphi 0, %s160
      %s180 = sphi 0, %s182
      %s183 = sphi 0, %s180
      %s184 = sphi 0, %s183
      %s200 = sphi 0, %s184
    $region4: #{discriminator_forward.1} parent=1 // loop_header_branch
      %21 = sbr.rel (%p19) target = $region8
    $region5: #{discriminator_forward.1} parent=1 // loop_body
      %s23 = ssub.s32 %s18, 1
      %s24 = ssub.s32 %s18, 2
      %s25 = sadd.s32 %s18, 1
      %s26 = ssub.s32 %s18, %s25
      %p27 = scmp.eq.s32.totalorder %s26, 0
      %s29 = sadd.s32 %s28, 1
      %s30 = scalar_select %p27, %s28, %s29
      %p33 = pneg %p27
      %p34 = scmp.eq.s32.totalorder %s18, 1
      %p35 = por %p33, %p34
      %p36 = scmp.ne.s32.totalorder %s28, %s31
      %p37 = scmp.eq.s32.totalorder %s18, 0
      %p38 = por %p36, %p37
      %p39 = scmp.ne.s32.totalorder %s28, %s31
      %p40 = scmp.eq.s32.totalorder %s23, 1
      %p41 = por %p39, %p40
      %p42 = scmp.ne.s32.totalorder %s31, %s32
      %p43 = scmp.eq.s32.totalorder %s23, 0
      %p44 = por %p42, %p43
      %p45 = scmp.ne.s32.totalorder %s31, %s32
      %p46 = scmp.eq.s32.totalorder %s24, 1
      %p47 = por %p45, %p46
      %p49 = scmp.ne.s32.totalorder %s32, %s48
      %p50 = scmp.eq.s32.totalorder %s24, 0
      %p51 = por %p49, %p50
      %s53 = sadd.s32 %s52, 1
      %p56 = scmp.eq.s32.totalorder %s18, 1
      %p57 = scmp.ne.s32.totalorder %s52, %s54
      %p58 = scmp.eq.s32.totalorder %s18, 0
      %p59 = por %p57, %p58
      %p60 = scmp.ne.s32.totalorder %s52, %s54
      %p61 = scmp.eq.s32.totalorder %s23, 1
      %p62 = por %p60, %p61
      %p63 = scmp.ne.s32.totalorder %s54, %s55
      %p64 = scmp.eq.s32.totalorder %s23, 0
      %p65 = por %p63, %p64
      %p66 = scmp.ne.s32.totalorder %s54, %s55
      %p67 = scmp.eq.s32.totalorder %s24, 1
      %p68 = por %p66, %p67
      %p70 = scmp.ne.s32.totalorder %s55, %s69
      %p71 = scmp.eq.s32.totalorder %s24, 0
      %p72 = por %p70, %p71
      %s74 = sadd.s32 %s73, 1
      %p77 = scmp.eq.s32.totalorder %s18, 1
      %p78 = scmp.ne.s32.totalorder %s73, %s75
      %p79 = scmp.eq.s32.totalorder %s18, 0
      %p80 = por %p78, %p79
      %p81 = scmp.ne.s32.totalorder %s73, %s75
      %p82 = scmp.eq.s32.totalorder %s23, 1
      %p83 = por %p81, %p82
      %p84 = scmp.ne.s32.totalorder %s75, %s76
      %p85 = scmp.eq.s32.totalorder %s23, 0
      %p86 = por %p84, %p85
      %p87 = scmp.ne.s32.totalorder %s75, %s76
      %p88 = scmp.eq.s32.totalorder %s24, 1
      %p89 = por %p87, %p88
      %p91 = scmp.ne.s32.totalorder %s76, %s90
      %p92 = scmp.eq.s32.totalorder %s24, 0
      %p93 = por %p91, %p92
      %s95 = sadd.s32 %s94, 1
      %p98 = scmp.eq.s32.totalorder %s18, 1
      %p99 = scmp.ne.s32.totalorder %s94, %s96
      %p100 = scmp.eq.s32.totalorder %s18, 0
      %p101 = por %p99, %p100
      %p102 = scmp.ne.s32.totalorder %s94, %s96
      %p103 = scmp.eq.s32.totalorder %s23, 1
      %p104 = por %p102, %p103
      %p105 = scmp.ne.s32.totalorder %s96, %s97
      %p106 = scmp.eq.s32.totalorder %s23, 0
      %p107 = por %p105, %p106
      %p108 = scmp.ne.s32.totalorder %s96, %s97
      %p109 = scmp.eq.s32.totalorder %s24, 1
      %p110 = por %p108, %p109
      %p112 = scmp.ne.s32.totalorder %s97, %s111
      %p113 = scmp.eq.s32.totalorder %s24, 0
      %p114 = por %p112, %p113
      %s116 = sadd.s32 %s115, 1
      %p119 = scmp.eq.s32.totalorder %s18, 1
      %p120 = scmp.ne.s32.totalorder %s115, %s117
      %p121 = scmp.eq.s32.totalorder %s18, 0
      %p122 = por %p120, %p121
      %p123 = scmp.ne.s32.totalorder %s115, %s117
      %p124 = scmp.eq.s32.totalorder %s23, 1
      %p125 = por %p123, %p124
      %p126 = scmp.ne.s32.totalorder %s117, %s118
      %p127 = scmp.eq.s32.totalorder %s23, 0
      %p128 = por %p126, %p127
      %p129 = scmp.ne.s32.totalorder %s117, %s118
      %p130 = scmp.eq.s32.totalorder %s24, 1
      %p131 = por %p129, %p130
      %p133 = scmp.ne.s32.totalorder %s118, %s132
      %p134 = scmp.eq.s32.totalorder %s24, 0
      %p135 = por %p133, %p134
      %s137 = sadd.s32 %s136, 1
      %p140 = scmp.eq.s32.totalorder %s18, 1
      %p141 = scmp.ne.s32.totalorder %s136, %s138
      %p142 = scmp.eq.s32.totalorder %s18, 0
      %p143 = por %p141, %p142
      %p144 = scmp.ne.s32.totalorder %s136, %s138
      %p145 = scmp.eq.s32.totalorder %s23, 1
      %p146 = por %p144, %p145
      %p147 = scmp.ne.s32.totalorder %s138, %s139
      %p148 = scmp.eq.s32.totalorder %s23, 0
      %p149 = por %p147, %p148
      %p150 = scmp.ne.s32.totalorder %s138, %s139
      %p151 = scmp.eq.s32.totalorder %s24, 1
      %p152 = por %p150, %p151
      %p154 = scmp.ne.s32.totalorder %s139, %s153
      %p155 = scmp.eq.s32.totalorder %s24, 0
      %p156 = por %p154, %p155
      %s158 = sadd.s32 %s157, 1
      %p161 = scmp.eq.s32.totalorder %s18, 1
      %p162 = scmp.ne.s32.totalorder %s157, %s159
      %p163 = scmp.eq.s32.totalorder %s18, 0
      %p164 = por %p162, %p163
      %p165 = scmp.ne.s32.totalorder %s157, %s159
      %p166 = scmp.eq.s32.totalorder %s23, 1
      %p167 = por %p165, %p166
      %p168 = scmp.ne.s32.totalorder %s159, %s160
      %p169 = scmp.eq.s32.totalorder %s23, 0
      %p170 = por %p168, %p169
      %p171 = scmp.ne.s32.totalorder %s159, %s160
      %p172 = scmp.eq.s32.totalorder %s24, 1
      %p173 = por %p171, %p172
      %p175 = scmp.ne.s32.totalorder %s160, %s174
      %p176 = scmp.eq.s32.totalorder %s24, 0
      %p177 = por %p175, %p176
      %s178 = ssub.s32 %s18, %s25
      %p179 = scmp.eq.s32.totalorder %s178, 0
      %s181 = sadd.s32 %s180, 1
      %s182 = scalar_select %p179, %s180, %s181
      %p185 = pneg %p179
      %p186 = scmp.eq.s32.totalorder %s18, 1
      %p187 = por %p185, %p186
      %p188 = scmp.ne.s32.totalorder %s180, %s183
      %p189 = scmp.eq.s32.totalorder %s18, 0
      %p190 = por %p188, %p189
      %p191 = scmp.ne.s32.totalorder %s180, %s183
      %p192 = scmp.eq.s32.totalorder %s23, 1
      %p193 = por %p191, %p192
      %p194 = scmp.ne.s32.totalorder %s183, %s184
      %p195 = scmp.eq.s32.totalorder %s23, 0
      %p196 = por %p194, %p195
      %p197 = scmp.ne.s32.totalorder %s183, %s184
      %p198 = scmp.eq.s32.totalorder %s24, 1
      %p199 = por %p197, %p198
      %p201 = scmp.ne.s32.totalorder %s184, %s200
      %p202 = scmp.eq.s32.totalorder %s24, 0
      %p203 = por %p201, %p202
      %p204 = scmp.le.s32.totalorder 1, %s18
      %p205 = scmp.lt.s32.totalorder %s18, 3
      %p206 = pnand %p204, %p205
      %p207 = pneg %p206
      // Predicated region
      $region9: #{discriminator_forward.1} parent=5 // pred_check
        _
      $region10: #{discriminator_forward.1} parent=5 // pred_check_branch
        %209 = sbr.rel (%p206) target = $region12
      $region11: #{discriminator_forward.1} parent=5 // pred_region
        %s210 = ssub.s32 %s18, 1
        // Predicated region
        $region13: #{discriminator_forward.1} parent=11 // pred_check
          %p211 = pneg %p65
        $region14: #{discriminator_forward.1} parent=11 // pred_check_branch
          %213 = sbr.rel (%p211) target = $region16
        $region15: #{discriminator_forward.1} parent=11 // pred_region
          %s215 = ssub.s32 10752, 10752
          %216 = vsyncadd [#allocation4], %s215
          %s217 = sshll.u32 [#allocation3], 4
          %s218 = int_to_ptr.vmem [resolvable:$true] %s217
          %223 = dma.hbm_to_vmem [thread:$0]  %s1, 10752, %s218, [#allocation4], 896, 896, 56
        $region16: #{discriminator_forward.1} parent=11 // pred_fallthru
          _
        // Predicated region
        $region17: #{discriminator_forward.1} parent=11 // pred_check
          %p224 = pneg %p86
        $region18: #{discriminator_forward.1} parent=11 // pred_check_branch
          %226 = sbr.rel (%p224) target = $region20
        $region19: #{discriminator_forward.1} parent=11 // pred_region
          %s228 = ssub.s32 112, 112
          %229 = vsyncadd [#allocation6], %s228
          %s231 = sshll.u32 [#allocation5], 4
          %s232 = int_to_ptr.vmem [resolvable:$true] %s231
          %234 = dma.hbm_to_vmem [thread:$0]  %s2, 112, %s232, [#allocation6]
        $region20: #{discriminator_forward.1} parent=11 // pred_fallthru
          _
        // Predicated region
        $region21: #{discriminator_forward.1} parent=11 // pred_check
          %p235 = pneg %p107
        $region22: #{discriminator_forward.1} parent=11 // pred_check_branch
          %237 = sbr.rel (%p235) target = $region24
        $region23: #{discriminator_forward.1} parent=11 // pred_region
          %s239 = ssub.s32 119808, 119808
          %240 = vsyncadd [#allocation6], %s239
          %s241 = sshll.u32 [#allocation7], 4
          %s242 = int_to_ptr.vmem [resolvable:$true] %s241
          %247 = dma.hbm_to_vmem [thread:$0]  %s3, 119808, %s242, [#allocation6], 384, 384, 24
        $region24: #{discriminator_forward.1} parent=11 // pred_fallthru
          _
        // Predicated region
        $region25: #{discriminator_forward.1} parent=11 // pred_check
          %p248 = pneg %p128
        $region26: #{discriminator_forward.1} parent=11 // pred_check_branch
          %250 = sbr.rel (%p248) target = $region28
        $region27: #{discriminator_forward.1} parent=11 // pred_region
          %s252 = ssub.s32 48, 48
          %253 = vsyncadd [#allocation9], %s252
          %s255 = sshll.u32 [#allocation8], 4
          %s256 = int_to_ptr.vmem [resolvable:$true] %s255
          %258 = dma.hbm_to_vmem [thread:$0]  %s4, 48, %s256, [#allocation9]
        $region28: #{discriminator_forward.1} parent=11 // pred_fallthru
          _
        // Predicated region
        $region29: #{discriminator_forward.1} parent=11 // pred_check
          %p259 = pneg %p149
        $region30: #{discriminator_forward.1} parent=11 // pred_check_branch
          %261 = sbr.rel (%p259) target = $region32
        $region31: #{discriminator_forward.1} parent=11 // pred_region
          %s263 = ssub.s32 384, 384
          %264 = vsyncadd [#allocation9], %s263
          %s266 = sshll.u32 [#allocation10], 4
          %s267 = int_to_ptr.vmem [resolvable:$true] %s266
          %269 = dma.hbm_to_vmem [thread:$0]  %s5, 384, %s267, [#allocation9]
        $region32: #{discriminator_forward.1} parent=11 // pred_fallthru
          _
        // Predicated region
        $region33: #{discriminator_forward.1} parent=11 // pred_check
          %p270 = pneg %p170
        $region34: #{discriminator_forward.1} parent=11 // pred_check_branch
          %272 = sbr.rel (%p270) target = $region36
        $region35: #{discriminator_forward.1} parent=11 // pred_region
          _
        $region36: #{discriminator_forward.1} parent=11 // pred_fallthru
          _
      $region12: #{discriminator_forward.1} parent=5 // pred_fallthru
        _
      %p273 = scmp.lt.s32.totalorder %s18, 2
      // Predicated region
      $region37: #{discriminator_forward.1} parent=5 // pred_check
        %p274 = pneg %p273
      $region38: #{discriminator_forward.1} parent=5 // pred_check_branch
        %276 = sbr.rel (%p274) target = $region40
      $region39: #{discriminator_forward.1} parent=5 // pred_region
        // Predicated region
        $region41: #{discriminator_forward.1} parent=39 // pred_check
          %p277 = pneg %p38
        $region42: #{discriminator_forward.1} parent=39 // pred_check_branch
          %279 = sbr.rel (%p277) target = $region44
        $region43: #{discriminator_forward.1} parent=39 // pred_region
          %p280 = scmp.lt.s32.totalorder %s18, 1
          %s281 = scalar_select %p280, %s18, 1
          %s282 = smul.addr %s281, 4
          %s283 = smul.addr %s282, 8
          %s284 = scalar_lea.vmem %s0, %s283
        $region44: #{discriminator_forward.1} parent=39 // pred_fallthru
          _
      $region40: #{discriminator_forward.1} parent=5 // pred_fallthru
        _
      %p285 = scmp.le.s32.totalorder 1, %s18
      %p286 = scmp.lt.s32.totalorder %s18, 3
      %p287 = pnand %p285, %p286
      %p288 = pneg %p287
      // Predicated region
      $region45: #{discriminator_forward.1} parent=5 // pred_check
        _
      $region46: #{discriminator_forward.1} parent=5 // pred_check_branch
        %290 = sbr.rel (%p287) target = $region48
      $region47: #{discriminator_forward.1} parent=5 // pred_region
        %s291 = ssub.s32 %s18, 1
        // Predicated region
        $region49: #{discriminator_forward.1} parent=47 // pred_check
          %p292 = pneg %p65
        $region50: #{discriminator_forward.1} parent=47 // pred_check_branch
          %294 = sbr.rel (%p292) target = $region52
        $region51: #{discriminator_forward.1} parent=47 // pred_region
          %295 = dma.done [#allocation4], 10752
        $region52: #{discriminator_forward.1} parent=47 // pred_fallthru
          _
        // Predicated region
        $region53: #{discriminator_forward.1} parent=47 // pred_check
          %p296 = pneg %p86
        $region54: #{discriminator_forward.1} parent=47 // pred_check_branch
          %298 = sbr.rel (%p296) target = $region56
        $region55: #{discriminator_forward.1} parent=47 // pred_region
          %299 = dma.done [#allocation6], 112
        $region56: #{discriminator_forward.1} parent=47 // pred_fallthru
          _
        // Predicated region
        $region57: #{discriminator_forward.1} parent=47 // pred_check
          %p300 = pneg %p107
        $region58: #{discriminator_forward.1} parent=47 // pred_check_branch
          %302 = sbr.rel (%p300) target = $region60
        $region59: #{discriminator_forward.1} parent=47 // pred_region
          %303 = dma.done [#allocation6], 119808
        $region60: #{discriminator_forward.1} parent=47 // pred_fallthru
          _
        // Predicated region
        $region61: #{discriminator_forward.1} parent=47 // pred_check
          %p304 = pneg %p128
        $region62: #{discriminator_forward.1} parent=47 // pred_check_branch
          %306 = sbr.rel (%p304) target = $region64
        $region63: #{discriminator_forward.1} parent=47 // pred_region
          %307 = dma.done [#allocation9], 48
        $region64: #{discriminator_forward.1} parent=47 // pred_fallthru
          _
        // Predicated region
        $region65: #{discriminator_forward.1} parent=47 // pred_check
          %p308 = pneg %p149
        $region66: #{discriminator_forward.1} parent=47 // pred_check_branch
          %310 = sbr.rel (%p308) target = $region68
        $region67: #{discriminator_forward.1} parent=47 // pred_region
          %311 = dma.done [#allocation9], 384
        $region68: #{discriminator_forward.1} parent=47 // pred_fallthru
          _
        %p312 = scmp.lt.s32.totalorder %s23, 1
        %s313 = scalar_select %p312, %s23, 1
        %s314 = smul.addr %s313, 4
        %s315 = smul.addr %s314, 8
        %s316 = scalar_lea.vmem %s0, %s315
        %p317 = pneg %p44
        %p318 = pneg %p41
        %p319 = pneg %p65
        %p320 = pneg %p62
        %p321 = pneg %p86
        %p322 = pneg %p83
        %p323 = pneg %p107
        %p324 = pneg %p104
        %p325 = pneg %p128
        %p326 = pneg %p125
        %p327 = pneg %p149
        %p328 = pneg %p146
        %p329 = pneg %p170
        %p330 = pneg %p167
        %p331 = pneg %p196
        %p332 = pneg %p193
        %p333 = scmp.lt.s32.totalorder %s23, 1
        %s334 = scalar_select %p333, %s23, 1
        %s335 = scalar_lea.vmem %s7, %s334
        %p336 = scmp.lt.s32.totalorder %s23, 1
        %s337 = scalar_select %p336, %s23, 1
        %s338 = smul.addr %s337, 4
        %s339 = smul.addr %s338, 8
        %s340 = scalar_lea.vmem %s0, %s339
        %p341 = scmp.lt.s32.totalorder %s23, 1
        %s342 = scalar_select %p341, %s23, 1
        %s343 = scalar_lea.vmem %s7, %s342
        %v344 = vld [vmem:[%s340] sm:$0xff]
        %v345 = vld [vmem:[%s340 + $0x8] sm:$0xff]
        %v346 = vld [vmem:[%s340 + $0x10] sm:$0xff]
        %v347 = vld [vmem:[%s340 + $0x18] sm:$0xf]
        %v348 = vlaneseq
        %v349 = vshrl.u32 %v348, 7
        %v350 = vadd.s32 %v349, 8
        %v351 = vlaneseq
        %v352 = vand.u32 %v351, 127
        %v353 = vmul.u32 %v349, 2
        %v354 = vmul.u32 %v350, 2
        %vm355 = vcmp.eq.s32.totalorder %v352, %v353
        %vm356 = vcmp.eq.s32.totalorder %v352, %v354
        %v357 = vsel %vm355, 1, 0
        %v358 = vsel %vm356, 1, 0
        %v359 = vcvt.s32.f32 %v357
        %v360 = vcvt.s32.f32 %v358
        %vm361 = vcmask 228352
        %v363 = vsel %vm361, %v359, 0
        %v366 = vsel %vm361, %v360, 0
        %vm368 = vcmask 1043456
        %v370 = vsel %vm368, %v347, 0
        %372 = vmatprep.subr.mxu0 0.0
        %373 = vmatpush1.msra.mxu0 %v344
        %374 = vmatprep.subr.mxu0 0.0
        %375 = vmatpush1.msra.mxu0 %v345
        %376 = vmatprep.subr.mxu0 0.0
        %377 = vmatpush1.msra.mxu0 %v346
        %378 = vmatprep.subr.mxu0 0.0
        %379 = vmatpush1.msra.mxu0 %v370
        %380 = vmatprep.subr.mxu0 0.0
        %381 = vmatpush1.msra.mxu0 0.0
        %382 = vmatprep.subr.mxu0 0.0
        %383 = vmatpush1.msra.mxu0 0.0
        %384 = vmatprep.subr.mxu0 0.0
        %385 = vmatpush1.msra.mxu0 0.0
        %386 = vmatprep.subr.mxu0 0.0
        %387 = vmatpush1.msra.mxu0 0.0
        %388 = vmatprep.subr.mxu0 0.0
        %389 = vmatpush1.msra.mxu0 0.0
        %390 = vmatprep.subr.mxu0 0.0
        %391 = vmatpush1.msra.mxu0 0.0
        %392 = vmatprep.subr.mxu0 0.0
        %393 = vmatpush1.msra.mxu0 0.0
        %394 = vmatprep.subr.mxu0 0.0
        %395 = vmatpush1.msra.mxu0 0.0
        %396 = vmatprep.subr.mxu0 0.0
        %397 = vmatpush1.msra.mxu0 0.0
        %398 = vmatprep.subr.mxu0 0.0
        %399 = vmatpush1.msra.mxu0 0.0
        %400 = vmatprep.subr.mxu0 0.0
        %401 = vmatpush1.msra.mxu0 0.0
        %402 = vmatprep.subr.mxu0 0.0
        %403 = vmatpush1.msra.mxu0 0.0
        %404 = vmatprep.subr.mxu0 0.0
        %405 = vmatpush1.msra.mxu0 0.0
        %406 = vmatprep.subr.mxu0 0.0
        %407 = vmatpush1.msra.mxu0 0.0
        %408 = vmatprep.subr.mxu0 0.0
        %409 = vmatpush1.msra.mxu0 0.0
        %410 = vmatprep.subr.mxu0 0.0
        %411 = vmatpush1.msra.mxu0 0.0
        %412 = vmatprep.subr.mxu0 0.0
        %413 = vmatpush1.msra.mxu0 0.0
        %414 = vmatprep.subr.mxu0 0.0
        %415 = vmatpush1.msra.mxu0 0.0
        %416 = vmatprep.subr.mxu0 0.0
        %417 = vmatpush1.msra.mxu0 0.0
        %418 = vmatprep.subr.mxu0 0.0
        %419 = vmatpush1.msra.mxu0 0.0
        %420 = vmatprep.subr.mxu0 0.0
        %421 = vmatpush1.msra.mxu0 0.0
        %422 = vmatprep.subr.mxu0 0.0
        %423 = vmatpush1.msra.mxu0 0.0
        %424 = vmatprep.subr.mxu0 0.0
        %425 = vmatpush1.msra.mxu0 0.0
        %426 = vmatprep.subr.mxu0 0.0
        %427 = vmatpush1.msra.mxu0 0.0
        %428 = vmatprep.subr.mxu0 0.0
        %429 = vmatpush1.msra.mxu0 0.0
        %430 = vmatprep.subr.mxu0 0.0
        %431 = vmatpush1.msra.mxu0 0.0
        %432 = vmatprep.subr.mxu0 0.0
        %433 = vmatpush1.msra.mxu0 0.0
        %434 = vmatprep.subr.mxu0 0.0
        %435 = vmatpush1.msra.mxu0 0.0
        %436 = vmatprep.mubr.f32.mxu0 0.0
        %437 = vmatmul.mubr.f32.gmra.mrb[0].mxu0 %v363
        %v438 = vpop.f32.mrb[0].mxu0
        %v439 = vadd.f32 0.0, %v438
        %v440 = vpop.f32.mrb[0].mxu0
        %441 = vmatprep.mubr.f32.mxu0 0.0
        %442 = vmatmul.mubr.f32.gmra.mrb[0].mxu0 %v366
        %v443 = vpop.f32.mrb[0].mxu0
        %v444 = vadd.f32 0.0, %v443
        %v445 = vpop.f32.mrb[0].mxu0
        %446 = vdwg.mxu0
        %v447 = vld [vmem:[#allocation3] sm:$0xff]
        %v448 = vld [vmem:[#allocation3 + $0x8] sm:$0xff]
        %v449 = vld [vmem:[#allocation3 + $0x10] sm:$0xff]
        %v450 = vld [vmem:[#allocation3 + $0x18] sm:$0xff]
        %v451 = vld [vmem:[#allocation3 + $0x20] sm:$0xff]
        %v452 = vld [vmem:[#allocation3 + $0x28] sm:$0xff]
        %v453 = vld [vmem:[#allocation3 + $0x30] sm:$0xff]
        %v454 = vld [vmem:[#allocation3 + $0x38] sm:$0xff]
        %v455 = vld [vmem:[#allocation3 + $0x40] sm:$0xff]
        %v456 = vld [vmem:[#allocation3 + $0x48] sm:$0xff]
        %v457 = vld [vmem:[#allocation3 + $0x50] sm:$0xff]
        %v458 = vld [vmem:[#allocation3 + $0x58] sm:$0xff]
        %v459 = vld [vmem:[#allocation3 + $0x60] sm:$0xff]
        %v460 = vld [vmem:[#allocation3 + $0x68] sm:$0xff]
        %v461 = vld [vmem:[#allocation3 + $0x70] sm:$0xff]
        %v462 = vld [vmem:[#allocation3 + $0x78] sm:$0xff]
        %v463 = vld [vmem:[#allocation3 + $0x80] sm:$0xff]
        %v464 = vld [vmem:[#allocation3 + $0x88] sm:$0xff]
        %v465 = vld [vmem:[#allocation3 + $0x90] sm:$0xff]
        %v466 = vld [vmem:[#allocation3 + $0x98] sm:$0xff]
        %v467 = vld [vmem:[#allocation3 + $0xa0] sm:$0xff]
        %v468 = vld [vmem:[#allocation3 + $0xa8] sm:$0xf]
        %v469 = vld [vmem:[#allocation3 + $0xb0] sm:$0xf]
        %v470 = vld [vmem:[#allocation3 + $0xb8] sm:$0xf]
        %v471 = vld [vmem:[#allocation3 + $0xc0] sm:$0xf]
        %v472 = vld [vmem:[#allocation3 + $0xc8] sm:$0xf]
        %v473 = vld [vmem:[#allocation3 + $0xd0] sm:$0xf]
        %v474 = vld [vmem:[#allocation3 + $0xd8] sm:$0xf]
        %v475 = vadd.s32 %v353, 1
        %v476 = vadd.s32 %v354, 1
        %vm477 = vcmp.eq.s32.totalorder %v352, %v475
        %vm478 = vcmp.eq.s32.totalorder %v352, %v476
        %v479 = vsel %vm477, 1, 0
        %v480 = vsel %vm478, 1, 0
        %v481 = vcvt.s32.f32 %v479
        %v482 = vcvt.s32.f32 %v480
        %v484 = vsel %vm361, %v481, 0
        %v487 = vsel %vm361, %v482, 0
        %489 = vmatprep.subr.mxu0 0.0
        %490 = vmatpush1.msra.mxu0 %v344
        %491 = vmatprep.subr.mxu0 0.0
        %492 = vmatpush1.msra.mxu0 %v345
        %493 = vmatprep.subr.mxu0 0.0
        %494 = vmatpush1.msra.mxu0 %v346
        %495 = vmatprep.subr.mxu0 0.0
        %496 = vmatpush1.msra.mxu0 %v370
        %497 = vmatprep.subr.mxu0 0.0
        %498 = vmatpush1.msra.mxu0 0.0
        %499 = vmatprep.subr.mxu0 0.0
        %500 = vmatpush1.msra.mxu0 0.0
        %501 = vmatprep.subr.mxu0 0.0
        %502 = vmatpush1.msra.mxu0 0.0
        %503 = vmatprep.subr.mxu0 0.0
        %504 = vmatpush1.msra.mxu0 0.0
        %505 = vmatprep.subr.mxu0 0.0
        %506 = vmatpush1.msra.mxu0 0.0
        %507 = vmatprep.subr.mxu0 0.0
        %508 = vmatpush1.msra.mxu0 0.0
        %509 = vmatprep.subr.mxu0 0.0
        %510 = vmatpush1.msra.mxu0 0.0
        %511 = vmatprep.subr.mxu0 0.0
        %512 = vmatpush1.msra.mxu0 0.0
        %513 = vmatprep.subr.mxu0 0.0
        %514 = vmatpush1.msra.mxu0 0.0
        %515 = vmatprep.subr.mxu0 0.0
        %516 = vmatpush1.msra.mxu0 0.0
        %517 = vmatprep.subr.mxu0 0.0
        %518 = vmatpush1.msra.mxu0 0.0
        %519 = vmatprep.subr.mxu0 0.0
        %520 = vmatpush1.msra.mxu0 0.0
        %521 = vmatprep.subr.mxu0 0.0
        %522 = vmatpush1.msra.mxu0 0.0
        %523 = vmatprep.subr.mxu0 0.0
        %524 = vmatpush1.msra.mxu0 0.0
        %525 = vmatprep.subr.mxu0 0.0
        %526 = vmatpush1.msra.mxu0 0.0
        %527 = vmatprep.subr.mxu0 0.0
        %528 = vmatpush1.msra.mxu0 0.0
        %529 = vmatprep.subr.mxu0 0.0
        %530 = vmatpush1.msra.mxu0 0.0
        %531 = vmatprep.subr.mxu0 0.0
        %532 = vmatpush1.msra.mxu0 0.0
        %533 = vmatprep.subr.mxu0 0.0
        %534 = vmatpush1.msra.mxu0 0.0
        %535 = vmatprep.subr.mxu0 0.0
        %536 = vmatpush1.msra.mxu0 0.0
        %537 = vmatprep.subr.mxu0 0.0
        %538 = vmatpush1.msra.mxu0 0.0
        %539 = vmatprep.subr.mxu0 0.0
        %540 = vmatpush1.msra.mxu0 0.0
        %541 = vmatprep.subr.mxu0 0.0
        %542 = vmatpush1.msra.mxu0 0.0
        %543 = vmatprep.subr.mxu0 0.0
        %544 = vmatpush1.msra.mxu0 0.0
        %545 = vmatprep.subr.mxu0 0.0
        %546 = vmatpush1.msra.mxu0 0.0
        %547 = vmatprep.subr.mxu0 0.0
        %548 = vmatpush1.msra.mxu0 0.0
        %549 = vmatprep.subr.mxu0 0.0
        %550 = vmatpush1.msra.mxu0 0.0
        %551 = vmatprep.subr.mxu0 0.0
        %552 = vmatpush1.msra.mxu0 0.0
        %553 = vmatprep.mubr.f32.mxu0 0.0
        %554 = vmatmul.mubr.f32.gmra.mrb[0].mxu0 %v484
        %v555 = vpop.f32.mrb[0].mxu0
        %v556 = vadd.f32 0.0, %v555
        %v557 = vpop.f32.mrb[0].mxu0
        %558 = vmatprep.mubr.f32.mxu0 0.0
        %559 = vmatmul.mubr.f32.gmra.mrb[0].mxu0 %v487
        %v560 = vpop.f32.mrb[0].mxu0
        %v561 = vadd.f32 0.0, %v560
        %v562 = vpop.f32.mrb[0].mxu0
        %563 = vdwg.mxu0
        %s564 = scalar_lea.vmem [#allocation3], 224
        %v565 = vld [vmem:[%s564] sm:$0xff]
        %v566 = vld [vmem:[%s564 + $0x8] sm:$0xff]
        %v567 = vld [vmem:[%s564 + $0x10] sm:$0xff]
        %v568 = vld [vmem:[%s564 + $0x18] sm:$0xff]
        %v569 = vld [vmem:[%s564 + $0x20] sm:$0xff]
        %v570 = vld [vmem:[%s564 + $0x28] sm:$0xff]
        %v571 = vld [vmem:[%s564 + $0x30] sm:$0xff]
        %v572 = vld [vmem:[%s564 + $0x38] sm:$0xff]
        %v573 = vld [vmem:[%s564 + $0x40] sm:$0xff]
        %v574 = vld [vmem:[%s564 + $0x48] sm:$0xff]
        %v575 = vld [vmem:[%s564 + $0x50] sm:$0xff]
        %v576 = vld [vmem:[%s564 + $0x58] sm:$0xff]
        %v577 = vld [vmem:[%s564 + $0x60] sm:$0xff]
        %v578 = vld [vmem:[%s564 + $0x68] sm:$0xff]
        %v579 = vld [vmem:[%s564 + $0x70] sm:$0xff]
        %v580 = vld [vmem:[%s564 + $0x78] sm:$0xff]
        %v581 = vld [vmem:[%s564 + $0x80] sm:$0xff]
        %v582 = vld [vmem:[%s564 + $0x88] sm:$0xff]
        %v583 = vld [vmem:[%s564 + $0x90] sm:$0xff]
        %v584 = vld [vmem:[%s564 + $0x98] sm:$0xff]
        %v585 = vld [vmem:[%s564 + $0xa0] sm:$0xff]
        %v586 = vld [vmem:[%s564 + $0xa8] sm:$0xf]
        %v587 = vld [vmem:[%s564 + $0xb0] sm:$0xf]
        %v588 = vld [vmem:[%s564 + $0xb8] sm:$0xf]
        %v589 = vld [vmem:[%s564 + $0xc0] sm:$0xf]
        %v590 = vld [vmem:[%s564 + $0xc8] sm:$0xf]
        %v591 = vld [vmem:[%s564 + $0xd0] sm:$0xf]
        %v592 = vld [vmem:[%s564 + $0xd8] sm:$0xf]
        %v594 = vsel %vm361, %v556, 0
        %v597 = vsel %vm361, %v561, 0
        %v600 = vsel %vm368, %v586, 0
        %v603 = vsel %vm368, %v587, 0
        %v606 = vsel %vm368, %v588, 0
        %v609 = vsel %vm368, %v589, 0
        %v612 = vsel %vm368, %v590, 0
        %v615 = vsel %vm368, %v591, 0
        %v618 = vsel %vm368, %v592, 0
        %620 = vmatprep.subr.mxu0 %v566
        %621 = vmatpush1.msra.mxu0 %v565
        %622 = vmatprep.subr.mxu0 %v573
        %623 = vmatpush1.msra.mxu0 %v572
        %624 = vmatprep.subr.mxu0 %v580
        %625 = vmatpush1.msra.mxu0 %v579
        %626 = vmatprep.subr.mxu0 %v603
        %627 = vmatpush1.msra.mxu0 %v600
        %628 = vmatprep.subr.mxu0 0.0
        %629 = vmatpush1.msra.mxu0 0.0
        %630 = vmatprep.subr.mxu0 0.0
        %631 = vmatpush1.msra.mxu0 0.0
        %632 = vmatprep.subr.mxu0 0.0
        %633 = vmatpush1.msra.mxu0 0.0
        %634 = vmatprep.subr.mxu0 0.0
        %635 = vmatpush1.msra.mxu0 0.0
        %636 = vmatprep.subr.mxu0 0.0
        %637 = vmatpush1.msra.mxu0 0.0
        %638 = vmatprep.subr.mxu0 0.0
        %639 = vmatpush1.msra.mxu0 0.0
        %640 = vmatprep.subr.mxu0 0.0
        %641 = vmatpush1.msra.mxu0 0.0
        %642 = vmatprep.subr.mxu0 0.0
        %643 = vmatpush1.msra.mxu0 0.0
        %644 = vmatprep.subr.mxu0 0.0
        %645 = vmatpush1.msra.mxu0 0.0
        %646 = vmatprep.subr.mxu0 0.0
        %647 = vmatpush1.msra.mxu0 0.0
        %648 = vmatprep.subr.mxu0 0.0
        %649 = vmatpush1.msra.mxu0 0.0
        %650 = vmatprep.subr.mxu0 0.0
        %651 = vmatpush1.msra.mxu0 0.0
        %652 = vmatprep.subr.mxu0 0.0
        %653 = vmatpush1.msra.mxu0 0.0
        %654 = vmatprep.subr.mxu0 0.0
        %655 = vmatpush1.msra.mxu0 0.0
        %656 = vmatprep.subr.mxu0 0.0
        %657 = vmatpush1.msra.mxu0 0.0
        %658 = vmatprep.subr.mxu0 0.0
        %659 = vmatpush1.msra.mxu0 0.0
        %660 = vmatprep.subr.mxu0 0.0
        %661 = vmatpush1.msra.mxu0 0.0
        %662 = vmatprep.subr.mxu0 0.0
        %663 = vmatpush1.msra.mxu0 0.0
        %664 = vmatprep.subr.mxu0 0.0
        %665 = vmatpush1.msra.mxu0 0.0
        %666 = vmatprep.subr.mxu0 0.0
        %667 = vmatpush1.msra.mxu0 0.0
        %668 = vmatprep.subr.mxu0 0.0
        %669 = vmatpush1.msra.mxu0 0.0
        %670 = vmatprep.subr.mxu0 0.0
        %671 = vmatpush1.msra.mxu0 0.0
        %672 = vmatprep.subr.mxu0 0.0
        %673 = vmatpush1.msra.mxu0 0.0
        %674 = vmatprep.subr.mxu0 0.0
        %675 = vmatpush1.msra.mxu0 0.0
        %676 = vmatprep.subr.mxu0 0.0
        %677 = vmatpush1.msra.mxu0 0.0
        %678 = vmatprep.subr.mxu0 0.0
        %679 = vmatpush1.msra.mxu0 0.0
        %680 = vmatprep.subr.mxu0 0.0
        %681 = vmatpush1.msra.mxu0 0.0
        %682 = vmatprep.subr.mxu0 0.0
        %683 = vmatpush1.msra.mxu0 0.0
        %684 = vmatprep.mubr.f32.mxu0 0.0
        %685 = vmatmul.mubr.f32.gmra.mrb[0].mxu0 %v594
        %v686 = vpop.f32.mrb[0].mxu0
        %v687 = vadd.f32 0.0, %v686
        %v688 = vpop.f32.mrb[0].mxu0
        %v689 = vadd.f32 0.0, %v688
        %690 = vmatprep.mubr.f32.mxu0 0.0
        %691 = vmatmul.mubr.f32.gmra.mrb[0].mxu0 %v597
        %v692 = vpop.f32.mrb[0].mxu0
        %v693 = vadd.f32 0.0, %v692
        %v694 = vpop.f32.mrb[0].mxu0
        %v695 = vadd.f32 0.0, %v694
        %696 = vdwg.mxu0
        %697 = vmatprep.subr.mxu0 %v568
        %698 = vmatpush1.msra.mxu0 %v567
        %699 = vmatprep.subr.mxu0 %v575
        %700 = vmatpush1.msra.mxu0 %v574
        %701 = vmatprep.subr.mxu0 %v582
        %702 = vmatpush1.msra.mxu0 %v581
        %703 = vmatprep.subr.mxu0 %v609
        %704 = vmatpush1.msra.mxu0 %v606
        %705 = vmatprep.subr.mxu0 0.0
        %706 = vmatpush1.msra.mxu0 0.0
        %707 = vmatprep.subr.mxu0 0.0
        %708 = vmatpush1.msra.mxu0 0.0
        %709 = vmatprep.subr.mxu0 0.0
        %710 = vmatpush1.msra.mxu0 0.0
        %711 = vmatprep.subr.mxu0 0.0
        %712 = vmatpush1.msra.mxu0 0.0
        %713 = vmatprep.subr.mxu0 0.0
        %714 = vmatpush1.msra.mxu0 0.0
        %715 = vmatprep.subr.mxu0 0.0
        %716 = vmatpush1.msra.mxu0 0.0
        %717 = vmatprep.subr.mxu0 0.0
        %718 = vmatpush1.msra.mxu0 0.0
        %719 = vmatprep.subr.mxu0 0.0
        %720 = vmatpush1.msra.mxu0 0.0
        %721 = vmatprep.subr.mxu0 0.0
        %722 = vmatpush1.msra.mxu0 0.0
        %723 = vmatprep.subr.mxu0 0.0
        %724 = vmatpush1.msra.mxu0 0.0
        %725 = vmatprep.subr.mxu0 0.0
        %726 = vmatpush1.msra.mxu0 0.0
        %727 = vmatprep.subr.mxu0 0.0
        %728 = vmatpush1.msra.mxu0 0.0
        %729 = vmatprep.subr.mxu0 0.0
        %730 = vmatpush1.msra.mxu0 0.0
        %731 = vmatprep.subr.mxu0 0.0
        %732 = vmatpush1.msra.mxu0 0.0
        %733 = vmatprep.subr.mxu0 0.0
        %734 = vmatpush1.msra.mxu0 0.0
        %735 = vmatprep.subr.mxu0 0.0
        %736 = vmatpush1.msra.mxu0 0.0
        %737 = vmatprep.subr.mxu0 0.0
        %738 = vmatpush1.msra.mxu0 0.0
        %739 = vmatprep.subr.mxu0 0.0
        %740 = vmatpush1.msra.mxu0 0.0
        %741 = vmatprep.subr.mxu0 0.0
        %742 = vmatpush1.msra.mxu0 0.0
        %743 = vmatprep.subr.mxu0 0.0
        %744 = vmatpush1.msra.mxu0 0.0
        %745 = vmatprep.subr.mxu0 0.0
        %746 = vmatpush1.msra.mxu0 0.0
        %747 = vmatprep.subr.mxu0 0.0
        %748 = vmatpush1.msra.mxu0 0.0
        %749 = vmatprep.subr.mxu0 0.0
        %750 = vmatpush1.msra.mxu0 0.0
        %751 = vmatprep.subr.mxu0 0.0
        %752 = vmatpush1.msra.mxu0 0.0
        %753 = vmatprep.subr.mxu0 0.0
        %754 = vmatpush1.msra.mxu0 0.0
        %755 = vmatprep.subr.mxu0 0.0
        %756 = vmatpush1.msra.mxu0 0.0
        %757 = vmatprep.subr.mxu0 0.0
        %758 = vmatpush1.msra.mxu0 0.0
        %759 = vmatprep.subr.mxu0 0.0
        %760 = vmatpush1.msra.mxu0 0.0
        %761 = vmatprep.mubr.f32.mxu0 0.0
        %762 = vmatmul.mubr.f32.gmra.mrb[0].mxu0 %v594
        %v763 = vpop.f32.mrb[0].mxu0
        %v764 = vadd.f32 0.0, %v763
        %v765 = vpop.f32.mrb[0].mxu0
        %v766 = vadd.f32 0.0, %v765
        %767 = vmatprep.mubr.f32.mxu0 0.0
        %768 = vmatmul.mubr.f32.gmra.mrb[0].mxu0 %v597
        %v769 = vpop.f32.mrb[0].mxu0
        %v770 = vadd.f32 0.0, %v769
        %v771 = vpop.f32.mrb[0].mxu0
        %v772 = vadd.f32 0.0, %v771
        %773 = vdwg.mxu0
        %774 = vmatprep.subr.mxu0 %v570
        %775 = vmatpush1.msra.mxu0 %v569
        %776 = vmatprep.subr.mxu0 %v577
        %777 = vmatpush1.msra.mxu0 %v576
        %778 = vmatprep.subr.mxu0 %v584
        %779 = vmatpush1.msra.mxu0 %v583
        %780 = vmatprep.subr.mxu0 %v615
        %781 = vmatpush1.msra.mxu0 %v612
        %782 = vmatprep.subr.mxu0 0.0
        %783 = vmatpush1.msra.mxu0 0.0
        %784 = vmatprep.subr.mxu0 0.0
        %785 = vmatpush1.msra.mxu0 0.0
        %786 = vmatprep.subr.mxu0 0.0
        %787 = vmatpush1.msra.mxu0 0.0
        %788 = vmatprep.subr.mxu0 0.0
        %789 = vmatpush1.msra.mxu0 0.0
        %790 = vmatprep.subr.mxu0 0.0
        %791 = vmatpush1.msra.mxu0 0.0
        %792 = vmatprep.subr.mxu0 0.0
        %793 = vmatpush1.msra.mxu0 0.0
        %794 = vmatprep.subr.mxu0 0.0
        %795 = vmatpush1.msra.mxu0 0.0
        %796 = vmatprep.subr.mxu0 0.0
        %797 = vmatpush1.msra.mxu0 0.0
        %798 = vmatprep.subr.mxu0 0.0
        %799 = vmatpush1.msra.mxu0 0.0
        %800 = vmatprep.subr.mxu0 0.0
        %801 = vmatpush1.msra.mxu0 0.0
        %802 = vmatprep.subr.mxu0 0.0
        %803 = vmatpush1.msra.mxu0 0.0
        %804 = vmatprep.subr.mxu0 0.0
        %805 = vmatpush1.msra.mxu0 0.0
        %806 = vmatprep.subr.mxu0 0.0
        %807 = vmatpush1.msra.mxu0 0.0
        %808 = vmatprep.subr.mxu0 0.0
        %809 = vmatpush1.msra.mxu0 0.0
        %810 = vmatprep.subr.mxu0 0.0
        %811 = vmatpush1.msra.mxu0 0.0
        %812 = vmatprep.subr.mxu0 0.0
        %813 = vmatpush1.msra.mxu0 0.0
        %814 = vmatprep.subr.mxu0 0.0
        %815 = vmatpush1.msra.mxu0 0.0
        %816 = vmatprep.subr.mxu0 0.0
        %817 = vmatpush1.msra.mxu0 0.0
        %818 = vmatprep.subr.mxu0 0.0
        %819 = vmatpush1.msra.mxu0 0.0
        %820 = vmatprep.subr.mxu0 0.0
        %821 = vmatpush1.msra.mxu0 0.0
        %822 = vmatprep.subr.mxu0 0.0
        %823 = vmatpush1.msra.mxu0 0.0
        %824 = vmatprep.subr.mxu0 0.0
        %825 = vmatpush1.msra.mxu0 0.0
        %826 = vmatprep.subr.mxu0 0.0
        %827 = vmatpush1.msra.mxu0 0.0
        %828 = vmatprep.subr.mxu0 0.0
        %829 = vmatpush1.msra.mxu0 0.0
        %830 = vmatprep.subr.mxu0 0.0
        %831 = vmatpush1.msra.mxu0 0.0
        %832 = vmatprep.subr.mxu0 0.0
        %833 = vmatpush1.msra.mxu0 0.0
        %834 = vmatprep.subr.mxu0 0.0
        %835 = vmatpush1.msra.mxu0 0.0
        %836 = vmatprep.subr.mxu0 0.0
        %837 = vmatpush1.msra.mxu0 0.0
        %838 = vmatprep.mubr.f32.mxu0 0.0
        %839 = vmatmul.mubr.f32.gmra.mrb[0].mxu0 %v594
        %v840 = vpop.f32.mrb[0].mxu0
        %v841 = vadd.f32 0.0, %v840
        %v842 = vpop.f32.mrb[0].mxu0
        %v843 = vadd.f32 0.0, %v842
        %844 = vmatprep.mubr.f32.mxu0 0.0
        %845 = vmatmul.mubr.f32.gmra.mrb[0].mxu0 %v597
        %v846 = vpop.f32.mrb[0].mxu0
        %v847 = vadd.f32 0.0, %v846
        %v848 = vpop.f32.mrb[0].mxu0
        %v849 = vadd.f32 0.0, %v848
        %850 = vdwg.mxu0
        %851 = vmatprep.subr.mxu0 0.0
        %852 = vmatpush1.msra.mxu0 %v571
        %853 = vmatprep.subr.mxu0 0.0
        %854 = vmatpush1.msra.mxu0 %v578
        %855 = vmatprep.subr.mxu0 0.0
        %856 = vmatpush1.msra.mxu0 %v585
        %857 = vmatprep.subr.mxu0 0.0
        %858 = vmatpush1.msra.mxu0 %v618
        %859 = vmatprep.subr.mxu0 0.0
        %860 = vmatpush1.msra.mxu0 0.0
        %861 = vmatprep.subr.mxu0 0.0
        %862 = vmatpush1.msra.mxu0 0.0
        %863 = vmatprep.subr.mxu0 0.0
        %864 = vmatpush1.msra.mxu0 0.0
        %865 = vmatprep.subr.mxu0 0.0
        %866 = vmatpush1.msra.mxu0 0.0
        %867 = vmatprep.subr.mxu0 0.0
        %868 = vmatpush1.msra.mxu0 0.0
        %869 = vmatprep.subr.mxu0 0.0
        %870 = vmatpush1.msra.mxu0 0.0
        %871 = vmatprep.subr.mxu0 0.0
        %872 = vmatpush1.msra.mxu0 0.0
        %873 = vmatprep.subr.mxu0 0.0
        %874 = vmatpush1.msra.mxu0 0.0
        %875 = vmatprep.subr.mxu0 0.0
        %876 = vmatpush1.msra.mxu0 0.0
        %877 = vmatprep.subr.mxu0 0.0
        %878 = vmatpush1.msra.mxu0 0.0
        %879 = vmatprep.subr.mxu0 0.0
        %880 = vmatpush1.msra.mxu0 0.0
        %881 = vmatprep.subr.mxu0 0.0
        %882 = vmatpush1.msra.mxu0 0.0
        %883 = vmatprep.subr.mxu0 0.0
        %884 = vmatpush1.msra.mxu0 0.0
        %885 = vmatprep.subr.mxu0 0.0
        %886 = vmatpush1.msra.mxu0 0.0
        %887 = vmatprep.subr.mxu0 0.0
        %888 = vmatpush1.msra.mxu0 0.0
        %889 = vmatprep.subr.mxu0 0.0
        %890 = vmatpush1.msra.mxu0 0.0
        %891 = vmatprep.subr.mxu0 0.0
        %892 = vmatpush1.msra.mxu0 0.0
        %893 = vmatprep.subr.mxu0 0.0
        %894 = vmatpush1.msra.mxu0 0.0
        %895 = vmatprep.subr.mxu0 0.0
        %896 = vmatpush1.msra.mxu0 0.0
        %897 = vmatprep.subr.mxu0 0.0
        %898 = vmatpush1.msra.mxu0 0.0
        %899 = vmatprep.subr.mxu0 0.0
        %900 = vmatpush1.msra.mxu0 0.0
        %901 = vmatprep.subr.mxu0 0.0
        %902 = vmatpush1.msra.mxu0 0.0
        %903 = vmatprep.subr.mxu0 0.0
        %904 = vmatpush1.msra.mxu0 0.0
        %905 = vmatprep.subr.mxu0 0.0
        %906 = vmatpush1.msra.mxu0 0.0
        %907 = vmatprep.subr.mxu0 0.0
        %908 = vmatpush1.msra.mxu0 0.0
        %909 = vmatprep.subr.mxu0 0.0
        %910 = vmatpush1.msra.mxu0 0.0
        %911 = vmatprep.subr.mxu0 0.0
        %912 = vmatpush1.msra.mxu0 0.0
        %913 = vmatprep.subr.mxu0 0.0
        %914 = vmatpush1.msra.mxu0 0.0
        %915 = vmatprep.mubr.f32.mxu0 0.0
        %916 = vmatmul.mubr.f32.gmra.mrb[0].mxu0 %v594
        %v917 = vpop.f32.mrb[0].mxu0
        %v918 = vadd.f32 0.0, %v917
        %v919 = vpop.f32.mrb[0].mxu0
        %920 = vmatprep.mubr.f32.mxu0 0.0
        %921 = vmatmul.mubr.f32.gmra.mrb[0].mxu0 %v597
        %v922 = vpop.f32.mrb[0].mxu0
        %v923 = vadd.f32 0.0, %v922
        %v924 = vpop.f32.mrb[0].mxu0
        %925 = vdwg.mxu0
        %v927 = vsel %vm361, %v439, 0
        %v930 = vsel %vm361, %v444, 0
        %v933 = vsel %vm368, %v468, 0
        %v936 = vsel %vm368, %v469, 0
        %v939 = vsel %vm368, %v470, 0
        %v942 = vsel %vm368, %v471, 0
        %v945 = vsel %vm368, %v472, 0
        %v948 = vsel %vm368, %v473, 0
        %v951 = vsel %vm368, %v474, 0
        %953 = vmatprep.subr.mxu0 %v448
        %954 = vmatpush1.msra.mxu0 %v447
        %955 = vmatprep.subr.mxu0 %v455
        %956 = vmatpush1.msra.mxu0 %v454
        %957 = vmatprep.subr.mxu0 %v462
        %958 = vmatpush1.msra.mxu0 %v461
        %959 = vmatprep.subr.mxu0 %v936
        %960 = vmatpush1.msra.mxu0 %v933
        %961 = vmatprep.subr.mxu0 0.0
        %962 = vmatpush1.msra.mxu0 0.0
        %963 = vmatprep.subr.mxu0 0.0
        %964 = vmatpush1.msra.mxu0 0.0
        %965 = vmatprep.subr.mxu0 0.0
        %966 = vmatpush1.msra.mxu0 0.0
        %967 = vmatprep.subr.mxu0 0.0
        %968 = vmatpush1.msra.mxu0 0.0
        %969 = vmatprep.subr.mxu0 0.0
        %970 = vmatpush1.msra.mxu0 0.0
        %971 = vmatprep.subr.mxu0 0.0
        %972 = vmatpush1.msra.mxu0 0.0
        %973 = vmatprep.subr.mxu0 0.0
        %974 = vmatpush1.msra.mxu0 0.0
        %975 = vmatprep.subr.mxu0 0.0
        %976 = vmatpush1.msra.mxu0 0.0
        %977 = vmatprep.subr.mxu0 0.0
        %978 = vmatpush1.msra.mxu0 0.0
        %979 = vmatprep.subr.mxu0 0.0
        %980 = vmatpush1.msra.mxu0 0.0
        %981 = vmatprep.subr.mxu0 0.0
        %982 = vmatpush1.msra.mxu0 0.0
        %983 = vmatprep.subr.mxu0 0.0
        %984 = vmatpush1.msra.mxu0 0.0
        %985 = vmatprep.subr.mxu0 0.0
        %986 = vmatpush1.msra.mxu0 0.0
        %987 = vmatprep.subr.mxu0 0.0
        %988 = vmatpush1.msra.mxu0 0.0
        %989 = vmatprep.subr.mxu0 0.0
        %990 = vmatpush1.msra.mxu0 0.0
        %991 = vmatprep.subr.mxu0 0.0
        %992 = vmatpush1.msra.mxu0 0.0
        %993 = vmatprep.subr.mxu0 0.0
        %994 = vmatpush1.msra.mxu0 0.0
        %995 = vmatprep.subr.mxu0 0.0
        %996 = vmatpush1.msra.mxu0 0.0
        %997 = vmatprep.subr.mxu0 0.0
        %998 = vmatpush1.msra.mxu0 0.0
        %999 = vmatprep.subr.mxu0 0.0
        %1000 = vmatpush1.msra.mxu0 0.0
        %1001 = vmatprep.subr.mxu0 0.0
        %1002 = vmatpush1.msra.mxu0 0.0
        %1003 = vmatprep.subr.mxu0 0.0
        %1004 = vmatpush1.msra.mxu0 0.0
        %1005 = vmatprep.subr.mxu0 0.0
        %1006 = vmatpush1.msra.mxu0 0.0
        %1007 = vmatprep.subr.mxu0 0.0
        %1008 = vmatpush1.msra.mxu0 0.0
        %1009 = vmatprep.subr.mxu0 0.0
        %1010 = vmatpush1.msra.mxu0 0.0
        %1011 = vmatprep.subr.mxu0 0.0
        %1012 = vmatpush1.msra.mxu0 0.0
        %1013 = vmatprep.subr.mxu0 0.0
        %1014 = vmatpush1.msra.mxu0 0.0
        %1015 = vmatprep.subr.mxu0 0.0
        %1016 = vmatpush1.msra.mxu0 0.0
        %1017 = vmatprep.mubr.f32.mxu0 0.0
        %1018 = vmatmul.mubr.f32.gmra.mrb[0].mxu0 %v927
        %v1019 = vpop.f32.mrb[0].mxu0
        %v1020 = vadd.f32 %v687, %v1019
        %v1021 = vpop.f32.mrb[0].mxu0
        %v1022 = vadd.f32 %v689, %v1021
        %1023 = vmatprep.mubr.f32.mxu0 0.0
        %1024 = vmatmul.mubr.f32.gmra.mrb[0].mxu0 %v930
        %v1025 = vpop.f32.mrb[0].mxu0
        %v1026 = vadd.f32 %v693, %v1025
        %v1027 = vpop.f32.mrb[0].mxu0
        %v1028 = vadd.f32 %v695, %v1027
        %1029 = vdwg.mxu0
        %1030 = vmatprep.subr.mxu0 %v450
        %1031 = vmatpush1.msra.mxu0 %v449
        %1032 = vmatprep.subr.mxu0 %v457
        %1033 = vmatpush1.msra.mxu0 %v456
        %1034 = vmatprep.subr.mxu0 %v464
        %1035 = vmatpush1.msra.mxu0 %v463
        %1036 = vmatprep.subr.mxu0 %v942
        %1037 = vmatpush1.msra.mxu0 %v939
        %1038 = vmatprep.subr.mxu0 0.0
        %1039 = vmatpush1.msra.mxu0 0.0
        %1040 = vmatprep.subr.mxu0 0.0
        %1041 = vmatpush1.msra.mxu0 0.0
        %1042 = vmatprep.subr.mxu0 0.0
        %1043 = vmatpush1.msra.mxu0 0.0
        %1044 = vmatprep.subr.mxu0 0.0
        %1045 = vmatpush1.msra.mxu0 0.0
        %1046 = vmatprep.subr.mxu0 0.0
        %1047 = vmatpush1.msra.mxu0 0.0
        %1048 = vmatprep.subr.mxu0 0.0
        %1049 = vmatpush1.msra.mxu0 0.0
        %1050 = vmatprep.subr.mxu0 0.0
        %1051 = vmatpush1.msra.mxu0 0.0
        %1052 = vmatprep.subr.mxu0 0.0
        %1053 = vmatpush1.msra.mxu0 0.0
        %1054 = vmatprep.subr.mxu0 0.0
        %1055 = vmatpush1.msra.mxu0 0.0
        %1056 = vmatprep.subr.mxu0 0.0
        %1057 = vmatpush1.msra.mxu0 0.0
        %1058 = vmatprep.subr.mxu0 0.0
        %1059 = vmatpush1.msra.mxu0 0.0
        %1060 = vmatprep.subr.mxu0 0.0
        %1061 = vmatpush1.msra.mxu0 0.0
        %1062 = vmatprep.subr.mxu0 0.0
        %1063 = vmatpush1.msra.mxu0 0.0
        %1064 = vmatprep.subr.mxu0 0.0
        %1065 = vmatpush1.msra.mxu0 0.0
        %1066 = vmatprep.subr.mxu0 0.0
        %1067 = vmatpush1.msra.mxu0 0.0
        %1068 = vmatprep.subr.mxu0 0.0
        %1069 = vmatpush1.msra.mxu0 0.0
        %1070 = vmatprep.subr.mxu0 0.0
        %1071 = vmatpush1.msra.mxu0 0.0
        %1072 = vmatprep.subr.mxu0 0.0
        %1073 = vmatpush1.msra.mxu0 0.0
        %1074 = vmatprep.subr.mxu0 0.0
        %1075 = vmatpush1.msra.mxu0 0.0
        %1076 = vmatprep.subr.mxu0 0.0
        %1077 = vmatpush1.msra.mxu0 0.0
        %1078 = vmatprep.subr.mxu0 0.0
        %1079 = vmatpush1.msra.mxu0 0.0
        %1080 = vmatprep.subr.mxu0 0.0
        %1081 = vmatpush1.msra.mxu0 0.0
        %1082 = vmatprep.subr.mxu0 0.0
        %1083 = vmatpush1.msra.mxu0 0.0
        %1084 = vmatprep.subr.mxu0 0.0
        %1085 = vmatpush1.msra.mxu0 0.0
        %1086 = vmatprep.subr.mxu0 0.0
        %1087 = vmatpush1.msra.mxu0 0.0
        %1088 = vmatprep.subr.mxu0 0.0
        %1089 = vmatpush1.msra.mxu0 0.0
        %1090 = vmatprep.subr.mxu0 0.0
        %1091 = vmatpush1.msra.mxu0 0.0
        %1092 = vmatprep.subr.mxu0 0.0
        %1093 = vmatpush1.msra.mxu0 0.0
        %1094 = vmatprep.mubr.f32.mxu0 0.0
        %1095 = vmatmul.mubr.f32.gmra.mrb[0].mxu0 %v927
        %v1096 = vpop.f32.mrb[0].mxu0
        %v1097 = vadd.f32 %v764, %v1096
        %v1098 = vpop.f32.mrb[0].mxu0
        %v1099 = vadd.f32 %v766, %v1098
        %1100 = vmatprep.mubr.f32.mxu0 0.0
        %1101 = vmatmul.mubr.f32.gmra.mrb[0].mxu0 %v930
        %v1102 = vpop.f32.mrb[0].mxu0
        %v1103 = vadd.f32 %v770, %v1102
        %v1104 = vpop.f32.mrb[0].mxu0
        %v1105 = vadd.f32 %v772, %v1104
        %1106 = vdwg.mxu0
        %1107 = vmatprep.subr.mxu0 %v452
        %1108 = vmatpush1.msra.mxu0 %v451
        %1109 = vmatprep.subr.mxu0 %v459
        %1110 = vmatpush1.msra.mxu0 %v458
        %1111 = vmatprep.subr.mxu0 %v466
        %1112 = vmatpush1.msra.mxu0 %v465
        %1113 = vmatprep.subr.mxu0 %v948
        %1114 = vmatpush1.msra.mxu0 %v945
        %1115 = vmatprep.subr.mxu0 0.0
        %1116 = vmatpush1.msra.mxu0 0.0
        %1117 = vmatprep.subr.mxu0 0.0
        %1118 = vmatpush1.msra.mxu0 0.0
        %1119 = vmatprep.subr.mxu0 0.0
        %1120 = vmatpush1.msra.mxu0 0.0
        %1121 = vmatprep.subr.mxu0 0.0
        %1122 = vmatpush1.msra.mxu0 0.0
        %1123 = vmatprep.subr.mxu0 0.0
        %1124 = vmatpush1.msra.mxu0 0.0
        %1125 = vmatprep.subr.mxu0 0.0
        %1126 = vmatpush1.msra.mxu0 0.0
        %1127 = vmatprep.subr.mxu0 0.0
        %1128 = vmatpush1.msra.mxu0 0.0
        %1129 = vmatprep.subr.mxu0 0.0
        %1130 = vmatpush1.msra.mxu0 0.0
        %1131 = vmatprep.subr.mxu0 0.0
        %1132 = vmatpush1.msra.mxu0 0.0
        %1133 = vmatprep.subr.mxu0 0.0
        %1134 = vmatpush1.msra.mxu0 0.0
        %1135 = vmatprep.subr.mxu0 0.0
        %1136 = vmatpush1.msra.mxu0 0.0
        %1137 = vmatprep.subr.mxu0 0.0
        %1138 = vmatpush1.msra.mxu0 0.0
        %1139 = vmatprep.subr.mxu0 0.0
        %1140 = vmatpush1.msra.mxu0 0.0
        %1141 = vmatprep.subr.mxu0 0.0
        %1142 = vmatpush1.msra.mxu0 0.0
        %1143 = vmatprep.subr.mxu0 0.0
        %1144 = vmatpush1.msra.mxu0 0.0
        %1145 = vmatprep.subr.mxu0 0.0
        %1146 = vmatpush1.msra.mxu0 0.0
        %1147 = vmatprep.subr.mxu0 0.0
        %1148 = vmatpush1.msra.mxu0 0.0
        %1149 = vmatprep.subr.mxu0 0.0
        %1150 = vmatpush1.msra.mxu0 0.0
        %1151 = vmatprep.subr.mxu0 0.0
        %1152 = vmatpush1.msra.mxu0 0.0
        %1153 = vmatprep.subr.mxu0 0.0
        %1154 = vmatpush1.msra.mxu0 0.0
        %1155 = vmatprep.subr.mxu0 0.0
        %1156 = vmatpush1.msra.mxu0 0.0
        %1157 = vmatprep.subr.mxu0 0.0
        %1158 = vmatpush1.msra.mxu0 0.0
        %1159 = vmatprep.subr.mxu0 0.0
        %1160 = vmatpush1.msra.mxu0 0.0
        %1161 = vmatprep.subr.mxu0 0.0
        %1162 = vmatpush1.msra.mxu0 0.0
        %1163 = vmatprep.subr.mxu0 0.0
        %1164 = vmatpush1.msra.mxu0 0.0
        %1165 = vmatprep.subr.mxu0 0.0
        %1166 = vmatpush1.msra.mxu0 0.0
        %1167 = vmatprep.subr.mxu0 0.0
        %1168 = vmatpush1.msra.mxu0 0.0
        %1169 = vmatprep.subr.mxu0 0.0
        %1170 = vmatpush1.msra.mxu0 0.0
        %1171 = vmatprep.mubr.f32.mxu0 0.0
        %1172 = vmatmul.mubr.f32.gmra.mrb[0].mxu0 %v927
        %v1173 = vpop.f32.mrb[0].mxu0
        %v1174 = vadd.f32 %v841, %v1173
        %v1175 = vpop.f32.mrb[0].mxu0
        %v1176 = vadd.f32 %v843, %v1175
        %1177 = vmatprep.mubr.f32.mxu0 0.0
        %1178 = vmatmul.mubr.f32.gmra.mrb[0].mxu0 %v930
        %v1179 = vpop.f32.mrb[0].mxu0
        %v1180 = vadd.f32 %v847, %v1179
        %v1181 = vpop.f32.mrb[0].mxu0
        %v1182 = vadd.f32 %v849, %v1181
        %1183 = vdwg.mxu0
        %1184 = vmatprep.subr.mxu0 0.0
        %1185 = vmatpush1.msra.mxu0 %v453
        %1186 = vmatprep.subr.mxu0 0.0
        %1187 = vmatpush1.msra.mxu0 %v460
        %1188 = vmatprep.subr.mxu0 0.0
        %1189 = vmatpush1.msra.mxu0 %v467
        %1190 = vmatprep.subr.mxu0 0.0
        %1191 = vmatpush1.msra.mxu0 %v951
        %1192 = vmatprep.subr.mxu0 0.0
        %1193 = vmatpush1.msra.mxu0 0.0
        %1194 = vmatprep.subr.mxu0 0.0
        %1195 = vmatpush1.msra.mxu0 0.0
        %1196 = vmatprep.subr.mxu0 0.0
        %1197 = vmatpush1.msra.mxu0 0.0
        %1198 = vmatprep.subr.mxu0 0.0
        %1199 = vmatpush1.msra.mxu0 0.0
        %1200 = vmatprep.subr.mxu0 0.0
        %1201 = vmatpush1.msra.mxu0 0.0
        %1202 = vmatprep.subr.mxu0 0.0
        %1203 = vmatpush1.msra.mxu0 0.0
        %1204 = vmatprep.subr.mxu0 0.0
        %1205 = vmatpush1.msra.mxu0 0.0
        %1206 = vmatprep.subr.mxu0 0.0
        %1207 = vmatpush1.msra.mxu0 0.0
        %1208 = vmatprep.subr.mxu0 0.0
        %1209 = vmatpush1.msra.mxu0 0.0
        %1210 = vmatprep.subr.mxu0 0.0
        %1211 = vmatpush1.msra.mxu0 0.0
        %1212 = vmatprep.subr.mxu0 0.0
        %1213 = vmatpush1.msra.mxu0 0.0
        %1214 = vmatprep.subr.mxu0 0.0
        %1215 = vmatpush1.msra.mxu0 0.0
        %1216 = vmatprep.subr.mxu0 0.0
        %1217 = vmatpush1.msra.mxu0 0.0
        %1218 = vmatprep.subr.mxu0 0.0
        %1219 = vmatpush1.msra.mxu0 0.0
        %1220 = vmatprep.subr.mxu0 0.0
        %1221 = vmatpush1.msra.mxu0 0.0
        %1222 = vmatprep.subr.mxu0 0.0
        %1223 = vmatpush1.msra.mxu0 0.0
        %1224 = vmatprep.subr.mxu0 0.0
        %1225 = vmatpush1.msra.mxu0 0.0
        %1226 = vmatprep.subr.mxu0 0.0
        %1227 = vmatpush1.msra.mxu0 0.0
        %1228 = vmatprep.subr.mxu0 0.0
        %1229 = vmatpush1.msra.mxu0 0.0
        %1230 = vmatprep.subr.mxu0 0.0
        %1231 = vmatpush1.msra.mxu0 0.0
        %1232 = vmatprep.subr.mxu0 0.0
        %1233 = vmatpush1.msra.mxu0 0.0
        %1234 = vmatprep.subr.mxu0 0.0
        %1235 = vmatpush1.msra.mxu0 0.0
        %1236 = vmatprep.subr.mxu0 0.0
        %1237 = vmatpush1.msra.mxu0 0.0
        %1238 = vmatprep.subr.mxu0 0.0
        %1239 = vmatpush1.msra.mxu0 0.0
        %1240 = vmatprep.subr.mxu0 0.0
        %1241 = vmatpush1.msra.mxu0 0.0
        %1242 = vmatprep.subr.mxu0 0.0
        %1243 = vmatpush1.msra.mxu0 0.0
        %1244 = vmatprep.subr.mxu0 0.0
        %1245 = vmatpush1.msra.mxu0 0.0
        %1246 = vmatprep.subr.mxu0 0.0
        %1247 = vmatpush1.msra.mxu0 0.0
        %1248 = vmatprep.mubr.f32.mxu0 0.0
        %1249 = vmatmul.mubr.f32.gmra.mrb[0].mxu0 %v927
        %v1250 = vpop.f32.mrb[0].mxu0
        %v1251 = vadd.f32 %v918, %v1250
        %v1252 = vpop.f32.mrb[0].mxu0
        %1253 = vmatprep.mubr.f32.mxu0 0.0
        %1254 = vmatmul.mubr.f32.gmra.mrb[0].mxu0 %v930
        %v1255 = vpop.f32.mrb[0].mxu0
        %v1256 = vadd.f32 %v923, %v1255
        %v1257 = vpop.f32.mrb[0].mxu0
        %1258 = vdwg.mxu0
        %v1259 = vadd.s32 %v353, 2
        %v1260 = vadd.s32 %v354, 2
        %vm1261 = vcmp.eq.s32.totalorder %v352, %v1259
        %vm1262 = vcmp.eq.s32.totalorder %v352, %v1260
        %v1263 = vsel %vm1261, 1, 0
        %v1264 = vsel %vm1262, 1, 0
        %v1265 = vcvt.s32.f32 %v1263
        %v1266 = vcvt.s32.f32 %v1264
        %v1268 = vsel %vm361, %v1265, 0
        %v1271 = vsel %vm361, %v1266, 0
        %1273 = vmatprep.subr.mxu0 0.0
        %1274 = vmatpush1.msra.mxu0 %v344
        %1275 = vmatprep.subr.mxu0 0.0
        %1276 = vmatpush1.msra.mxu0 %v345
        %1277 = vmatprep.subr.mxu0 0.0
        %1278 = vmatpush1.msra.mxu0 %v346
        %1279 = vmatprep.subr.mxu0 0.0
        %1280 = vmatpush1.msra.mxu0 %v370
        %1281 = vmatprep.subr.mxu0 0.0
        %1282 = vmatpush1.msra.mxu0 0.0
        %1283 = vmatprep.subr.mxu0 0.0
        %1284 = vmatpush1.msra.mxu0 0.0
        %1285 = vmatprep.subr.mxu0 0.0
        %1286 = vmatpush1.msra.mxu0 0.0
        %1287 = vmatprep.subr.mxu0 0.0
        %1288 = vmatpush1.msra.mxu0 0.0
        %1289 = vmatprep.subr.mxu0 0.0
        %1290 = vmatpush1.msra.mxu0 0.0
        %1291 = vmatprep.subr.mxu0 0.0
        %1292 = vmatpush1.msra.mxu0 0.0
        %1293 = vmatprep.subr.mxu0 0.0
        %1294 = vmatpush1.msra.mxu0 0.0
        %1295 = vmatprep.subr.mxu0 0.0
        %1296 = vmatpush1.msra.mxu0 0.0
        %1297 = vmatprep.subr.mxu0 0.0
        %1298 = vmatpush1.msra.mxu0 0.0
        %1299 = vmatprep.subr.mxu0 0.0
        %1300 = vmatpush1.msra.mxu0 0.0
        %1301 = vmatprep.subr.mxu0 0.0
        %1302 = vmatpush1.msra.mxu0 0.0
        %1303 = vmatprep.subr.mxu0 0.0
        %1304 = vmatpush1.msra.mxu0 0.0
        %1305 = vmatprep.subr.mxu0 0.0
        %1306 = vmatpush1.msra.mxu0 0.0
        %1307 = vmatprep.subr.mxu0 0.0
        %1308 = vmatpush1.msra.mxu0 0.0
        %1309 = vmatprep.subr.mxu0 0.0
        %1310 = vmatpush1.msra.mxu0 0.0
        %1311 = vmatprep.subr.mxu0 0.0
        %1312 = vmatpush1.msra.mxu0 0.0
        %1313 = vmatprep.subr.mxu0 0.0
        %1314 = vmatpush1.msra.mxu0 0.0
        %1315 = vmatprep.subr.mxu0 0.0
        %1316 = vmatpush1.msra.mxu0 0.0
        %1317 = vmatprep.subr.mxu0 0.0
        %1318 = vmatpush1.msra.mxu0 0.0
        %1319 = vmatprep.subr.mxu0 0.0
        %1320 = vmatpush1.msra.mxu0 0.0
        %1321 = vmatprep.subr.mxu0 0.0
        %1322 = vmatpush1.msra.mxu0 0.0
        %1323 = vmatprep.subr.mxu0 0.0
        %1324 = vmatpush1.msra.mxu0 0.0
        %1325 = vmatprep.subr.mxu0 0.0
        %1326 = vmatpush1.msra.mxu0 0.0
        %1327 = vmatprep.subr.mxu0 0.0
        %1328 = vmatpush1.msra.mxu0 0.0
        %1329 = vmatprep.subr.mxu0 0.0
        %1330 = vmatpush1.msra.mxu0 0.0
        %1331 = vmatprep.subr.mxu0 0.0
        %1332 = vmatpush1.msra.mxu0 0.0
        %1333 = vmatprep.subr.mxu0 0.0
        %1334 = vmatpush1.msra.mxu0 0.0
        %1335 = vmatprep.subr.mxu0 0.0
        %1336 = vmatpush1.msra.mxu0 0.0
        %1337 = vmatprep.mubr.f32.mxu0 0.0
        %1338 = vmatmul.mubr.f32.gmra.mrb[0].mxu0 %v1268
        %v1339 = vpop.f32.mrb[0].mxu0
        %v1340 = vadd.f32 0.0, %v1339
        %v1341 = vpop.f32.mrb[0].mxu0
        %1342 = vmatprep.mubr.f32.mxu0 0.0
        %1343 = vmatmul.mubr.f32.gmra.mrb[0].mxu0 %v1271
        %v1344 = vpop.f32.mrb[0].mxu0
        %v1345 = vadd.f32 0.0, %v1344
        %v1346 = vpop.f32.mrb[0].mxu0
        %1347 = vdwg.mxu0
        %s1348 = scalar_lea.vmem [#allocation3], 448
        %v1349 = vld [vmem:[%s1348] sm:$0xff]
        %v1350 = vld [vmem:[%s1348 + $0x8] sm:$0xff]
        %v1351 = vld [vmem:[%s1348 + $0x10] sm:$0xff]
        %v1352 = vld [vmem:[%s1348 + $0x18] sm:$0xff]
        %v1353 = vld [vmem:[%s1348 + $0x20] sm:$0xff]
        %v1354 = vld [vmem:[%s1348 + $0x28] sm:$0xff]
        %v1355 = vld [vmem:[%s1348 + $0x30] sm:$0xff]
        %v1356 = vld [vmem:[%s1348 + $0x38] sm:$0xff]
        %v1357 = vld [vmem:[%s1348 + $0x40] sm:$0xff]
        %v1358 = vld [vmem:[%s1348 + $0x48] sm:$0xff]
        %v1359 = vld [vmem:[%s1348 + $0x50] sm:$0xff]
        %v1360 = vld [vmem:[%s1348 + $0x58] sm:$0xff]
        %v1361 = vld [vmem:[%s1348 + $0x60] sm:$0xff]
        %v1362 = vld [vmem:[%s1348 + $0x68] sm:$0xff]
        %v1363 = vld [vmem:[%s1348 + $0x70] sm:$0xff]
        %v1364 = vld [vmem:[%s1348 + $0x78] sm:$0xff]
        %v1365 = vld [vmem:[%s1348 + $0x80] sm:$0xff]
        %v1366 = vld [vmem:[%s1348 + $0x88] sm:$0xff]
        %v1367 = vld [vmem:[%s1348 + $0x90] sm:$0xff]
        %v1368 = vld [vmem:[%s1348 + $0x98] sm:$0xff]
        %v1369 = vld [vmem:[%s1348 + $0xa0] sm:$0xff]
        %v1370 = vld [vmem:[%s1348 + $0xa8] sm:$0xf]
        %v1371 = vld [vmem:[%s1348 + $0xb0] sm:$0xf]
        %v1372 = vld [vmem:[%s1348 + $0xb8] sm:$0xf]
        %v1373 = vld [vmem:[%s1348 + $0xc0] sm:$0xf]
        %v1374 = vld [vmem:[%s1348 + $0xc8] sm:$0xf]
        %v1375 = vld [vmem:[%s1348 + $0xd0] sm:$0xf]
        %v1376 = vld [vmem:[%s1348 + $0xd8] sm:$0xf]
        %v1378 = vsel %vm361, %v1340, 0
        %v1381 = vsel %vm361, %v1345, 0
        %v1384 = vsel %vm368, %v1370, 0
        %v1387 = vsel %vm368, %v1371, 0
        %v1390 = vsel %vm368, %v1372, 0
        %v1393 = vsel %vm368, %v1373, 0
        %v1396 = vsel %vm368, %v1374, 0
        %v1399 = vsel %vm368, %v1375, 0
        %v1402 = vsel %vm368, %v1376, 0
        %1404 = vmatprep.subr.mxu0 %v1350
        %1405 = vmatpush1.msra.mxu0 %v1349
        %1406 = vmatprep.subr.mxu0 %v1357
        %1407 = vmatpush1.msra.mxu0 %v1356
        %1408 = vmatprep.subr.mxu0 %v1364
        %1409 = vmatpush1.msra.mxu0 %v1363
        %1410 = vmatprep.subr.mxu0 %v1387
        %1411 = vmatpush1.msra.mxu0 %v1384
        %1412 = vmatprep.subr.mxu0 0.0
        %1413 = vmatpush1.msra.mxu0 0.0
        %1414 = vmatprep.subr.mxu0 0.0
        %1415 = vmatpush1.msra.mxu0 0.0
        %1416 = vmatprep.subr.mxu0 0.0
        %1417 = vmatpush1.msra.mxu0 0.0
        %1418 = vmatprep.subr.mxu0 0.0
        %1419 = vmatpush1.msra.mxu0 0.0
        %1420 = vmatprep.subr.mxu0 0.0
        %1421 = vmatpush1.msra.mxu0 0.0
        %1422 = vmatprep.subr.mxu0 0.0
        %1423 = vmatpush1.msra.mxu0 0.0
        %1424 = vmatprep.subr.mxu0 0.0
        %1425 = vmatpush1.msra.mxu0 0.0
        %1426 = vmatprep.subr.mxu0 0.0
        %1427 = vmatpush1.msra.mxu0 0.0
        %1428 = vmatprep.subr.mxu0 0.0
        %1429 = vmatpush1.msra.mxu0 0.0
        %1430 = vmatprep.subr.mxu0 0.0
        %1431 = vmatpush1.msra.mxu0 0.0
        %1432 = vmatprep.subr.mxu0 0.0
        %1433 = vmatpush1.msra.mxu0 0.0
        %1434 = vmatprep.subr.mxu0 0.0
        %1435 = vmatpush1.msra.mxu0 0.0
        %1436 = vmatprep.subr.mxu0 0.0
        %1437 = vmatpush1.msra.mxu0 0.0
        %1438 = vmatprep.subr.mxu0 0.0
        %1439 = vmatpush1.msra.mxu0 0.0
        %1440 = vmatprep.subr.mxu0 0.0
        %1441 = vmatpush1.msra.mxu0 0.0
        %1442 = vmatprep.subr.mxu0 0.0
        %1443 = vmatpush1.msra.mxu0 0.0
        %1444 = vmatprep.subr.mxu0 0.0
        %1445 = vmatpush1.msra.mxu0 0.0
        %1446 = vmatprep.subr.mxu0 0.0
        %1447 = vmatpush1.msra.mxu0 0.0
        %1448 = vmatprep.subr.mxu0 0.0
        %1449 = vmatpush1.msra.mxu0 0.0
        %1450 = vmatprep.subr.mxu0 0.0
        %1451 = vmatpush1.msra.mxu0 0.0
        %1452 = vmatprep.subr.mxu0 0.0
        %1453 = vmatpush1.msra.mxu0 0.0
        %1454 = vmatprep.subr.mxu0 0.0
        %1455 = vmatpush1.msra.mxu0 0.0
        %1456 = vmatprep.subr.mxu0 0.0
        %1457 = vmatpush1.msra.mxu0 0.0
        %1458 = vmatprep.subr.mxu0 0.0
        %1459 = vmatpush1.msra.mxu0 0.0
        %1460 = vmatprep.subr.mxu0 0.0
        %1461 = vmatpush1.msra.mxu0 0.0
        %1462 = vmatprep.subr.mxu0 0.0
        %1463 = vmatpush1.msra.mxu0 0.0
        %1464 = vmatprep.subr.mxu0 0.0
        %1465 = vmatpush1.msra.mxu0 0.0
        %1466 = vmatprep.subr.mxu0 0.0
        %1467 = vmatpush1.msra.mxu0 0.0
        %1468 = vmatprep.mubr.f32.mxu0 0.0
        %1469 = vmatmul.mubr.f32.gmra.mrb[0].mxu0 %v1378
        %v1470 = vpop.f32.mrb[0].mxu0
        %v1471 = vadd.f32 0.0, %v1470
        %v1472 = vpop.f32.mrb[0].mxu0
        %v1473 = vadd.f32 0.0, %v1472
        %1474 = vmatprep.mubr.f32.mxu0 0.0
        %1475 = vmatmul.mubr.f32.gmra.mrb[0].mxu0 %v1381
        %v1476 = vpop.f32.mrb[0].mxu0
        %v1477 = vadd.f32 0.0, %v1476
        %v1478 = vpop.f32.mrb[0].mxu0
        %v1479 = vadd.f32 0.0, %v1478
        %1480 = vdwg.mxu0
        %1481 = vmatprep.subr.mxu0 %v1352
        %1482 = vmatpush1.msra.mxu0 %v1351
        %1483 = vmatprep.subr.mxu0 %v1359
        %1484 = vmatpush1.msra.mxu0 %v1358
        %1485 = vmatprep.subr.mxu0 %v1366
        %1486 = vmatpush1.msra.mxu0 %v1365
        %1487 = vmatprep.subr.mxu0 %v1393
        %1488 = vmatpush1.msra.mxu0 %v1390
        %1489 = vmatprep.subr.mxu0 0.0
        %1490 = vmatpush1.msra.mxu0 0.0
        %1491 = vmatprep.subr.mxu0 0.0
        %1492 = vmatpush1.msra.mxu0 0.0
        %1493 = vmatprep.subr.mxu0 0.0
        %1494 = vmatpush1.msra.mxu0 0.0
        %1495 = vmatprep.subr.mxu0 0.0
        %1496 = vmatpush1.msra.mxu0 0.0
        %1497 = vmatprep.subr.mxu0 0.0
        %1498 = vmatpush1.msra.mxu0 0.0
        %1499 = vmatprep.subr.mxu0 0.0
        %1500 = vmatpush1.msra.mxu0 0.0
        %1501 = vmatprep.subr.mxu0 0.0
        %1502 = vmatpush1.msra.mxu0 0.0
        %1503 = vmatprep.subr.mxu0 0.0
        %1504 = vmatpush1.msra.mxu0 0.0
        %1505 = vmatprep.subr.mxu0 0.0
        %1506 = vmatpush1.msra.mxu0 0.0
        %1507 = vmatprep.subr.mxu0 0.0
        %1508 = vmatpush1.msra.mxu0 0.0
        %1509 = vmatprep.subr.mxu0 0.0
        %1510 = vmatpush1.msra.mxu0 0.0
        %1511 = vmatprep.subr.mxu0 0.0
        %1512 = vmatpush1.msra.mxu0 0.0
        %1513 = vmatprep.subr.mxu0 0.0
        %1514 = vmatpush1.msra.mxu0 0.0
        %1515 = vmatprep.subr.mxu0 0.0
        %1516 = vmatpush1.msra.mxu0 0.0
        %1517 = vmatprep.subr.mxu0 0.0
        %1518 = vmatpush1.msra.mxu0 0.0
        %1519 = vmatprep.subr.mxu0 0.0
        %1520 = vmatpush1.msra.mxu0 0.0
        %1521 = vmatprep.subr.mxu0 0.0
        %1522 = vmatpush1.msra.mxu0 0.0
        %1523 = vmatprep.subr.mxu0 0.0
        %1524 = vmatpush1.msra.mxu0 0.0
        %1525 = vmatprep.subr.mxu0 0.0
        %1526 = vmatpush1.msra.mxu0 0.0
        %1527 = vmatprep.subr.mxu0 0.0
        %1528 = vmatpush1.msra.mxu0 0.0
        %1529 = vmatprep.subr.mxu0 0.0
        %1530 = vmatpush1.msra.mxu0 0.0
        %1531 = vmatprep.subr.mxu0 0.0
        %1532 = vmatpush1.msra.mxu0 0.0
        %1533 = vmatprep.subr.mxu0 0.0
        %1534 = vmatpush1.msra.mxu0 0.0
        %1535 = vmatprep.subr.mxu0 0.0
        %1536 = vmatpush1.msra.mxu0 0.0
        %1537 = vmatprep.subr.mxu0 0.0
        %1538 = vmatpush1.msra.mxu0 0.0
        %1539 = vmatprep.subr.mxu0 0.0
        %1540 = vmatpush1.msra.mxu0 0.0
        %1541 = vmatprep.subr.mxu0 0.0
        %1542 = vmatpush1.msra.mxu0 0.0
        %1543 = vmatprep.subr.mxu0 0.0
        %1544 = vmatpush1.msra.mxu0 0.0
        %1545 = vmatprep.mubr.f32.mxu0 0.0
        %1546 = vmatmul.mubr.f32.gmra.mrb[0].mxu0 %v1378
        %v1547 = vpop.f32.mrb[0].mxu0
        %v1548 = vadd.f32 0.0, %v1547
        %v1549 = vpop.f32.mrb[0].mxu0
        %v1550 = vadd.f32 0.0, %v1549
        %1551 = vmatprep.mubr.f32.mxu0 0.0
        %1552 = vmatmul.mubr.f32.gmra.mrb[0].mxu0 %v1381
        %v1553 = vpop.f32.mrb[0].mxu0
        %v1554 = vadd.f32 0.0, %v1553
        %v1555 = vpop.f32.mrb[0].mxu0
        %v1556 = vadd.f32 0.0, %v1555
        %1557 = vdwg.mxu0
        %1558 = vmatprep.subr.mxu0 %v1354
        %1559 = vmatpush1.msra.mxu0 %v1353
        %1560 = vmatprep.subr.mxu0 %v1361
        %1561 = vmatpush1.msra.mxu0 %v1360
        %1562 = vmatprep.subr.mxu0 %v1368
        %1563 = vmatpush1.msra.mxu0 %v1367
        %1564 = vmatprep.subr.mxu0 %v1399
        %1565 = vmatpush1.msra.mxu0 %v1396
        %1566 = vmatprep.subr.mxu0 0.0
        %1567 = vmatpush1.msra.mxu0 0.0
        %1568 = vmatprep.subr.mxu0 0.0
        %1569 = vmatpush1.msra.mxu0 0.0
        %1570 = vmatprep.subr.mxu0 0.0
        %1571 = vmatpush1.msra.mxu0 0.0
        %1572 = vmatprep.subr.mxu0 0.0
        %1573 = vmatpush1.msra.mxu0 0.0
        %1574 = vmatprep.subr.mxu0 0.0
        %1575 = vmatpush1.msra.mxu0 0.0
        %1576 = vmatprep.subr.mxu0 0.0
        %1577 = vmatpush1.msra.mxu0 0.0
        %1578 = vmatprep.subr.mxu0 0.0
        %1579 = vmatpush1.msra.mxu0 0.0
        %1580 = vmatprep.subr.mxu0 0.0
        %1581 = vmatpush1.msra.mxu0 0.0
        %1582 = vmatprep.subr.mxu0 0.0
        %1583 = vmatpush1.msra.mxu0 0.0
        %1584 = vmatprep.subr.mxu0 0.0
        %1585 = vmatpush1.msra.mxu0 0.0
        %1586 = vmatprep.subr.mxu0 0.0
        %1587 = vmatpush1.msra.mxu0 0.0
        %1588 = vmatprep.subr.mxu0 0.0
        %1589 = vmatpush1.msra.mxu0 0.0
        %1590 = vmatprep.subr.mxu0 0.0
        %1591 = vmatpush1.msra.mxu0 0.0
        %1592 = vmatprep.subr.mxu0 0.0
        %1593 = vmatpush1.msra.mxu0 0.0
        %1594 = vmatprep.subr.mxu0 0.0
        %1595 = vmatpush1.msra.mxu0 0.0
        %1596 = vmatprep.subr.mxu0 0.0
        %1597 = vmatpush1.msra.mxu0 0.0
        %1598 = vmatprep.subr.mxu0 0.0
        %1599 = vmatpush1.msra.mxu0 0.0
        %1600 = vmatprep.subr.mxu0 0.0
        %1601 = vmatpush1.msra.mxu0 0.0
        %1602 = vmatprep.subr.mxu0 0.0
        %1603 = vmatpush1.msra.mxu0 0.0
        %1604 = vmatprep.subr.mxu0 0.0
        %1605 = vmatpush1.msra.mxu0 0.0
        %1606 = vmatprep.subr.mxu0 0.0
        %1607 = vmatpush1.msra.mxu0 0.0
        %1608 = vmatprep.subr.mxu0 0.0
        %1609 = vmatpush1.msra.mxu0 0.0
        %1610 = vmatprep.subr.mxu0 0.0
        %1611 = vmatpush1.msra.mxu0 0.0
        %1612 = vmatprep.subr.mxu0 0.0
        %1613 = vmatpush1.msra.mxu0 0.0
        %1614 = vmatprep.subr.mxu0 0.0
        %1615 = vmatpush1.msra.mxu0 0.0
        %1616 = vmatprep.subr.mxu0 0.0
        %1617 = vmatpush1.msra.mxu0 0.0
        %1618 = vmatprep.subr.mxu0 0.0
        %1619 = vmatpush1.msra.mxu0 0.0
        %1620 = vmatprep.subr.mxu0 0.0
        %1621 = vmatpush1.msra.mxu0 0.0
        %1622 = vmatprep.mubr.f32.mxu0 0.0
        %1623 = vmatmul.mubr.f32.gmra.mrb[0].mxu0 %v1378
        %v1624 = vpop.f32.mrb[0].mxu0
        %v1625 = vadd.f32 0.0, %v1624
        %v1626 = vpop.f32.mrb[0].mxu0
        %v1627 = vadd.f32 0.0, %v1626
        %1628 = vmatprep.mubr.f32.mxu0 0.0
        %1629 = vmatmul.mubr.f32.gmra.mrb[0].mxu0 %v1381
        %v1630 = vpop.f32.mrb[0].mxu0
        %v1631 = vadd.f32 0.0, %v1630
        %v1632 = vpop.f32.mrb[0].mxu0
        %v1633 = vadd.f32 0.0, %v1632
        %1634 = vdwg.mxu0
        %1635 = vmatprep.subr.mxu0 0.0
        %1636 = vmatpush1.msra.mxu0 %v1355
        %1637 = vmatprep.subr.mxu0 0.0
        %1638 = vmatpush1.msra.mxu0 %v1362
        %1639 = vmatprep.subr.mxu0 0.0
        %1640 = vmatpush1.msra.mxu0 %v1369
        %1641 = vmatprep.subr.mxu0 0.0
        %1642 = vmatpush1.msra.mxu0 %v1402
        %1643 = vmatprep.subr.mxu0 0.0
        %1644 = vmatpush1.msra.mxu0 0.0
        %1645 = vmatprep.subr.mxu0 0.0
        %1646 = vmatpush1.msra.mxu0 0.0
        %1647 = vmatprep.subr.mxu0 0.0
        %1648 = vmatpush1.msra.mxu0 0.0
        %1649 = vmatprep.subr.mxu0 0.0
        %1650 = vmatpush1.msra.mxu0 0.0
        %1651 = vmatprep.subr.mxu0 0.0
        %1652 = vmatpush1.msra.mxu0 0.0
        %1653 = vmatprep.subr.mxu0 0.0
        %1654 = vmatpush1.msra.mxu0 0.0
        %1655 = vmatprep.subr.mxu0 0.0
        %1656 = vmatpush1.msra.mxu0 0.0
        %1657 = vmatprep.subr.mxu0 0.0
        %1658 = vmatpush1.msra.mxu0 0.0
        %1659 = vmatprep.subr.mxu0 0.0
        %1660 = vmatpush1.msra.mxu0 0.0
        %1661 = vmatprep.subr.mxu0 0.0
        %1662 = vmatpush1.msra.mxu0 0.0
        %1663 = vmatprep.subr.mxu0 0.0
        %1664 = vmatpush1.msra.mxu0 0.0
        %1665 = vmatprep.subr.mxu0 0.0
        %1666 = vmatpush1.msra.mxu0 0.0
        %1667 = vmatprep.subr.mxu0 0.0
        %1668 = vmatpush1.msra.mxu0 0.0
        %1669 = vmatprep.subr.mxu0 0.0
        %1670 = vmatpush1.msra.mxu0 0.0
        %1671 = vmatprep.subr.mxu0 0.0
        %1672 = vmatpush1.msra.mxu0 0.0
        %1673 = vmatprep.subr.mxu0 0.0
        %1674 = vmatpush1.msra.mxu0 0.0
        %1675 = vmatprep.subr.mxu0 0.0
        %1676 = vmatpush1.msra.mxu0 0.0
        %1677 = vmatprep.subr.mxu0 0.0
        %1678 = vmatpush1.msra.mxu0 0.0
        %1679 = vmatprep.subr.mxu0 0.0
        %1680 = vmatpush1.msra.mxu0 0.0
        %1681 = vmatprep.subr.mxu0 0.0
        %1682 = vmatpush1.msra.mxu0 0.0
        %1683 = vmatprep.subr.mxu0 0.0
        %1684 = vmatpush1.msra.mxu0 0.0
        %1685 = vmatprep.subr.mxu0 0.0
        %1686 = vmatpush1.msra.mxu0 0.0
        %1687 = vmatprep.subr.mxu0 0.0
        %1688 = vmatpush1.msra.mxu0 0.0
        %1689 = vmatprep.subr.mxu0 0.0
        %1690 = vmatpush1.msra.mxu0 0.0
        %1691 = vmatprep.subr.mxu0 0.0
        %1692 = vmatpush1.msra.mxu0 0.0
        %1693 = vmatprep.subr.mxu0 0.0
        %1694 = vmatpush1.msra.mxu0 0.0
        %1695 = vmatprep.subr.mxu0 0.0
        %1696 = vmatpush1.msra.mxu0 0.0
        %1697 = vmatprep.subr.mxu0 0.0
        %1698 = vmatpush1.msra.mxu0 0.0
        %1699 = vmatprep.mubr.f32.mxu0 0.0
        %1700 = vmatmul.mubr.f32.gmra.mrb[0].mxu0 %v1378
        %v1701 = vpop.f32.mrb[0].mxu0
        %v1702 = vadd.f32 0.0, %v1701
        %v1703 = vpop.f32.mrb[0].mxu0
        %1704 = vmatprep.mubr.f32.mxu0 0.0
        %1705 = vmatmul.mubr.f32.gmra.mrb[0].mxu0 %v1381
        %v1706 = vpop.f32.mrb[0].mxu0
        %v1707 = vadd.f32 0.0, %v1706
        %v1708 = vpop.f32.mrb[0].mxu0
        %1709 = vdwg.mxu0
        %v1710 = vadd.f32 %v1020, %v1471
        %v1711 = vadd.f32 %v1022, %v1473
        %v1712 = vadd.f32 %v1097, %v1548
        %v1713 = vadd.f32 %v1099, %v1550
        %v1714 = vadd.f32 %v1174, %v1625
        %v1715 = vadd.f32 %v1176, %v1627
        %v1716 = vadd.f32 %v1251, %v1702
        %v1717 = vadd.f32 %v1026, %v1477
        %v1718 = vadd.f32 %v1028, %v1479
        %v1719 = vadd.f32 %v1103, %v1554
        %v1720 = vadd.f32 %v1105, %v1556
        %v1721 = vadd.f32 %v1180, %v1631
        %v1722 = vadd.f32 %v1182, %v1633
        %v1723 = vadd.f32 %v1256, %v1707
        %v1724 = vld [vmem:[#allocation5] sm:$0x7f]
        %v1726 = vlaneseq
        %v1727 = vshrl.u32 %v1726, 7
        %v1728 = vsub.s32 0, %v1727
        %v1729 = vrot.slane %v1724, %v1728
        %v1730 = vlaneseq
        %v1731 = vshrl.u32 %v1730, 7
        %v1732 = vsub.s32 1, %v1731
        %v1733 = vrot.slane %v1724, %v1732
        %v1734 = vlaneseq
        %v1735 = vshrl.u32 %v1734, 7
        %v1736 = vsub.s32 2, %v1735
        %v1737 = vrot.slane %v1724, %v1736
        %v1738 = vlaneseq
        %v1739 = vshrl.u32 %v1738, 7
        %v1740 = vsub.s32 3, %v1739
        %v1741 = vrot.slane %v1724, %v1740
        %v1742 = vlaneseq
        %v1743 = vshrl.u32 %v1742, 7
        %v1744 = vsub.s32 4, %v1743
        %v1745 = vrot.slane %v1724, %v1744
        %v1746 = vlaneseq
        %v1747 = vshrl.u32 %v1746, 7
        %v1748 = vsub.s32 5, %v1747
        %v1749 = vrot.slane %v1724, %v1748
        %v1750 = vlaneseq
        %v1751 = vshrl.u32 %v1750, 7
        %v1752 = vsub.s32 6, %v1751
        %v1753 = vrot.slane %v1724, %v1752
        %v1761 = vadd.f32 %v1710, %v1729
        %v1762 = vadd.f32 %v1711, %v1733
        %v1763 = vadd.f32 %v1712, %v1737
        %v1764 = vadd.f32 %v1713, %v1741
        %v1765 = vadd.f32 %v1714, %v1745
        %v1766 = vadd.f32 %v1715, %v1749
        %v1767 = vadd.f32 %v1716, %v1753
        %v1768 = vadd.f32 %v1717, %v1729
        %v1769 = vadd.f32 %v1718, %v1733
        %v1770 = vadd.f32 %v1719, %v1737
        %v1771 = vadd.f32 %v1720, %v1741
        %v1772 = vadd.f32 %v1721, %v1745
        %v1773 = vadd.f32 %v1722, %v1749
        %v1774 = vadd.f32 %v1723, %v1753
        %v1775 = vmul.f32 %v1761, 0.2
        %v1776 = vmul.f32 %v1762, 0.2
        %v1777 = vmul.f32 %v1763, 0.2
        %v1778 = vmul.f32 %v1764, 0.2
        %v1779 = vmul.f32 %v1765, 0.2
        %v1780 = vmul.f32 %v1766, 0.2
        %v1781 = vmul.f32 %v1767, 0.2
        %v1782 = vmul.f32 %v1768, 0.2
        %v1783 = vmul.f32 %v1769, 0.2
        %v1784 = vmul.f32 %v1770, 0.2
        %v1785 = vmul.f32 %v1771, 0.2
        %v1786 = vmul.f32 %v1772, 0.2
        %v1787 = vmul.f32 %v1773, 0.2
        %v1788 = vmul.f32 %v1774, 0.2
        %v1789 = vmax.f32 %v1761, %v1775
        %v1790 = vmax.f32 %v1762, %v1776
        %v1791 = vmax.f32 %v1763, %v1777
        %v1792 = vmax.f32 %v1764, %v1778
        %v1793 = vmax.f32 %v1765, %v1779
        %v1794 = vmax.f32 %v1766, %v1780
        %v1795 = vmax.f32 %v1767, %v1781
        %v1796 = vmax.f32 %v1768, %v1782
        %v1797 = vmax.f32 %v1769, %v1783
        %v1798 = vmax.f32 %v1770, %v1784
        %v1799 = vmax.f32 %v1771, %v1785
        %v1800 = vmax.f32 %v1772, %v1786
        %v1801 = vmax.f32 %v1773, %v1787
        %v1802 = vmax.f32 %v1774, %v1788
        %vm1803 = vcmask 105472
        %v1804 = vsel %vm1803, %v359, 0
        %vm1806 = vcmask 1044480
        %v1808 = vsel %vm1806, %v1796, 0
        %v1811 = vsel %vm1806, %v1797, 0
        %v1814 = vsel %vm1806, %v1798, 0
        %v1817 = vsel %vm1806, %v1799, 0
        %v1820 = vsel %vm1806, %v1800, 0
        %v1823 = vsel %vm1806, %v1801, 0
        %v1826 = vsel %vm1806, %v1802, 0
        %1828 = vmatprep.subr.mxu0 %v1790
        %1829 = vmatpush1.msra.mxu0 %v1789
        %1830 = vmatprep.subr.mxu0 %v1811
        %1831 = vmatpush1.msra.mxu0 %v1808
        %1832 = vmatprep.subr.mxu0 0.0
        %1833 = vmatpush1.msra.mxu0 0.0
        %1834 = vmatprep.subr.mxu0 0.0
        %1835 = vmatpush1.msra.mxu0 0.0
        %1836 = vmatprep.subr.mxu0 0.0
        %1837 = vmatpush1.msra.mxu0 0.0
        %1838 = vmatprep.subr.mxu0 0.0
        %1839 = vmatpush1.msra.mxu0 0.0
        %1840 = vmatprep.subr.mxu0 0.0
        %1841 = vmatpush1.msra.mxu0 0.0
        %1842 = vmatprep.subr.mxu0 0.0
        %1843 = vmatpush1.msra.mxu0 0.0
        %1844 = vmatprep.subr.mxu0 0.0
        %1845 = vmatpush1.msra.mxu0 0.0
        %1846 = vmatprep.subr.mxu0 0.0
        %1847 = vmatpush1.msra.mxu0 0.0
        %1848 = vmatprep.subr.mxu0 0.0
        %1849 = vmatpush1.msra.mxu0 0.0
        %1850 = vmatprep.subr.mxu0 0.0
        %1851 = vmatpush1.msra.mxu0 0.0
        %1852 = vmatprep.subr.mxu0 0.0
        %1853 = vmatpush1.msra.mxu0 0.0
        %1854 = vmatprep.subr.mxu0 0.0
        %1855 = vmatpush1.msra.mxu0 0.0
        %1856 = vmatprep.subr.mxu0 0.0
        %1857 = vmatpush1.msra.mxu0 0.0
        %1858 = vmatprep.subr.mxu0 0.0
        %1859 = vmatpush1.msra.mxu0 0.0
        %1860 = vmatprep.subr.mxu0 0.0
        %1861 = vmatpush1.msra.mxu0 0.0
        %1862 = vmatprep.subr.mxu0 0.0
        %1863 = vmatpush1.msra.mxu0 0.0
        %1864 = vmatprep.subr.mxu0 0.0
        %1865 = vmatpush1.msra.mxu0 0.0
        %1866 = vmatprep.subr.mxu0 0.0
        %1867 = vmatpush1.msra.mxu0 0.0
        %1868 = vmatprep.subr.mxu0 0.0
        %1869 = vmatpush1.msra.mxu0 0.0
        %1870 = vmatprep.subr.mxu0 0.0
        %1871 = vmatpush1.msra.mxu0 0.0
        %1872 = vmatprep.subr.mxu0 0.0
        %1873 = vmatpush1.msra.mxu0 0.0
        %1874 = vmatprep.subr.mxu0 0.0
        %1875 = vmatpush1.msra.mxu0 0.0
        %1876 = vmatprep.subr.mxu0 0.0
        %1877 = vmatpush1.msra.mxu0 0.0
        %1878 = vmatprep.subr.mxu0 0.0
        %1879 = vmatpush1.msra.mxu0 0.0
        %1880 = vmatprep.subr.mxu0 0.0
        %1881 = vmatpush1.msra.mxu0 0.0
        %1882 = vmatprep.subr.mxu0 0.0
        %1883 = vmatpush1.msra.mxu0 0.0
        %1884 = vmatprep.subr.mxu0 0.0
        %1885 = vmatpush1.msra.mxu0 0.0
        %1886 = vmatprep.subr.mxu0 0.0
        %1887 = vmatpush1.msra.mxu0 0.0
        %1888 = vmatprep.subr.mxu0 0.0
        %1889 = vmatpush1.msra.mxu0 0.0
        %1890 = vmatprep.subr.mxu0 0.0
        %1891 = vmatpush1.msra.mxu0 0.0
        %1892 = vmatprep.mubr.f32.mxu0 0.0
        %1893 = vmatmul.mubr.f32.gmra.mrb[0].mxu0 %v1804
        %v1894 = vpop.f32.mrb[0].mxu0
        %v1895 = vadd.f32 0.0, %v1894
        %v1896 = vpop.f32.mrb[0].mxu0
        %v1897 = vadd.f32 0.0, %v1896
        %1898 = vdwg.mxu0
        %1899 = vmatprep.subr.mxu0 %v1792
        %1900 = vmatpush1.msra.mxu0 %v1791
        %1901 = vmatprep.subr.mxu0 %v1817
        %1902 = vmatpush1.msra.mxu0 %v1814
        %1903 = vmatprep.subr.mxu0 0.0
        %1904 = vmatpush1.msra.mxu0 0.0
        %1905 = vmatprep.subr.mxu0 0.0
        %1906 = vmatpush1.msra.mxu0 0.0
        %1907 = vmatprep.subr.mxu0 0.0
        %1908 = vmatpush1.msra.mxu0 0.0
        %1909 = vmatprep.subr.mxu0 0.0
        %1910 = vmatpush1.msra.mxu0 0.0
        %1911 = vmatprep.subr.mxu0 0.0
        %1912 = vmatpush1.msra.mxu0 0.0
        %1913 = vmatprep.subr.mxu0 0.0
        %1914 = vmatpush1.msra.mxu0 0.0
        %1915 = vmatprep.subr.mxu0 0.0
        %1916 = vmatpush1.msra.mxu0 0.0
        %1917 = vmatprep.subr.mxu0 0.0
        %1918 = vmatpush1.msra.mxu0 0.0
        %1919 = vmatprep.subr.mxu0 0.0
        %1920 = vmatpush1.msra.mxu0 0.0
        %1921 = vmatprep.subr.mxu0 0.0
        %1922 = vmatpush1.msra.mxu0 0.0
        %1923 = vmatprep.subr.mxu0 0.0
        %1924 = vmatpush1.msra.mxu0 0.0
        %1925 = vmatprep.subr.mxu0 0.0
        %1926 = vmatpush1.msra.mxu0 0.0
        %1927 = vmatprep.subr.mxu0 0.0
        %1928 = vmatpush1.msra.mxu0 0.0
        %1929 = vmatprep.subr.mxu0 0.0
        %1930 = vmatpush1.msra.mxu0 0.0
        %1931 = vmatprep.subr.mxu0 0.0
        %1932 = vmatpush1.msra.mxu0 0.0
        %1933 = vmatprep.subr.mxu0 0.0
        %1934 = vmatpush1.msra.mxu0 0.0
        %1935 = vmatprep.subr.mxu0 0.0
        %1936 = vmatpush1.msra.mxu0 0.0
        %1937 = vmatprep.subr.mxu0 0.0
        %1938 = vmatpush1.msra.mxu0 0.0
        %1939 = vmatprep.subr.mxu0 0.0
        %1940 = vmatpush1.msra.mxu0 0.0
        %1941 = vmatprep.subr.mxu0 0.0
        %1942 = vmatpush1.msra.mxu0 0.0
        %1943 = vmatprep.subr.mxu0 0.0
        %1944 = vmatpush1.msra.mxu0 0.0
        %1945 = vmatprep.subr.mxu0 0.0
        %1946 = vmatpush1.msra.mxu0 0.0
        %1947 = vmatprep.subr.mxu0 0.0
        %1948 = vmatpush1.msra.mxu0 0.0
        %1949 = vmatprep.subr.mxu0 0.0
        %1950 = vmatpush1.msra.mxu0 0.0
        %1951 = vmatprep.subr.mxu0 0.0
        %1952 = vmatpush1.msra.mxu0 0.0
        %1953 = vmatprep.subr.mxu0 0.0
        %1954 = vmatpush1.msra.mxu0 0.0
        %1955 = vmatprep.subr.mxu0 0.0
        %1956 = vmatpush1.msra.mxu0 0.0
        %1957 = vmatprep.subr.mxu0 0.0
        %1958 = vmatpush1.msra.mxu0 0.0
        %1959 = vmatprep.subr.mxu0 0.0
        %1960 = vmatpush1.msra.mxu0 0.0
        %1961 = vmatprep.subr.mxu0 0.0
        %1962 = vmatpush1.msra.mxu0 0.0
        %1963 = vmatprep.mubr.f32.mxu0 0.0
        %1964 = vmatmul.mubr.f32.gmra.mrb[0].mxu0 %v1804
        %v1965 = vpop.f32.mrb[0].mxu0
        %v1966 = vadd.f32 0.0, %v1965
        %v1967 = vpop.f32.mrb[0].mxu0
        %v1968 = vadd.f32 0.0, %v1967
        %1969 = vdwg.mxu0
        %1970 = vmatprep.subr.mxu0 %v1794
        %1971 = vmatpush1.msra.mxu0 %v1793
        %1972 = vmatprep.subr.mxu0 %v1823
        %1973 = vmatpush1.msra.mxu0 %v1820
        %1974 = vmatprep.subr.mxu0 0.0
        %1975 = vmatpush1.msra.mxu0 0.0
        %1976 = vmatprep.subr.mxu0 0.0
        %1977 = vmatpush1.msra.mxu0 0.0
        %1978 = vmatprep.subr.mxu0 0.0
        %1979 = vmatpush1.msra.mxu0 0.0
        %1980 = vmatprep.subr.mxu0 0.0
        %1981 = vmatpush1.msra.mxu0 0.0
        %1982 = vmatprep.subr.mxu0 0.0
        %1983 = vmatpush1.msra.mxu0 0.0
        %1984 = vmatprep.subr.mxu0 0.0
        %1985 = vmatpush1.msra.mxu0 0.0
        %1986 = vmatprep.subr.mxu0 0.0
        %1987 = vmatpush1.msra.mxu0 0.0
        %1988 = vmatprep.subr.mxu0 0.0
        %1989 = vmatpush1.msra.mxu0 0.0
        %1990 = vmatprep.subr.mxu0 0.0
        %1991 = vmatpush1.msra.mxu0 0.0
        %1992 = vmatprep.subr.mxu0 0.0
        %1993 = vmatpush1.msra.mxu0 0.0
        %1994 = vmatprep.subr.mxu0 0.0
        %1995 = vmatpush1.msra.mxu0 0.0
        %1996 = vmatprep.subr.mxu0 0.0
        %1997 = vmatpush1.msra.mxu0 0.0
        %1998 = vmatprep.subr.mxu0 0.0
        %1999 = vmatpush1.msra.mxu0 0.0
        %2000 = vmatprep.subr.mxu0 0.0
        %2001 = vmatpush1.msra.mxu0 0.0
        %2002 = vmatprep.subr.mxu0 0.0
        %2003 = vmatpush1.msra.mxu0 0.0
        %2004 = vmatprep.subr.mxu0 0.0
        %2005 = vmatpush1.msra.mxu0 0.0
        %2006 = vmatprep.subr.mxu0 0.0
        %2007 = vmatpush1.msra.mxu0 0.0
        %2008 = vmatprep.subr.mxu0 0.0
        %2009 = vmatpush1.msra.mxu0 0.0
        %2010 = vmatprep.subr.mxu0 0.0
        %2011 = vmatpush1.msra.mxu0 0.0
        %2012 = vmatprep.subr.mxu0 0.0
        %2013 = vmatpush1.msra.mxu0 0.0
        %2014 = vmatprep.subr.mxu0 0.0
        %2015 = vmatpush1.msra.mxu0 0.0
        %2016 = vmatprep.subr.mxu0 0.0
        %2017 = vmatpush1.msra.mxu0 0.0
        %2018 = vmatprep.subr.mxu0 0.0
        %2019 = vmatpush1.msra.mxu0 0.0
        %2020 = vmatprep.subr.mxu0 0.0
        %2021 = vmatpush1.msra.mxu0 0.0
        %2022 = vmatprep.subr.mxu0 0.0
        %2023 = vmatpush1.msra.mxu0 0.0
        %2024 = vmatprep.subr.mxu0 0.0
        %2025 = vmatpush1.msra.mxu0 0.0
        %2026 = vmatprep.subr.mxu0 0.0
        %2027 = vmatpush1.msra.mxu0 0.0
        %2028 = vmatprep.subr.mxu0 0.0
        %2029 = vmatpush1.msra.mxu0 0.0
        %2030 = vmatprep.subr.mxu0 0.0
        %2031 = vmatpush1.msra.mxu0 0.0
        %2032 = vmatprep.subr.mxu0 0.0
        %2033 = vmatpush1.msra.mxu0 0.0
        %2034 = vmatprep.mubr.f32.mxu0 0.0
        %2035 = vmatmul.mubr.f32.gmra.mrb[0].mxu0 %v1804
        %v2036 = vpop.f32.mrb[0].mxu0
        %v2037 = vadd.f32 0.0, %v2036
        %v2038 = vpop.f32.mrb[0].mxu0
        %v2039 = vadd.f32 0.0, %v2038
        %2040 = vdwg.mxu0
        %2041 = vmatprep.subr.mxu0 0.0
        %2042 = vmatpush1.msra.mxu0 %v1795
        %2043 = vmatprep.subr.mxu0 0.0
        %2044 = vmatpush1.msra.mxu0 %v1826
        %2045 = vmatprep.subr.mxu0 0.0
        %2046 = vmatpush1.msra.mxu0 0.0
        %2047 = vmatprep.subr.mxu0 0.0
        %2048 = vmatpush1.msra.mxu0 0.0
        %2049 = vmatprep.subr.mxu0 0.0
        %2050 = vmatpush1.msra.mxu0 0.0
        %2051 = vmatprep.subr.mxu0 0.0
        %2052 = vmatpush1.msra.mxu0 0.0
        %2053 = vmatprep.subr.mxu0 0.0
        %2054 = vmatpush1.msra.mxu0 0.0
        %2055 = vmatprep.subr.mxu0 0.0
        %2056 = vmatpush1.msra.mxu0 0.0
        %2057 = vmatprep.subr.mxu0 0.0
        %2058 = vmatpush1.msra.mxu0 0.0
        %2059 = vmatprep.subr.mxu0 0.0
        %2060 = vmatpush1.msra.mxu0 0.0
        %2061 = vmatprep.subr.mxu0 0.0
        %2062 = vmatpush1.msra.mxu0 0.0
        %2063 = vmatprep.subr.mxu0 0.0
        %2064 = vmatpush1.msra.mxu0 0.0
        %2065 = vmatprep.subr.mxu0 0.0
        %2066 = vmatpush1.msra.mxu0 0.0
        %2067 = vmatprep.subr.mxu0 0.0
        %2068 = vmatpush1.msra.mxu0 0.0
        %2069 = vmatprep.subr.mxu0 0.0
        %2070 = vmatpush1.msra.mxu0 0.0
        %2071 = vmatprep.subr.mxu0 0.0
        %2072 = vmatpush1.msra.mxu0 0.0
        %2073 = vmatprep.subr.mxu0 0.0
        %2074 = vmatpush1.msra.mxu0 0.0
        %2075 = vmatprep.subr.mxu0 0.0
        %2076 = vmatpush1.msra.mxu0 0.0
        %2077 = vmatprep.subr.mxu0 0.0
        %2078 = vmatpush1.msra.mxu0 0.0
        %2079 = vmatprep.subr.mxu0 0.0
        %2080 = vmatpush1.msra.mxu0 0.0
        %2081 = vmatprep.subr.mxu0 0.0
        %2082 = vmatpush1.msra.mxu0 0.0
        %2083 = vmatprep.subr.mxu0 0.0
        %2084 = vmatpush1.msra.mxu0 0.0
        %2085 = vmatprep.subr.mxu0 0.0
        %2086 = vmatpush1.msra.mxu0 0.0
        %2087 = vmatprep.subr.mxu0 0.0
        %2088 = vmatpush1.msra.mxu0 0.0
        %2089 = vmatprep.subr.mxu0 0.0
        %2090 = vmatpush1.msra.mxu0 0.0
        %2091 = vmatprep.subr.mxu0 0.0
        %2092 = vmatpush1.msra.mxu0 0.0
        %2093 = vmatprep.subr.mxu0 0.0
        %2094 = vmatpush1.msra.mxu0 0.0
        %2095 = vmatprep.subr.mxu0 0.0
        %2096 = vmatpush1.msra.mxu0 0.0
        %2097 = vmatprep.subr.mxu0 0.0
        %2098 = vmatpush1.msra.mxu0 0.0
        %2099 = vmatprep.subr.mxu0 0.0
        %2100 = vmatpush1.msra.mxu0 0.0
        %2101 = vmatprep.subr.mxu0 0.0
        %2102 = vmatpush1.msra.mxu0 0.0
        %2103 = vmatprep.subr.mxu0 0.0
        %2104 = vmatpush1.msra.mxu0 0.0
        %2105 = vmatprep.mubr.f32.mxu0 0.0
        %2106 = vmatmul.mubr.f32.gmra.mrb[0].mxu0 %v1804
        %v2107 = vpop.f32.mrb[0].mxu0
        %v2108 = vadd.f32 0.0, %v2107
        %v2109 = vpop.f32.mrb[0].mxu0
        %2110 = vdwg.mxu0
        %v2111 = vld [vmem:[#allocation7] sm:$0xff]
        %v2112 = vld [vmem:[#allocation7 + $0x8] sm:$0xff]
        %v2113 = vld [vmem:[#allocation7 + $0x10] sm:$0xff]
        %v2114 = vld [vmem:[#allocation7 + $0x18] sm:$0xff]
        %v2115 = vld [vmem:[#allocation7 + $0x20] sm:$0xff]
        %v2116 = vld [vmem:[#allocation7 + $0x28] sm:$0xff]
        %v2117 = vld [vmem:[#allocation7 + $0x30] sm:$0xff]
        %v2118 = vld [vmem:[#allocation7 + $0x38] sm:$0xff]
        %v2119 = vld [vmem:[#allocation7 + $0x40] sm:$0xff]
        %v2120 = vld [vmem:[#allocation7 + $0x48] sm:$0xff]
        %v2121 = vld [vmem:[#allocation7 + $0x50] sm:$0xff]
        %v2122 = vld [vmem:[#allocation7 + $0x58] sm:$0xff]
        %v2123 = vld [vmem:[#allocation7 + $0x60] sm:$0xff]
        %v2124 = vld [vmem:[#allocation7 + $0x68] sm:$0xff]
        %v2125 = vld [vmem:[#allocation7 + $0x70] sm:$0xff]
        %v2126 = vld [vmem:[#allocation7 + $0x78] sm:$0xff]
        %v2127 = vld [vmem:[#allocation7 + $0x80] sm:$0xff]
        %v2128 = vld [vmem:[#allocation7 + $0x88] sm:$0xff]
        %v2129 = vld [vmem:[#allocation7 + $0x90] sm:$0xff]
        %v2130 = vld [vmem:[#allocation7 + $0x98] sm:$0xff]
        %v2131 = vld [vmem:[#allocation7 + $0xa0] sm:$0xff]
        %v2132 = vld [vmem:[#allocation7 + $0xa8] sm:$0xff]
        %v2133 = vld [vmem:[#allocation7 + $0xb0] sm:$0xff]
        %v2134 = vld [vmem:[#allocation7 + $0xb8] sm:$0xff]
        %v2135 = vld [vmem:[#allocation7 + $0xc0] sm:$0xff]
        %v2136 = vld [vmem:[#allocation7 + $0xc8] sm:$0xff]
        %v2137 = vld [vmem:[#allocation7 + $0xd0] sm:$0xff]
        %v2138 = vld [vmem:[#allocation7 + $0xd8] sm:$0xff]
        %v2139 = vld [vmem:[#allocation7 + $0xe0] sm:$0xff]
        %v2140 = vld [vmem:[#allocation7 + $0xe8] sm:$0xff]
        %v2141 = vld [vmem:[#allocation7 + $0xf0] sm:$0xff]
        %v2142 = vld [vmem:[#allocation7 + $0xf8] sm:$0xff]
        %v2143 = vld [vmem:[#allocation7 + $0x100] sm:$0xff]
        %v2144 = vld [vmem:[#allocation7 + $0x108] sm:$0xff]
        %v2145 = vld [vmem:[#allocation7 + $0x110] sm:$0xff]
        %v2146 = vld [vmem:[#allocation7 + $0x118] sm:$0xff]
        %v2147 = vld [vmem:[#allocation7 + $0x120] sm:$0xff]
        %v2148 = vld [vmem:[#allocation7 + $0x128] sm:$0xff]
        %v2149 = vld [vmem:[#allocation7 + $0x130] sm:$0xff]
        %v2150 = vld [vmem:[#allocation7 + $0x138] sm:$0xff]
        %v2151 = vld [vmem:[#allocation7 + $0x140] sm:$0xff]
        %v2152 = vld [vmem:[#allocation7 + $0x148] sm:$0xff]
        %v2153 = vld [vmem:[#allocation7 + $0x150] sm:$0xff]
        %v2154 = vld [vmem:[#allocation7 + $0x158] sm:$0xff]
        %v2155 = vld [vmem:[#allocation7 + $0x160] sm:$0xff]
        %v2156 = vld [vmem:[#allocation7 + $0x168] sm:$0xff]
        %v2157 = vld [vmem:[#allocation7 + $0x170] sm:$0xff]
        %v2158 = vld [vmem:[#allocation7 + $0x178] sm:$0xff]
        %v2159 = vld [vmem:[#allocation7 + $0x180] sm:$0xff]
        %v2160 = vld [vmem:[#allocation7 + $0x188] sm:$0xff]
        %v2161 = vld [vmem:[#allocation7 + $0x190] sm:$0xff]
        %v2162 = vld [vmem:[#allocation7 + $0x198] sm:$0xff]
        %v2163 = vld [vmem:[#allocation7 + $0x1a0] sm:$0xff]
        %v2164 = vld [vmem:[#allocation7 + $0x1a8] sm:$0xff]
        %v2165 = vld [vmem:[#allocation7 + $0x1b0] sm:$0xff]
        %v2166 = vld [vmem:[#allocation7 + $0x1b8] sm:$0xff]
        %v2167 = vld [vmem:[#allocation7 + $0x1c0] sm:$0xff]
        %v2168 = vld [vmem:[#allocation7 + $0x1c8] sm:$0xff]
        %v2169 = vld [vmem:[#allocation7 + $0x1d0] sm:$0xff]
        %v2170 = vld [vmem:[#allocation7 + $0x1d8] sm:$0xff]
        %v2171 = vld [vmem:[#allocation7 + $0x1e0] sm:$0xff]
        %v2172 = vld [vmem:[#allocation7 + $0x1e8] sm:$0xff]
        %v2173 = vld [vmem:[#allocation7 + $0x1f0] sm:$0xff]
        %v2174 = vld [vmem:[#allocation7 + $0x1f8] sm:$0xff]
        %v2175 = vld [vmem:[#allocation7 + $0x200] sm:$0xff]
        %v2176 = vld [vmem:[#allocation7 + $0x208] sm:$0xff]
        %v2177 = vld [vmem:[#allocation7 + $0x210] sm:$0xff]
        %v2178 = vld [vmem:[#allocation7 + $0x218] sm:$0xff]
        %v2179 = vld [vmem:[#allocation7 + $0x220] sm:$0xff]
        %v2180 = vld [vmem:[#allocation7 + $0x228] sm:$0xff]
        %v2181 = vld [vmem:[#allocation7 + $0x230] sm:$0xff]
        %v2182 = vld [vmem:[#allocation7 + $0x238] sm:$0xff]
        %v2183 = vld [vmem:[#allocation7 + $0x240] sm:$0xff]
        %v2184 = vld [vmem:[#allocation7 + $0x248] sm:$0xff]
        %v2185 = vld [vmem:[#allocation7 + $0x250] sm:$0xff]
        %v2186 = vld [vmem:[#allocation7 + $0x258] sm:$0xff]
        %v2187 = vld [vmem:[#allocation7 + $0x260] sm:$0xff]
        %v2188 = vld [vmem:[#allocation7 + $0x268] sm:$0xff]
        %v2189 = vld [vmem:[#allocation7 + $0x270] sm:$0xff]
        %v2190 = vld [vmem:[#allocation7 + $0x278] sm:$0xff]
        %v2191 = vld [vmem:[#allocation7 + $0x280] sm:$0xff]
        %v2192 = vld [vmem:[#allocation7 + $0x288] sm:$0xff]
        %v2193 = vld [vmem:[#allocation7 + $0x290] sm:$0xff]
        %v2194 = vld [vmem:[#allocation7 + $0x298] sm:$0xff]
        %v2195 = vld [vmem:[#allocation7 + $0x2a0] sm:$0xff]
        %v2196 = vld [vmem:[#allocation7 + $0x2a8] sm:$0xff]
        %v2197 = vld [vmem:[#allocation7 + $0x2b0] sm:$0xff]
        %v2198 = vld [vmem:[#allocation7 + $0x2b8] sm:$0xff]
        %v2199 = vld [vmem:[#allocation7 + $0x2c0] sm:$0xff]
        %v2200 = vld [vmem:[#allocation7 + $0x2c8] sm:$0xff]
        %v2201 = vld [vmem:[#allocation7 + $0x2d0] sm:$0xff]
        %v2202 = vld [vmem:[#allocation7 + $0x2d8] sm:$0xff]
        %v2203 = vld [vmem:[#allocation7 + $0x2e0] sm:$0xff]
        %v2204 = vld [vmem:[#allocation7 + $0x2e8] sm:$0xff]
        %v2205 = vld [vmem:[#allocation7 + $0x2f0] sm:$0xff]
        %v2206 = vld [vmem:[#allocation7 + $0x2f8] sm:$0xff]
        %v2207 = vld [vmem:[#allocation7 + $0x300] sm:$0xff]
        %v2208 = vld [vmem:[#allocation7 + $0x308] sm:$0xff]
        %v2209 = vld [vmem:[#allocation7 + $0x310] sm:$0xff]
        %v2210 = vld [vmem:[#allocation7 + $0x318] sm:$0xff]
        %v2211 = vld [vmem:[#allocation7 + $0x320] sm:$0xff]
        %v2212 = vld [vmem:[#allocation7 + $0x328] sm:$0xff]
        %v2213 = vld [vmem:[#allocation7 + $0x330] sm:$0xff]
        %v2214 = vld [vmem:[#allocation7 + $0x338] sm:$0xff]
        %v2215 = vld [vmem:[#allocation7 + $0x340] sm:$0xff]
        %v2216 = vld [vmem:[#allocation7 + $0x348] sm:$0xff]
        %v2217 = vld [vmem:[#allocation7 + $0x350] sm:$0xff]
        %v2218 = vld [vmem:[#allocation7 + $0x358] sm:$0xff]
        %v2219 = vld [vmem:[#allocation7 + $0x360] sm:$0xff]
        %v2220 = vld [vmem:[#allocation7 + $0x368] sm:$0xff]
        %v2221 = vld [vmem:[#allocation7 + $0x370] sm:$0xff]
        %v2222 = vld [vmem:[#allocation7 + $0x378] sm:$0xff]
        %v2223 = vld [vmem:[#allocation7 + $0x380] sm:$0xff]
        %v2224 = vld [vmem:[#allocation7 + $0x388] sm:$0xff]
        %v2225 = vld [vmem:[#allocation7 + $0x390] sm:$0xff]
        %v2226 = vld [vmem:[#allocation7 + $0x398] sm:$0xff]
        %v2227 = vld [vmem:[#allocation7 + $0x3a0] sm:$0xff]
        %v2228 = vld [vmem:[#allocation7 + $0x3a8] sm:$0xff]
        %v2229 = vld [vmem:[#allocation7 + $0x3b0] sm:$0xff]
        %v2230 = vld [vmem:[#allocation7 + $0x3b8] sm:$0xff]
        %v2231 = vld [vmem:[#allocation7 + $0x3c0] sm:$0xff]
        %v2232 = vld [vmem:[#allocation7 + $0x3c8] sm:$0xff]
        %v2233 = vld [vmem:[#allocation7 + $0x3d0] sm:$0xff]
        %v2234 = vld [vmem:[#allocation7 + $0x3d8] sm:$0xff]
        %v2235 = vld [vmem:[#allocation7 + $0x3e0] sm:$0xff]
        %v2236 = vld [vmem:[#allocation7 + $0x3e8] sm:$0xff]
        %v2237 = vld [vmem:[#allocation7 + $0x3f0] sm:$0xff]
        %v2238 = vld [vmem:[#allocation7 + $0x3f8] sm:$0xff]
        %v2239 = vld [vmem:[#allocation7 + $0x400] sm:$0xff]
        %v2240 = vld [vmem:[#allocation7 + $0x408] sm:$0xff]
        %v2241 = vld [vmem:[#allocation7 + $0x410] sm:$0xff]
        %v2242 = vld [vmem:[#allocation7 + $0x418] sm:$0xff]
        %v2243 = vld [vmem:[#allocation7 + $0x420] sm:$0xff]
        %v2244 = vld [vmem:[#allocation7 + $0x428] sm:$0xff]
        %v2245 = vld [vmem:[#allocation7 + $0x430] sm:$0xff]
        %v2246 = vld [vmem:[#allocation7 + $0x438] sm:$0xff]
        %v2247 = vld [vmem:[#allocation7 + $0x440] sm:$0xff]
        %v2248 = vld [vmem:[#allocation7 + $0x448] sm:$0xff]
        %v2249 = vld [vmem:[#allocation7 + $0x450] sm:$0xff]
        %v2250 = vld [vmem:[#allocation7 + $0x458] sm:$0xff]
        %v2251 = vld [vmem:[#allocation7 + $0x460] sm:$0xff]
        %v2252 = vld [vmem:[#allocation7 + $0x468] sm:$0xff]
        %v2253 = vld [vmem:[#allocation7 + $0x470] sm:$0xff]
        %v2254 = vld [vmem:[#allocation7 + $0x478] sm:$0xff]
        %v2255 = vld [vmem:[#allocation7 + $0x480] sm:$0xff]
        %v2256 = vld [vmem:[#allocation7 + $0x488] sm:$0xff]
        %v2257 = vld [vmem:[#allocation7 + $0x490] sm:$0xff]
        %v2258 = vld [vmem:[#allocation7 + $0x498] sm:$0xff]
        %v2259 = vld [vmem:[#allocation7 + $0x4a0] sm:$0xff]
        %v2260 = vld [vmem:[#allocation7 + $0x4a8] sm:$0xff]
        %v2261 = vld [vmem:[#allocation7 + $0x4b0] sm:$0xff]
        %v2262 = vld [vmem:[#allocation7 + $0x4b8] sm:$0xff]
        %v2263 = vld [vmem:[#allocation7 + $0x4c0] sm:$0xff]
        %v2264 = vld [vmem:[#allocation7 + $0x4c8] sm:$0xff]
        %v2265 = vld [vmem:[#allocation7 + $0x4d0] sm:$0xff]
        %v2266 = vld [vmem:[#allocation7 + $0x4d8] sm:$0xff]
        %v2267 = vld [vmem:[#allocation7 + $0x4e0] sm:$0xff]
        %v2268 = vld [vmem:[#allocation7 + $0x4e8] sm:$0xff]
        %v2269 = vld [vmem:[#allocation7 + $0x4f0] sm:$0xff]
        %v2270 = vld [vmem:[#allocation7 + $0x4f8] sm:$0xff]
        %v2271 = vld [vmem:[#allocation7 + $0x500] sm:$0xff]
        %v2272 = vld [vmem:[#allocation7 + $0x508] sm:$0xff]
        %v2273 = vld [vmem:[#allocation7 + $0x510] sm:$0xff]
        %v2274 = vld [vmem:[#allocation7 + $0x518] sm:$0xff]
        %v2275 = vld [vmem:[#allocation7 + $0x520] sm:$0xff]
        %v2276 = vld [vmem:[#allocation7 + $0x528] sm:$0xff]
        %v2277 = vld [vmem:[#allocation7 + $0x530] sm:$0xff]
        %v2278 = vld [vmem:[#allocation7 + $0x538] sm:$0xff]
        %v2279 = vld [vmem:[#allocation7 + $0x540] sm:$0xff]
        %v2280 = vld [vmem:[#allocation7 + $0x548] sm:$0xff]
        %v2281 = vld [vmem:[#allocation7 + $0x550] sm:$0xff]
        %v2282 = vld [vmem:[#allocation7 + $0x558] sm:$0xff]
        %v2283 = vld [vmem:[#allocation7 + $0x560] sm:$0xff]
        %v2284 = vld [vmem:[#allocation7 + $0x568] sm:$0xff]
        %v2285 = vld [vmem:[#allocation7 + $0x570] sm:$0xff]
        %v2286 = vld [vmem:[#allocation7 + $0x578] sm:$0xff]
        %v2287 = vld [vmem:[#allocation7 + $0x580] sm:$0xff]
        %v2288 = vld [vmem:[#allocation7 + $0x588] sm:$0xff]
        %v2289 = vld [vmem:[#allocation7 + $0x590] sm:$0xff]
        %v2290 = vld [vmem:[#allocation7 + $0x598] sm:$0xff]
        %v2291 = vld [vmem:[#allocation7 + $0x5a0] sm:$0xff]
        %v2292 = vld [vmem:[#allocation7 + $0x5a8] sm:$0xff]
        %v2293 = vld [vmem:[#allocation7 + $0x5b0] sm:$0xff]
        %v2294 = vld [vmem:[#allocation7 + $0x5b8] sm:$0xff]
        %v2295 = vld [vmem:[#allocation7 + $0x5c0] sm:$0xff]
        %v2296 = vld [vmem:[#allocation7 + $0x5c8] sm:$0xff]
        %v2297 = vld [vmem:[#allocation7 + $0x5d0] sm:$0xff]
        %v2298 = vld [vmem:[#allocation7 + $0x5d8] sm:$0xff]
        %v2299 = vld [vmem:[#allocation7 + $0x5e0] sm:$0xff]
        %v2300 = vld [vmem:[#allocation7 + $0x5e8] sm:$0xff]
        %v2301 = vld [vmem:[#allocation7 + $0x5f0] sm:$0xff]
        %v2302 = vld [vmem:[#allocation7 + $0x5f8] sm:$0xff]
        %v2303 = vld [vmem:[#allocation7 + $0x600] sm:$0xff]
        %v2304 = vld [vmem:[#allocation7 + $0x608] sm:$0xff]
        %v2305 = vld [vmem:[#allocation7 + $0x610] sm:$0xff]
        %v2306 = vld [vmem:[#allocation7 + $0x618] sm:$0xff]
        %v2307 = vld [vmem:[#allocation7 + $0x620] sm:$0xff]
        %v2308 = vld [vmem:[#allocation7 + $0x628] sm:$0xff]
        %v2309 = vld [vmem:[#allocation7 + $0x630] sm:$0xff]
        %v2310 = vld [vmem:[#allocation7 + $0x638] sm:$0xff]
        %v2311 = vld [vmem:[#allocation7 + $0x640] sm:$0xff]
        %v2312 = vld [vmem:[#allocation7 + $0x648] sm:$0xff]
        %v2313 = vld [vmem:[#allocation7 + $0x650] sm:$0xff]
        %v2314 = vld [vmem:[#allocation7 + $0x658] sm:$0xff]
        %v2315 = vld [vmem:[#allocation7 + $0x660] sm:$0xff]
        %v2316 = vld [vmem:[#allocation7 + $0x668] sm:$0xff]
        %v2317 = vld [vmem:[#allocation7 + $0x670] sm:$0xff]
        %v2318 = vld [vmem:[#allocation7 + $0x678] sm:$0xff]
        %v2319 = vld [vmem:[#allocation7 + $0x680] sm:$0xff]
        %v2320 = vld [vmem:[#allocation7 + $0x688] sm:$0xff]
        %v2321 = vld [vmem:[#allocation7 + $0x690] sm:$0xff]
        %v2322 = vld [vmem:[#allocation7 + $0x698] sm:$0xff]
        %v2323 = vld [vmem:[#allocation7 + $0x6a0] sm:$0xff]
        %v2324 = vld [vmem:[#allocation7 + $0x6a8] sm:$0xff]
        %v2325 = vld [vmem:[#allocation7 + $0x6b0] sm:$0xff]
        %v2326 = vld [vmem:[#allocation7 + $0x6b8] sm:$0xff]
        %v2327 = vld [vmem:[#allocation7 + $0x6c0] sm:$0xff]
        %v2328 = vld [vmem:[#allocation7 + $0x6c8] sm:$0xff]
        %v2329 = vld [vmem:[#allocation7 + $0x6d0] sm:$0xff]
        %v2330 = vld [vmem:[#allocation7 + $0x6d8] sm:$0xff]
        %v2331 = vld [vmem:[#allocation7 + $0x6e0] sm:$0xff]
        %v2332 = vld [vmem:[#allocation7 + $0x6e8] sm:$0xff]
        %v2333 = vld [vmem:[#allocation7 + $0x6f0] sm:$0xff]
        %v2334 = vld [vmem:[#allocation7 + $0x6f8] sm:$0xff]
        %v2335 = vld [vmem:[#allocation7 + $0x700] sm:$0xff]
        %v2336 = vld [vmem:[#allocation7 + $0x708] sm:$0xff]
        %v2337 = vld [vmem:[#allocation7 + $0x710] sm:$0xff]
        %v2338 = vld [vmem:[#allocation7 + $0x718] sm:$0xff]
        %v2339 = vld [vmem:[#allocation7 + $0x720] sm:$0xff]
        %v2340 = vld [vmem:[#allocation7 + $0x728] sm:$0xff]
        %v2341 = vld [vmem:[#allocation7 + $0x730] sm:$0xff]
        %v2342 = vld [vmem:[#allocation7 + $0x738] sm:$0xff]
        %v2343 = vld [vmem:[#allocation7 + $0x740] sm:$0xff]
        %v2344 = vld [vmem:[#allocation7 + $0x748] sm:$0xff]
        %v2345 = vld [vmem:[#allocation7 + $0x750] sm:$0xff]
        %v2346 = vld [vmem:[#allocation7 + $0x758] sm:$0xff]
        %v2347 = vld [vmem:[#allocation7 + $0x760] sm:$0xff]
        %v2348 = vld [vmem:[#allocation7 + $0x768] sm:$0xff]
        %v2349 = vld [vmem:[#allocation7 + $0x770] sm:$0xff]
        %v2350 = vld [vmem:[#allocation7 + $0x778] sm:$0xff]
        %v2351 = vld [vmem:[#allocation7 + $0x780] sm:$0xff]
        %v2352 = vld [vmem:[#allocation7 + $0x788] sm:$0xff]
        %v2353 = vld [vmem:[#allocation7 + $0x790] sm:$0xff]
        %v2354 = vld [vmem:[#allocation7 + $0x798] sm:$0xff]
        %v2355 = vld [vmem:[#allocation7 + $0x7a0] sm:$0xff]
        %v2356 = vld [vmem:[#allocation7 + $0x7a8] sm:$0xff]
        %v2357 = vld [vmem:[#allocation7 + $0x7b0] sm:$0xff]
        %v2358 = vld [vmem:[#allocation7 + $0x7b8] sm:$0xff]
        %v2359 = vld [vmem:[#allocation7 + $0x7c0] sm:$0xff]
        %v2360 = vld [vmem:[#allocation7 + $0x7c8] sm:$0xff]
        %v2361 = vld [vmem:[#allocation7 + $0x7d0] sm:$0xff]
        %v2362 = vld [vmem:[#allocation7 + $0x7d8] sm:$0xff]
        %v2363 = vld [vmem:[#allocation7 + $0x7e0] sm:$0xff]
        %v2364 = vld [vmem:[#allocation7 + $0x7e8] sm:$0xff]
        %v2365 = vld [vmem:[#allocation7 + $0x7f0] sm:$0xff]
        %v2366 = vld [vmem:[#allocation7 + $0x7f8] sm:$0xff]
        %v2367 = vld [vmem:[#allocation7 + $0x800] sm:$0xff]
        %v2368 = vld [vmem:[#allocation7 + $0x808] sm:$0xff]
        %v2369 = vld [vmem:[#allocation7 + $0x810] sm:$0xff]
        %v2370 = vld [vmem:[#allocation7 + $0x818] sm:$0xff]
        %v2371 = vld [vmem:[#allocation7 + $0x820] sm:$0xff]
        %v2372 = vld [vmem:[#allocation7 + $0x828] sm:$0xff]
        %v2373 = vld [vmem:[#allocation7 + $0x830] sm:$0xff]
        %v2374 = vld [vmem:[#allocation7 + $0x838] sm:$0xff]
        %v2375 = vld [vmem:[#allocation7 + $0x840] sm:$0xff]
        %v2376 = vld [vmem:[#allocation7 + $0x848] sm:$0xff]
        %v2377 = vld [vmem:[#allocation7 + $0x850] sm:$0xff]
        %v2378 = vld [vmem:[#allocation7 + $0x858] sm:$0xff]
        %v2379 = vld [vmem:[#allocation7 + $0x860] sm:$0xff]
        %v2380 = vld [vmem:[#allocation7 + $0x868] sm:$0xff]
        %v2381 = vld [vmem:[#allocation7 + $0x870] sm:$0xff]
        %v2382 = vld [vmem:[#allocation7 + $0x878] sm:$0xff]
        %v2383 = vld [vmem:[#allocation7 + $0x880] sm:$0xff]
        %v2384 = vld [vmem:[#allocation7 + $0x888] sm:$0xff]
        %v2385 = vld [vmem:[#allocation7 + $0x890] sm:$0xff]
        %v2386 = vld [vmem:[#allocation7 + $0x898] sm:$0xff]
        %v2387 = vld [vmem:[#allocation7 + $0x8a0] sm:$0xff]
        %v2388 = vld [vmem:[#allocation7 + $0x8a8] sm:$0xff]
        %v2389 = vld [vmem:[#allocation7 + $0x8b0] sm:$0xff]
        %v2390 = vld [vmem:[#allocation7 + $0x8b8] sm:$0xff]
        %v2391 = vld [vmem:[#allocation7 + $0x8c0] sm:$0xff]
        %v2392 = vld [vmem:[#allocation7 + $0x8c8] sm:$0xff]
        %v2393 = vld [vmem:[#allocation7 + $0x8d0] sm:$0xff]
        %v2394 = vld [vmem:[#allocation7 + $0x8d8] sm:$0xff]
        %v2395 = vld [vmem:[#allocation7 + $0x8e0] sm:$0xff]
        %v2396 = vld [vmem:[#allocation7 + $0x8e8] sm:$0xff]
        %v2397 = vld [vmem:[#allocation7 + $0x8f0] sm:$0xff]
        %v2398 = vld [vmem:[#allocation7 + $0x8f8] sm:$0xff]
        %v2399 = vld [vmem:[#allocation7 + $0x900] sm:$0xff]
        %v2400 = vld [vmem:[#allocation7 + $0x908] sm:$0xff]
        %v2401 = vld [vmem:[#allocation7 + $0x910] sm:$0xff]
        %v2402 = vld [vmem:[#allocation7 + $0x918] sm:$0xff]
        %v2403 = vld [vmem:[#allocation7 + $0x920] sm:$0xff]
        %v2404 = vld [vmem:[#allocation7 + $0x928] sm:$0xff]
        %v2405 = vld [vmem:[#allocation7 + $0x930] sm:$0xff]
        %v2406 = vld [vmem:[#allocation7 + $0x938] sm:$0xff]
        %v2407 = vld [vmem:[#allocation7 + $0x940] sm:$0xff]
        %v2408 = vld [vmem:[#allocation7 + $0x948] sm:$0xff]
        %v2409 = vld [vmem:[#allocation7 + $0x950] sm:$0xff]
        %v2410 = vld [vmem:[#allocation7 + $0x958] sm:$0xff]
        %v2411 = vld [vmem:[#allocation7 + $0x960] sm:$0xff]
        %v2412 = vld [vmem:[#allocation7 + $0x968] sm:$0xff]
        %v2413 = vld [vmem:[#allocation7 + $0x970] sm:$0xff]
        %v2414 = vld [vmem:[#allocation7 + $0x978] sm:$0xff]
        %v2415 = vld [vmem:[#allocation7 + $0x980] sm:$0xff]
        %v2416 = vld [vmem:[#allocation7 + $0x988] sm:$0xff]
        %v2417 = vld [vmem:[#allocation7 + $0x990] sm:$0xff]
        %v2418 = vld [vmem:[#allocation7 + $0x998] sm:$0xff]
        %v2419 = vld [vmem:[#allocation7 + $0x9a0] sm:$0xff]
        %v2420 = vld [vmem:[#allocation7 + $0x9a8] sm:$0xff]
        %v2421 = vld [vmem:[#allocation7 + $0x9b0] sm:$0xff]
        %v2422 = vld [vmem:[#allocation7 + $0x9b8] sm:$0xff]
        %v2423 = vsel %vm1803, %v481, 0
        %2425 = vmatprep.subr.mxu0 %v1790
        %2426 = vmatpush1.msra.mxu0 %v1789
        %2427 = vmatprep.subr.mxu0 %v1811
        %2428 = vmatpush1.msra.mxu0 %v1808
        %2429 = vmatprep.subr.mxu0 0.0
        %2430 = vmatpush1.msra.mxu0 0.0
        %2431 = vmatprep.subr.mxu0 0.0
        %2432 = vmatpush1.msra.mxu0 0.0
        %2433 = vmatprep.subr.mxu0 0.0
        %2434 = vmatpush1.msra.mxu0 0.0
        %2435 = vmatprep.subr.mxu0 0.0
        %2436 = vmatpush1.msra.mxu0 0.0
        %2437 = vmatprep.subr.mxu0 0.0
        %2438 = vmatpush1.msra.mxu0 0.0
        %2439 = vmatprep.subr.mxu0 0.0
        %2440 = vmatpush1.msra.mxu0 0.0
        %2441 = vmatprep.subr.mxu0 0.0
        %2442 = vmatpush1.msra.mxu0 0.0
        %2443 = vmatprep.subr.mxu0 0.0
        %2444 = vmatpush1.msra.mxu0 0.0
        %2445 = vmatprep.subr.mxu0 0.0
        %2446 = vmatpush1.msra.mxu0 0.0
        %2447 = vmatprep.subr.mxu0 0.0
        %2448 = vmatpush1.msra.mxu0 0.0
        %2449 = vmatprep.subr.mxu0 0.0
        %2450 = vmatpush1.msra.mxu0 0.0
        %2451 = vmatprep.subr.mxu0 0.0
        %2452 = vmatpush1.msra.mxu0 0.0
        %2453 = vmatprep.subr.mxu0 0.0
        %2454 = vmatpush1.msra.mxu0 0.0
        %2455 = vmatprep.subr.mxu0 0.0
        %2456 = vmatpush1.msra.mxu0 0.0
        %2457 = vmatprep.subr.mxu0 0.0
        %2458 = vmatpush1.msra.mxu0 0.0
        %2459 = vmatprep.subr.mxu0 0.0
        %2460 = vmatpush1.msra.mxu0 0.0
        %2461 = vmatprep.subr.mxu0 0.0
        %2462 = vmatpush1.msra.mxu0 0.0
        %2463 = vmatprep.subr.mxu0 0.0
        %2464 = vmatpush1.msra.mxu0 0.0
        %2465 = vmatprep.subr.mxu0 0.0
        %2466 = vmatpush1.msra.mxu0 0.0
        %2467 = vmatprep.subr.mxu0 0.0
        %2468 = vmatpush1.msra.mxu0 0.0
        %2469 = vmatprep.subr.mxu0 0.0
        %2470 = vmatpush1.msra.mxu0 0.0
        %2471 = vmatprep.subr.mxu0 0.0
        %2472 = vmatpush1.msra.mxu0 0.0
        %2473 = vmatprep.subr.mxu0 0.0
        %2474 = vmatpush1.msra.mxu0 0.0
        %2475 = vmatprep.subr.mxu0 0.0
        %2476 = vmatpush1.msra.mxu0 0.0
        %2477 = vmatprep.subr.mxu0 0.0
        %2478 = vmatpush1.msra.mxu0 0.0
        %2479 = vmatprep.subr.mxu0 0.0
        %2480 = vmatpush1.msra.mxu0 0.0
        %2481 = vmatprep.subr.mxu0 0.0
        %2482 = vmatpush1.msra.mxu0 0.0
        %2483 = vmatprep.subr.mxu0 0.0
        %2484 = vmatpush1.msra.mxu0 0.0
        %2485 = vmatprep.subr.mxu0 0.0
        %2486 = vmatpush1.msra.mxu0 0.0
        %2487 = vmatprep.subr.mxu0 0.0
        %2488 = vmatpush1.msra.mxu0 0.0
        %2489 = vmatprep.mubr.f32.mxu0 0.0
        %2490 = vmatmul.mubr.f32.gmra.mrb[0].mxu0 %v2423
        %v2491 = vpop.f32.mrb[0].mxu0
        %v2492 = vadd.f32 0.0, %v2491
        %v2493 = vpop.f32.mrb[0].mxu0
        %v2494 = vadd.f32 0.0, %v2493
        %2495 = vdwg.mxu0
        %2496 = vmatprep.subr.mxu0 %v1792
        %2497 = vmatpush1.msra.mxu0 %v1791
        %2498 = vmatprep.subr.mxu0 %v1817
        %2499 = vmatpush1.msra.mxu0 %v1814
        %2500 = vmatprep.subr.mxu0 0.0
        %2501 = vmatpush1.msra.mxu0 0.0
        %2502 = vmatprep.subr.mxu0 0.0
        %2503 = vmatpush1.msra.mxu0 0.0
        %2504 = vmatprep.subr.mxu0 0.0
        %2505 = vmatpush1.msra.mxu0 0.0
        %2506 = vmatprep.subr.mxu0 0.0
        %2507 = vmatpush1.msra.mxu0 0.0
        %2508 = vmatprep.subr.mxu0 0.0
        %2509 = vmatpush1.msra.mxu0 0.0
        %2510 = vmatprep.subr.mxu0 0.0
        %2511 = vmatpush1.msra.mxu0 0.0
        %2512 = vmatprep.subr.mxu0 0.0
        %2513 = vmatpush1.msra.mxu0 0.0
        %2514 = vmatprep.subr.mxu0 0.0
        %2515 = vmatpush1.msra.mxu0 0.0
        %2516 = vmatprep.subr.mxu0 0.0
        %2517 = vmatpush1.msra.mxu0 0.0
        %2518 = vmatprep.subr.mxu0 0.0
        %2519 = vmatpush1.msra.mxu0 0.0
        %2520 = vmatprep.subr.mxu0 0.0
        %2521 = vmatpush1.msra.mxu0 0.0
        %2522 = vmatprep.subr.mxu0 0.0
        %2523 = vmatpush1.msra.mxu0 0.0
        %2524 = vmatprep.subr.mxu0 0.0
        %2525 = vmatpush1.msra.mxu0 0.0
        %2526 = vmatprep.subr.mxu0 0.0
        %2527 = vmatpush1.msra.mxu0 0.0
        %2528 = vmatprep.subr.mxu0 0.0
        %2529 = vmatpush1.msra.mxu0 0.0
        %2530 = vmatprep.subr.mxu0 0.0
        %2531 = vmatpush1.msra.mxu0 0.0
        %2532 = vmatprep.subr.mxu0 0.0
        %2533 = vmatpush1.msra.mxu0 0.0
        %2534 = vmatprep.subr.mxu0 0.0
        %2535 = vmatpush1.msra.mxu0 0.0
        %2536 = vmatprep.subr.mxu0 0.0
        %2537 = vmatpush1.msra.mxu0 0.0
        %2538 = vmatprep.subr.mxu0 0.0
        %2539 = vmatpush1.msra.mxu0 0.0
        %2540 = vmatprep.subr.mxu0 0.0
        %2541 = vmatpush1.msra.mxu0 0.0
        %2542 = vmatprep.subr.mxu0 0.0
        %2543 = vmatpush1.msra.mxu0 0.0
        %2544 = vmatprep.subr.mxu0 0.0
        %2545 = vmatpush1.msra.mxu0 0.0
        %2546 = vmatprep.subr.mxu0 0.0
        %2547 = vmatpush1.msra.mxu0 0.0
        %2548 = vmatprep.subr.mxu0 0.0
        %2549 = vmatpush1.msra.mxu0 0.0
        %2550 = vmatprep.subr.mxu0 0.0
        %2551 = vmatpush1.msra.mxu0 0.0
        %2552 = vmatprep.subr.mxu0 0.0
        %2553 = vmatpush1.msra.mxu0 0.0
        %2554 = vmatprep.subr.mxu0 0.0
        %2555 = vmatpush1.msra.mxu0 0.0
        %2556 = vmatprep.subr.mxu0 0.0
        %2557 = vmatpush1.msra.mxu0 0.0
        %2558 = vmatprep.subr.mxu0 0.0
        %2559 = vmatpush1.msra.mxu0 0.0
        %2560 = vmatprep.mubr.f32.mxu0 0.0
        %2561 = vmatmul.mubr.f32.gmra.mrb[0].mxu0 %v2423
        %v2562 = vpop.f32.mrb[0].mxu0
        %v2563 = vadd.f32 0.0, %v2562
        %v2564 = vpop.f32.mrb[0].mxu0
        %v2565 = vadd.f32 0.0, %v2564
        %2566 = vdwg.mxu0
        %2567 = vmatprep.subr.mxu0 %v1794
        %2568 = vmatpush1.msra.mxu0 %v1793
        %2569 = vmatprep.subr.mxu0 %v1823
        %2570 = vmatpush1.msra.mxu0 %v1820
        %2571 = vmatprep.subr.mxu0 0.0
        %2572 = vmatpush1.msra.mxu0 0.0
        %2573 = vmatprep.subr.mxu0 0.0
        %2574 = vmatpush1.msra.mxu0 0.0
        %2575 = vmatprep.subr.mxu0 0.0
        %2576 = vmatpush1.msra.mxu0 0.0
        %2577 = vmatprep.subr.mxu0 0.0
        %2578 = vmatpush1.msra.mxu0 0.0
        %2579 = vmatprep.subr.mxu0 0.0
        %2580 = vmatpush1.msra.mxu0 0.0
        %2581 = vmatprep.subr.mxu0 0.0
        %2582 = vmatpush1.msra.mxu0 0.0
        %2583 = vmatprep.subr.mxu0 0.0
        %2584 = vmatpush1.msra.mxu0 0.0
        %2585 = vmatprep.subr.mxu0 0.0
        %2586 = vmatpush1.msra.mxu0 0.0
        %2587 = vmatprep.subr.mxu0 0.0
        %2588 = vmatpush1.msra.mxu0 0.0
        %2589 = vmatprep.subr.mxu0 0.0
        %2590 = vmatpush1.msra.mxu0 0.0
        %2591 = vmatprep.subr.mxu0 0.0
        %2592 = vmatpush1.msra.mxu0 0.0
        %2593 = vmatprep.subr.mxu0 0.0
        %2594 = vmatpush1.msra.mxu0 0.0
        %2595 = vmatprep.subr.mxu0 0.0
        %2596 = vmatpush1.msra.mxu0 0.0
        %2597 = vmatprep.subr.mxu0 0.0
        %2598 = vmatpush1.msra.mxu0 0.0
        %2599 = vmatprep.subr.mxu0 0.0
        %2600 = vmatpush1.msra.mxu0 0.0
        %2601 = vmatprep.subr.mxu0 0.0
        %2602 = vmatpush1.msra.mxu0 0.0
        %2603 = vmatprep.subr.mxu0 0.0
        %2604 = vmatpush1.msra.mxu0 0.0
        %2605 = vmatprep.subr.mxu0 0.0
        %2606 = vmatpush1.msra.mxu0 0.0
        %2607 = vmatprep.subr.mxu0 0.0
        %2608 = vmatpush1.msra.mxu0 0.0
        %2609 = vmatprep.subr.mxu0 0.0
        %2610 = vmatpush1.msra.mxu0 0.0
        %2611 = vmatprep.subr.mxu0 0.0
        %2612 = vmatpush1.msra.mxu0 0.0
        %2613 = vmatprep.subr.mxu0 0.0
        %2614 = vmatpush1.msra.mxu0 0.0
        %2615 = vmatprep.subr.mxu0 0.0
        %2616 = vmatpush1.msra.mxu0 0.0
        %2617 = vmatprep.subr.mxu0 0.0
        %2618 = vmatpush1.msra.mxu0 0.0
        %2619 = vmatprep.subr.mxu0 0.0
        %2620 = vmatpush1.msra.mxu0 0.0
        %2621 = vmatprep.subr.mxu0 0.0
        %2622 = vmatpush1.msra.mxu0 0.0
        %2623 = vmatprep.subr.mxu0 0.0
        %2624 = vmatpush1.msra.mxu0 0.0
        %2625 = vmatprep.subr.mxu0 0.0
        %2626 = vmatpush1.msra.mxu0 0.0
        %2627 = vmatprep.subr.mxu0 0.0
        %2628 = vmatpush1.msra.mxu0 0.0
        %2629 = vmatprep.subr.mxu0 0.0
        %2630 = vmatpush1.msra.mxu0 0.0
        %2631 = vmatprep.mubr.f32.mxu0 0.0
        %2632 = vmatmul.mubr.f32.gmra.mrb[0].mxu0 %v2423
        %v2633 = vpop.f32.mrb[0].mxu0
        %v2634 = vadd.f32 0.0, %v2633
        %v2635 = vpop.f32.mrb[0].mxu0
        %v2636 = vadd.f32 0.0, %v2635
        %2637 = vdwg.mxu0
        %2638 = vmatprep.subr.mxu0 0.0
        %2639 = vmatpush1.msra.mxu0 %v1795
        %2640 = vmatprep.subr.mxu0 0.0
        %2641 = vmatpush1.msra.mxu0 %v1826
        %2642 = vmatprep.subr.mxu0 0.0
        %2643 = vmatpush1.msra.mxu0 0.0
        %2644 = vmatprep.subr.mxu0 0.0
        %2645 = vmatpush1.msra.mxu0 0.0
        %2646 = vmatprep.subr.mxu0 0.0
        %2647 = vmatpush1.msra.mxu0 0.0
        %2648 = vmatprep.subr.mxu0 0.0
        %2649 = vmatpush1.msra.mxu0 0.0
        %2650 = vmatprep.subr.mxu0 0.0
        %2651 = vmatpush1.msra.mxu0 0.0
        %2652 = vmatprep.subr.mxu0 0.0
        %2653 = vmatpush1.msra.mxu0 0.0
        %2654 = vmatprep.subr.mxu0 0.0
        %2655 = vmatpush1.msra.mxu0 0.0
        %2656 = vmatprep.subr.mxu0 0.0
        %2657 = vmatpush1.msra.mxu0 0.0
        %2658 = vmatprep.subr.mxu0 0.0
        %2659 = vmatpush1.msra.mxu0 0.0
        %2660 = vmatprep.subr.mxu0 0.0
        %2661 = vmatpush1.msra.mxu0 0.0
        %2662 = vmatprep.subr.mxu0 0.0
        %2663 = vmatpush1.msra.mxu0 0.0
        %2664 = vmatprep.subr.mxu0 0.0
        %2665 = vmatpush1.msra.mxu0 0.0
        %2666 = vmatprep.subr.mxu0 0.0
        %2667 = vmatpush1.msra.mxu0 0.0
        %2668 = vmatprep.subr.mxu0 0.0
        %2669 = vmatpush1.msra.mxu0 0.0
        %2670 = vmatprep.subr.mxu0 0.0
        %2671 = vmatpush1.msra.mxu0 0.0
        %2672 = vmatprep.subr.mxu0 0.0
        %2673 = vmatpush1.msra.mxu0 0.0
        %2674 = vmatprep.subr.mxu0 0.0
        %2675 = vmatpush1.msra.mxu0 0.0
        %2676 = vmatprep.subr.mxu0 0.0
        %2677 = vmatpush1.msra.mxu0 0.0
        %2678 = vmatprep.subr.mxu0 0.0
        %2679 = vmatpush1.msra.mxu0 0.0
        %2680 = vmatprep.subr.mxu0 0.0
        %2681 = vmatpush1.msra.mxu0 0.0
        %2682 = vmatprep.subr.mxu0 0.0
        %2683 = vmatpush1.msra.mxu0 0.0
        %2684 = vmatprep.subr.mxu0 0.0
        %2685 = vmatpush1.msra.mxu0 0.0
        %2686 = vmatprep.subr.mxu0 0.0
        %2687 = vmatpush1.msra.mxu0 0.0
        %2688 = vmatprep.subr.mxu0 0.0
        %2689 = vmatpush1.msra.mxu0 0.0
        %2690 = vmatprep.subr.mxu0 0.0
        %2691 = vmatpush1.msra.mxu0 0.0
        %2692 = vmatprep.subr.mxu0 0.0
        %2693 = vmatpush1.msra.mxu0 0.0
        %2694 = vmatprep.subr.mxu0 0.0
        %2695 = vmatpush1.msra.mxu0 0.0
        %2696 = vmatprep.subr.mxu0 0.0
        %2697 = vmatpush1.msra.mxu0 0.0
        %2698 = vmatprep.subr.mxu0 0.0
        %2699 = vmatpush1.msra.mxu0 0.0
        %2700 = vmatprep.subr.mxu0 0.0
        %2701 = vmatpush1.msra.mxu0 0.0
        %2702 = vmatprep.mubr.f32.mxu0 0.0
        %2703 = vmatmul.mubr.f32.gmra.mrb[0].mxu0 %v2423
        %v2704 = vpop.f32.mrb[0].mxu0
        %v2705 = vadd.f32 0.0, %v2704
        %v2706 = vpop.f32.mrb[0].mxu0
        %2707 = vdwg.mxu0
        %s2708 = scalar_lea.vmem [#allocation7], 2496
        %v2709 = vld [vmem:[%s2708] sm:$0xff]
        %v2710 = vld [vmem:[%s2708 + $0x8] sm:$0xff]
        %v2711 = vld [vmem:[%s2708 + $0x10] sm:$0xff]
        %v2712 = vld [vmem:[%s2708 + $0x18] sm:$0xff]
        %v2713 = vld [vmem:[%s2708 + $0x20] sm:$0xff]
        %v2714 = vld [vmem:[%s2708 + $0x28] sm:$0xff]
        %v2715 = vld [vmem:[%s2708 + $0x30] sm:$0xff]
        %v2716 = vld [vmem:[%s2708 + $0x38] sm:$0xff]
        %v2717 = vld [vmem:[%s2708 + $0x40] sm:$0xff]
        %v2718 = vld [vmem:[%s2708 + $0x48] sm:$0xff]
        %v2719 = vld [vmem:[%s2708 + $0x50] sm:$0xff]
        %v2720 = vld [vmem:[%s2708 + $0x58] sm:$0xff]
        %v2721 = vld [vmem:[%s2708 + $0x60] sm:$0xff]
        %v2722 = vld [vmem:[%s2708 + $0x68] sm:$0xff]
        %v2723 = vld [vmem:[%s2708 + $0x70] sm:$0xff]
        %v2724 = vld [vmem:[%s2708 + $0x78] sm:$0xff]
        %v2725 = vld [vmem:[%s2708 + $0x80] sm:$0xff]
        %v2726 = vld [vmem:[%s2708 + $0x88] sm:$0xff]
        %v2727 = vld [vmem:[%s2708 + $0x90] sm:$0xff]
        %v2728 = vld [vmem:[%s2708 + $0x98] sm:$0xff]
        %v2729 = vld [vmem:[%s2708 + $0xa0] sm:$0xff]
        %v2730 = vld [vmem:[%s2708 + $0xa8] sm:$0xff]
        %v2731 = vld [vmem:[%s2708 + $0xb0] sm:$0xff]
        %v2732 = vld [vmem:[%s2708 + $0xb8] sm:$0xff]
        %v2733 = vld [vmem:[%s2708 + $0xc0] sm:$0xff]
        %v2734 = vld [vmem:[%s2708 + $0xc8] sm:$0xff]
        %v2735 = vld [vmem:[%s2708 + $0xd0] sm:$0xff]
        %v2736 = vld [vmem:[%s2708 + $0xd8] sm:$0xff]
        %v2737 = vld [vmem:[%s2708 + $0xe0] sm:$0xff]
        %v2738 = vld [vmem:[%s2708 + $0xe8] sm:$0xff]
        %v2739 = vld [vmem:[%s2708 + $0xf0] sm:$0xff]
        %v2740 = vld [vmem:[%s2708 + $0xf8] sm:$0xff]
        %v2741 = vld [vmem:[%s2708 + $0x100] sm:$0xff]
        %v2742 = vld [vmem:[%s2708 + $0x108] sm:$0xff]
        %v2743 = vld [vmem:[%s2708 + $0x110] sm:$0xff]
        %v2744 = vld [vmem:[%s2708 + $0x118] sm:$0xff]
        %v2745 = vld [vmem:[%s2708 + $0x120] sm:$0xff]
        %v2746 = vld [vmem:[%s2708 + $0x128] sm:$0xff]
        %v2747 = vld [vmem:[%s2708 + $0x130] sm:$0xff]
        %v2748 = vld [vmem:[%s2708 + $0x138] sm:$0xff]
        %v2749 = vld [vmem:[%s2708 + $0x140] sm:$0xff]
        %v2750 = vld [vmem:[%s2708 + $0x148] sm:$0xff]
        %v2751 = vld [vmem:[%s2708 + $0x150] sm:$0xff]
        %v2752 = vld [vmem:[%s2708 + $0x158] sm:$0xff]
        %v2753 = vld [vmem:[%s2708 + $0x160] sm:$0xff]
        %v2754 = vld [vmem:[%s2708 + $0x168] sm:$0xff]
        %v2755 = vld [vmem:[%s2708 + $0x170] sm:$0xff]
        %v2756 = vld [vmem:[%s2708 + $0x178] sm:$0xff]
        %v2757 = vld [vmem:[%s2708 + $0x180] sm:$0xff]
        %v2758 = vld [vmem:[%s2708 + $0x188] sm:$0xff]
        %v2759 = vld [vmem:[%s2708 + $0x190] sm:$0xff]
        %v2760 = vld [vmem:[%s2708 + $0x198] sm:$0xff]
        %v2761 = vld [vmem:[%s2708 + $0x1a0] sm:$0xff]
        %v2762 = vld [vmem:[%s2708 + $0x1a8] sm:$0xff]
        %v2763 = vld [vmem:[%s2708 + $0x1b0] sm:$0xff]
        %v2764 = vld [vmem:[%s2708 + $0x1b8] sm:$0xff]
        %v2765 = vld [vmem:[%s2708 + $0x1c0] sm:$0xff]
        %v2766 = vld [vmem:[%s2708 + $0x1c8] sm:$0xff]
        %v2767 = vld [vmem:[%s2708 + $0x1d0] sm:$0xff]
        %v2768 = vld [vmem:[%s2708 + $0x1d8] sm:$0xff]
        %v2769 = vld [vmem:[%s2708 + $0x1e0] sm:$0xff]
        %v2770 = vld [vmem:[%s2708 + $0x1e8] sm:$0xff]
        %v2771 = vld [vmem:[%s2708 + $0x1f0] sm:$0xff]
        %v2772 = vld [vmem:[%s2708 + $0x1f8] sm:$0xff]
        %v2773 = vld [vmem:[%s2708 + $0x200] sm:$0xff]
        %v2774 = vld [vmem:[%s2708 + $0x208] sm:$0xff]
        %v2775 = vld [vmem:[%s2708 + $0x210] sm:$0xff]
        %v2776 = vld [vmem:[%s2708 + $0x218] sm:$0xff]
        %v2777 = vld [vmem:[%s2708 + $0x220] sm:$0xff]
        %v2778 = vld [vmem:[%s2708 + $0x228] sm:$0xff]
        %v2779 = vld [vmem:[%s2708 + $0x230] sm:$0xff]
        %v2780 = vld [vmem:[%s2708 + $0x238] sm:$0xff]
        %v2781 = vld [vmem:[%s2708 + $0x240] sm:$0xff]
        %v2782 = vld [vmem:[%s2708 + $0x248] sm:$0xff]
        %v2783 = vld [vmem:[%s2708 + $0x250] sm:$0xff]
        %v2784 = vld [vmem:[%s2708 + $0x258] sm:$0xff]
        %v2785 = vld [vmem:[%s2708 + $0x260] sm:$0xff]
        %v2786 = vld [vmem:[%s2708 + $0x268] sm:$0xff]
        %v2787 = vld [vmem:[%s2708 + $0x270] sm:$0xff]
        %v2788 = vld [vmem:[%s2708 + $0x278] sm:$0xff]
        %v2789 = vld [vmem:[%s2708 + $0x280] sm:$0xff]
        %v2790 = vld [vmem:[%s2708 + $0x288] sm:$0xff]
        %v2791 = vld [vmem:[%s2708 + $0x290] sm:$0xff]
        %v2792 = vld [vmem:[%s2708 + $0x298] sm:$0xff]
        %v2793 = vld [vmem:[%s2708 + $0x2a0] sm:$0xff]
        %v2794 = vld [vmem:[%s2708 + $0x2a8] sm:$0xff]
        %v2795 = vld [vmem:[%s2708 + $0x2b0] sm:$0xff]
        %v2796 = vld [vmem:[%s2708 + $0x2b8] sm:$0xff]
        %v2797 = vld [vmem:[%s2708 + $0x2c0] sm:$0xff]
        %v2798 = vld [vmem:[%s2708 + $0x2c8] sm:$0xff]
        %v2799 = vld [vmem:[%s2708 + $0x2d0] sm:$0xff]
        %v2800 = vld [vmem:[%s2708 + $0x2d8] sm:$0xff]
        %v2801 = vld [vmem:[%s2708 + $0x2e0] sm:$0xff]
        %v2802 = vld [vmem:[%s2708 + $0x2e8] sm:$0xff]
        %v2803 = vld [vmem:[%s2708 + $0x2f0] sm:$0xff]
        %v2804 = vld [vmem:[%s2708 + $0x2f8] sm:$0xff]
        %v2805 = vld [vmem:[%s2708 + $0x300] sm:$0xff]
        %v2806 = vld [vmem:[%s2708 + $0x308] sm:$0xff]
        %v2807 = vld [vmem:[%s2708 + $0x310] sm:$0xff]
        %v2808 = vld [vmem:[%s2708 + $0x318] sm:$0xff]
        %v2809 = vld [vmem:[%s2708 + $0x320] sm:$0xff]
        %v2810 = vld [vmem:[%s2708 + $0x328] sm:$0xff]
        %v2811 = vld [vmem:[%s2708 + $0x330] sm:$0xff]
        %v2812 = vld [vmem:[%s2708 + $0x338] sm:$0xff]
        %v2813 = vld [vmem:[%s2708 + $0x340] sm:$0xff]
        %v2814 = vld [vmem:[%s2708 + $0x348] sm:$0xff]
        %v2815 = vld [vmem:[%s2708 + $0x350] sm:$0xff]
        %v2816 = vld [vmem:[%s2708 + $0x358] sm:$0xff]
        %v2817 = vld [vmem:[%s2708 + $0x360] sm:$0xff]
        %v2818 = vld [vmem:[%s2708 + $0x368] sm:$0xff]
        %v2819 = vld [vmem:[%s2708 + $0x370] sm:$0xff]
        %v2820 = vld [vmem:[%s2708 + $0x378] sm:$0xff]
        %v2821 = vld [vmem:[%s2708 + $0x380] sm:$0xff]
        %v2822 = vld [vmem:[%s2708 + $0x388] sm:$0xff]
        %v2823 = vld [vmem:[%s2708 + $0x390] sm:$0xff]
        %v2824 = vld [vmem:[%s2708 + $0x398] sm:$0xff]
        %v2825 = vld [vmem:[%s2708 + $0x3a0] sm:$0xff]
        %v2826 = vld [vmem:[%s2708 + $0x3a8] sm:$0xff]
        %v2827 = vld [vmem:[%s2708 + $0x3b0] sm:$0xff]
        %v2828 = vld [vmem:[%s2708 + $0x3b8] sm:$0xff]
        %v2829 = vld [vmem:[%s2708 + $0x3c0] sm:$0xff]
        %v2830 = vld [vmem:[%s2708 + $0x3c8] sm:$0xff]
        %v2831 = vld [vmem:[%s2708 + $0x3d0] sm:$0xff]
        %v2832 = vld [vmem:[%s2708 + $0x3d8] sm:$0xff]
        %v2833 = vld [vmem:[%s2708 + $0x3e0] sm:$0xff]
        %v2834 = vld [vmem:[%s2708 + $0x3e8] sm:$0xff]
        %v2835 = vld [vmem:[%s2708 + $0x3f0] sm:$0xff]
        %v2836 = vld [vmem:[%s2708 + $0x3f8] sm:$0xff]
        %v2837 = vld [vmem:[%s2708 + $0x400] sm:$0xff]
        %v2838 = vld [vmem:[%s2708 + $0x408] sm:$0xff]
        %v2839 = vld [vmem:[%s2708 + $0x410] sm:$0xff]
        %v2840 = vld [vmem:[%s2708 + $0x418] sm:$0xff]
        %v2841 = vld [vmem:[%s2708 + $0x420] sm:$0xff]
        %v2842 = vld [vmem:[%s2708 + $0x428] sm:$0xff]
        %v2843 = vld [vmem:[%s2708 + $0x430] sm:$0xff]
        %v2844 = vld [vmem:[%s2708 + $0x438] sm:$0xff]
        %v2845 = vld [vmem:[%s2708 + $0x440] sm:$0xff]
        %v2846 = vld [vmem:[%s2708 + $0x448] sm:$0xff]
        %v2847 = vld [vmem:[%s2708 + $0x450] sm:$0xff]
        %v2848 = vld [vmem:[%s2708 + $0x458] sm:$0xff]
        %v2849 = vld [vmem:[%s2708 + $0x460] sm:$0xff]
        %v2850 = vld [vmem:[%s2708 + $0x468] sm:$0xff]
        %v2851 = vld [vmem:[%s2708 + $0x470] sm:$0xff]
        %v2852 = vld [vmem:[%s2708 + $0x478] sm:$0xff]
        %v2853 = vld [vmem:[%s2708 + $0x480] sm:$0xff]
        %v2854 = vld [vmem:[%s2708 + $0x488] sm:$0xff]
        %v2855 = vld [vmem:[%s2708 + $0x490] sm:$0xff]
        %v2856 = vld [vmem:[%s2708 + $0x498] sm:$0xff]
        %v2857 = vld [vmem:[%s2708 + $0x4a0] sm:$0xff]
        %v2858 = vld [vmem:[%s2708 + $0x4a8] sm:$0xff]
        %v2859 = vld [vmem:[%s2708 + $0x4b0] sm:$0xff]
        %v2860 = vld [vmem:[%s2708 + $0x4b8] sm:$0xff]
        %v2861 = vld [vmem:[%s2708 + $0x4c0] sm:$0xff]
        %v2862 = vld [vmem:[%s2708 + $0x4c8] sm:$0xff]
        %v2863 = vld [vmem:[%s2708 + $0x4d0] sm:$0xff]
        %v2864 = vld [vmem:[%s2708 + $0x4d8] sm:$0xff]
        %v2865 = vld [vmem:[%s2708 + $0x4e0] sm:$0xff]
        %v2866 = vld [vmem:[%s2708 + $0x4e8] sm:$0xff]
        %v2867 = vld [vmem:[%s2708 + $0x4f0] sm:$0xff]
        %v2868 = vld [vmem:[%s2708 + $0x4f8] sm:$0xff]
        %v2869 = vld [vmem:[%s2708 + $0x500] sm:$0xff]
        %v2870 = vld [vmem:[%s2708 + $0x508] sm:$0xff]
        %v2871 = vld [vmem:[%s2708 + $0x510] sm:$0xff]
        %v2872 = vld [vmem:[%s2708 + $0x518] sm:$0xff]
        %v2873 = vld [vmem:[%s2708 + $0x520] sm:$0xff]
        %v2874 = vld [vmem:[%s2708 + $0x528] sm:$0xff]
        %v2875 = vld [vmem:[%s2708 + $0x530] sm:$0xff]
        %v2876 = vld [vmem:[%s2708 + $0x538] sm:$0xff]
        %v2877 = vld [vmem:[%s2708 + $0x540] sm:$0xff]
        %v2878 = vld [vmem:[%s2708 + $0x548] sm:$0xff]
        %v2879 = vld [vmem:[%s2708 + $0x550] sm:$0xff]
        %v2880 = vld [vmem:[%s2708 + $0x558] sm:$0xff]
        %v2881 = vld [vmem:[%s2708 + $0x560] sm:$0xff]
        %v2882 = vld [vmem:[%s2708 + $0x568] sm:$0xff]
        %v2883 = vld [vmem:[%s2708 + $0x570] sm:$0xff]
        %v2884 = vld [vmem:[%s2708 + $0x578] sm:$0xff]
        %v2885 = vld [vmem:[%s2708 + $0x580] sm:$0xff]
        %v2886 = vld [vmem:[%s2708 + $0x588] sm:$0xff]
        %v2887 = vld [vmem:[%s2708 + $0x590] sm:$0xff]
        %v2888 = vld [vmem:[%s2708 + $0x598] sm:$0xff]
        %v2889 = vld [vmem:[%s2708 + $0x5a0] sm:$0xff]
        %v2890 = vld [vmem:[%s2708 + $0x5a8] sm:$0xff]
        %v2891 = vld [vmem:[%s2708 + $0x5b0] sm:$0xff]
        %v2892 = vld [vmem:[%s2708 + $0x5b8] sm:$0xff]
        %v2893 = vld [vmem:[%s2708 + $0x5c0] sm:$0xff]
        %v2894 = vld [vmem:[%s2708 + $0x5c8] sm:$0xff]
        %v2895 = vld [vmem:[%s2708 + $0x5d0] sm:$0xff]
        %v2896 = vld [vmem:[%s2708 + $0x5d8] sm:$0xff]
        %v2897 = vld [vmem:[%s2708 + $0x5e0] sm:$0xff]
        %v2898 = vld [vmem:[%s2708 + $0x5e8] sm:$0xff]
        %v2899 = vld [vmem:[%s2708 + $0x5f0] sm:$0xff]
        %v2900 = vld [vmem:[%s2708 + $0x5f8] sm:$0xff]
        %v2901 = vld [vmem:[%s2708 + $0x600] sm:$0xff]
        %v2902 = vld [vmem:[%s2708 + $0x608] sm:$0xff]
        %v2903 = vld [vmem:[%s2708 + $0x610] sm:$0xff]
        %v2904 = vld [vmem:[%s2708 + $0x618] sm:$0xff]
        %v2905 = vld [vmem:[%s2708 + $0x620] sm:$0xff]
        %v2906 = vld [vmem:[%s2708 + $0x628] sm:$0xff]
        %v2907 = vld [vmem:[%s2708 + $0x630] sm:$0xff]
        %v2908 = vld [vmem:[%s2708 + $0x638] sm:$0xff]
        %v2909 = vld [vmem:[%s2708 + $0x640] sm:$0xff]
        %v2910 = vld [vmem:[%s2708 + $0x648] sm:$0xff]
        %v2911 = vld [vmem:[%s2708 + $0x650] sm:$0xff]
        %v2912 = vld [vmem:[%s2708 + $0x658] sm:$0xff]
        %v2913 = vld [vmem:[%s2708 + $0x660] sm:$0xff]
        %v2914 = vld [vmem:[%s2708 + $0x668] sm:$0xff]
        %v2915 = vld [vmem:[%s2708 + $0x670] sm:$0xff]
        %v2916 = vld [vmem:[%s2708 + $0x678] sm:$0xff]
        %v2917 = vld [vmem:[%s2708 + $0x680] sm:$0xff]
        %v2918 = vld [vmem:[%s2708 + $0x688] sm:$0xff]
        %v2919 = vld [vmem:[%s2708 + $0x690] sm:$0xff]
        %v2920 = vld [vmem:[%s2708 + $0x698] sm:$0xff]
        %v2921 = vld [vmem:[%s2708 + $0x6a0] sm:$0xff]
        %v2922 = vld [vmem:[%s2708 + $0x6a8] sm:$0xff]
        %v2923 = vld [vmem:[%s2708 + $0x6b0] sm:$0xff]
        %v2924 = vld [vmem:[%s2708 + $0x6b8] sm:$0xff]
        %v2925 = vld [vmem:[%s2708 + $0x6c0] sm:$0xff]
        %v2926 = vld [vmem:[%s2708 + $0x6c8] sm:$0xff]
        %v2927 = vld [vmem:[%s2708 + $0x6d0] sm:$0xff]
        %v2928 = vld [vmem:[%s2708 + $0x6d8] sm:$0xff]
        %v2929 = vld [vmem:[%s2708 + $0x6e0] sm:$0xff]
        %v2930 = vld [vmem:[%s2708 + $0x6e8] sm:$0xff]
        %v2931 = vld [vmem:[%s2708 + $0x6f0] sm:$0xff]
        %v2932 = vld [vmem:[%s2708 + $0x6f8] sm:$0xff]
        %v2933 = vld [vmem:[%s2708 + $0x700] sm:$0xff]
        %v2934 = vld [vmem:[%s2708 + $0x708] sm:$0xff]
        %v2935 = vld [vmem:[%s2708 + $0x710] sm:$0xff]
        %v2936 = vld [vmem:[%s2708 + $0x718] sm:$0xff]
        %v2937 = vld [vmem:[%s2708 + $0x720] sm:$0xff]
        %v2938 = vld [vmem:[%s2708 + $0x728] sm:$0xff]
        %v2939 = vld [vmem:[%s2708 + $0x730] sm:$0xff]
        %v2940 = vld [vmem:[%s2708 + $0x738] sm:$0xff]
        %v2941 = vld [vmem:[%s2708 + $0x740] sm:$0xff]
        %v2942 = vld [vmem:[%s2708 + $0x748] sm:$0xff]
        %v2943 = vld [vmem:[%s2708 + $0x750] sm:$0xff]
        %v2944 = vld [vmem:[%s2708 + $0x758] sm:$0xff]
        %v2945 = vld [vmem:[%s2708 + $0x760] sm:$0xff]
        %v2946 = vld [vmem:[%s2708 + $0x768] sm:$0xff]
        %v2947 = vld [vmem:[%s2708 + $0x770] sm:$0xff]
        %v2948 = vld [vmem:[%s2708 + $0x778] sm:$0xff]
        %v2949 = vld [vmem:[%s2708 + $0x780] sm:$0xff]
        %v2950 = vld [vmem:[%s2708 + $0x788] sm:$0xff]
        %v2951 = vld [vmem:[%s2708 + $0x790] sm:$0xff]
        %v2952 = vld [vmem:[%s2708 + $0x798] sm:$0xff]
        %v2953 = vld [vmem:[%s2708 + $0x7a0] sm:$0xff]
        %v2954 = vld [vmem:[%s2708 + $0x7a8] sm:$0xff]
        %v2955 = vld [vmem:[%s2708 + $0x7b0] sm:$0xff]
        %v2956 = vld [vmem:[%s2708 + $0x7b8] sm:$0xff]
        %v2957 = vld [vmem:[%s2708 + $0x7c0] sm:$0xff]
        %v2958 = vld [vmem:[%s2708 + $0x7c8] sm:$0xff]
        %v2959 = vld [vmem:[%s2708 + $0x7d0] sm:$0xff]
        %v2960 = vld [vmem:[%s2708 + $0x7d8] sm:$0xff]
        %v2961 = vld [vmem:[%s2708 + $0x7e0] sm:$0xff]
        %v2962 = vld [vmem:[%s2708 + $0x7e8] sm:$0xff]
        %v2963 = vld [vmem:[%s2708 + $0x7f0] sm:$0xff]
        %v2964 = vld [vmem:[%s2708 + $0x7f8] sm:$0xff]
        %v2965 = vld [vmem:[%s2708 + $0x800] sm:$0xff]
        %v2966 = vld [vmem:[%s2708 + $0x808] sm:$0xff]
        %v2967 = vld [vmem:[%s2708 + $0x810] sm:$0xff]
        %v2968 = vld [vmem:[%s2708 + $0x818] sm:$0xff]
        %v2969 = vld [vmem:[%s2708 + $0x820] sm:$0xff]
        %v2970 = vld [vmem:[%s2708 + $0x828] sm:$0xff]
        %v2971 = vld [vmem:[%s2708 + $0x830] sm:$0xff]
        %v2972 = vld [vmem:[%s2708 + $0x838] sm:$0xff]
        %v2973 = vld [vmem:[%s2708 + $0x840] sm:$0xff]
        %v2974 = vld [vmem:[%s2708 + $0x848] sm:$0xff]
        %v2975 = vld [vmem:[%s2708 + $0x850] sm:$0xff]
        %v2976 = vld [vmem:[%s2708 + $0x858] sm:$0xff]
        %v2977 = vld [vmem:[%s2708 + $0x860] sm:$0xff]
        %v2978 = vld [vmem:[%s2708 + $0x868] sm:$0xff]
        %v2979 = vld [vmem:[%s2708 + $0x870] sm:$0xff]
        %v2980 = vld [vmem:[%s2708 + $0x878] sm:$0xff]
        %v2981 = vld [vmem:[%s2708 + $0x880] sm:$0xff]
        %v2982 = vld [vmem:[%s2708 + $0x888] sm:$0xff]
        %v2983 = vld [vmem:[%s2708 + $0x890] sm:$0xff]
        %v2984 = vld [vmem:[%s2708 + $0x898] sm:$0xff]
        %v2985 = vld [vmem:[%s2708 + $0x8a0] sm:$0xff]
        %v2986 = vld [vmem:[%s2708 + $0x8a8] sm:$0xff]
        %v2987 = vld [vmem:[%s2708 + $0x8b0] sm:$0xff]
        %v2988 = vld [vmem:[%s2708 + $0x8b8] sm:$0xff]
        %v2989 = vld [vmem:[%s2708 + $0x8c0] sm:$0xff]
        %v2990 = vld [vmem:[%s2708 + $0x8c8] sm:$0xff]
        %v2991 = vld [vmem:[%s2708 + $0x8d0] sm:$0xff]
        %v2992 = vld [vmem:[%s2708 + $0x8d8] sm:$0xff]
        %v2993 = vld [vmem:[%s2708 + $0x8e0] sm:$0xff]
        %v2994 = vld [vmem:[%s2708 + $0x8e8] sm:$0xff]
        %v2995 = vld [vmem:[%s2708 + $0x8f0] sm:$0xff]
        %v2996 = vld [vmem:[%s2708 + $0x8f8] sm:$0xff]
        %v2997 = vld [vmem:[%s2708 + $0x900] sm:$0xff]
        %v2998 = vld [vmem:[%s2708 + $0x908] sm:$0xff]
        %v2999 = vld [vmem:[%s2708 + $0x910] sm:$0xff]
        %v3000 = vld [vmem:[%s2708 + $0x918] sm:$0xff]
        %v3001 = vld [vmem:[%s2708 + $0x920] sm:$0xff]
        %v3002 = vld [vmem:[%s2708 + $0x928] sm:$0xff]
        %v3003 = vld [vmem:[%s2708 + $0x930] sm:$0xff]
        %v3004 = vld [vmem:[%s2708 + $0x938] sm:$0xff]
        %v3005 = vld [vmem:[%s2708 + $0x940] sm:$0xff]
        %v3006 = vld [vmem:[%s2708 + $0x948] sm:$0xff]
        %v3007 = vld [vmem:[%s2708 + $0x950] sm:$0xff]
        %v3008 = vld [vmem:[%s2708 + $0x958] sm:$0xff]
        %v3009 = vld [vmem:[%s2708 + $0x960] sm:$0xff]
        %v3010 = vld [vmem:[%s2708 + $0x968] sm:$0xff]
        %v3011 = vld [vmem:[%s2708 + $0x970] sm:$0xff]
        %v3012 = vld [vmem:[%s2708 + $0x978] sm:$0xff]
        %v3013 = vld [vmem:[%s2708 + $0x980] sm:$0xff]
        %v3014 = vld [vmem:[%s2708 + $0x988] sm:$0xff]
        %v3015 = vld [vmem:[%s2708 + $0x990] sm:$0xff]
        %v3016 = vld [vmem:[%s2708 + $0x998] sm:$0xff]
        %v3017 = vld [vmem:[%s2708 + $0x9a0] sm:$0xff]
        %v3018 = vld [vmem:[%s2708 + $0x9a8] sm:$0xff]
        %v3019 = vld [vmem:[%s2708 + $0x9b0] sm:$0xff]
        %v3020 = vld [vmem:[%s2708 + $0x9b8] sm:$0xff]
        %vm3021 = vcmask 523264
        %v3023 = vsel %vm3021, %v2705, 0
        %3025 = vmatprep.subr.mxu0 %v2710
        %3026 = vmatpush1.msra.mxu0 %v2709
        %3027 = vmatprep.subr.mxu0 %v2713
        %3028 = vmatpush1.msra.mxu0 %v2712
        %3029 = vmatprep.subr.mxu0 %v2716
        %3030 = vmatpush1.msra.mxu0 %v2715
        %3031 = vmatprep.subr.mxu0 %v2719
        %3032 = vmatpush1.msra.mxu0 %v2718
        %3033 = vmatprep.subr.mxu0 %v2722
        %3034 = vmatpush1.msra.mxu0 %v2721
        %3035 = vmatprep.subr.mxu0 %v2725
        %3036 = vmatpush1.msra.mxu0 %v2724
        %3037 = vmatprep.subr.mxu0 %v2728
        %3038 = vmatpush1.msra.mxu0 %v2727
        %3039 = vmatprep.subr.mxu0 %v2731
        %3040 = vmatpush1.msra.mxu0 %v2730
        %3041 = vmatprep.subr.mxu0 %v2734
        %3042 = vmatpush1.msra.mxu0 %v2733
        %3043 = vmatprep.subr.mxu0 %v2737
        %3044 = vmatpush1.msra.mxu0 %v2736
        %3045 = vmatprep.subr.mxu0 %v2740
        %3046 = vmatpush1.msra.mxu0 %v2739
        %3047 = vmatprep.subr.mxu0 %v2743
        %3048 = vmatpush1.msra.mxu0 %v2742
        %3049 = vmatprep.subr.mxu0 %v2746
        %3050 = vmatpush1.msra.mxu0 %v2745
        %3051 = vmatprep.subr.mxu0 %v2749
        %3052 = vmatpush1.msra.mxu0 %v2748
        %3053 = vmatprep.subr.mxu0 %v2752
        %3054 = vmatpush1.msra.mxu0 %v2751
        %3055 = vmatprep.subr.mxu0 %v2755
        %3056 = vmatpush1.msra.mxu0 %v2754
        %3057 = vmatprep.subr.mxu0 %v2758
        %3058 = vmatpush1.msra.mxu0 %v2757
        %3059 = vmatprep.subr.mxu0 %v2761
        %3060 = vmatpush1.msra.mxu0 %v2760
        %3061 = vmatprep.subr.mxu0 %v2764
        %3062 = vmatpush1.msra.mxu0 %v2763
        %3063 = vmatprep.subr.mxu0 %v2767
        %3064 = vmatpush1.msra.mxu0 %v2766
        %3065 = vmatprep.subr.mxu0 %v2770
        %3066 = vmatpush1.msra.mxu0 %v2769
        %3067 = vmatprep.subr.mxu0 %v2773
        %3068 = vmatpush1.msra.mxu0 %v2772
        %3069 = vmatprep.subr.mxu0 %v2776
        %3070 = vmatpush1.msra.mxu0 %v2775
        %3071 = vmatprep.subr.mxu0 %v2779
        %3072 = vmatpush1.msra.mxu0 %v2778
        %3073 = vmatprep.subr.mxu0 %v2782
        %3074 = vmatpush1.msra.mxu0 %v2781
        %3075 = vmatprep.subr.mxu0 %v2785
        %3076 = vmatpush1.msra.mxu0 %v2784
        %3077 = vmatprep.subr.mxu0 %v2788
        %3078 = vmatpush1.msra.mxu0 %v2787
        %3079 = vmatprep.subr.mxu0 %v2791
        %3080 = vmatpush1.msra.mxu0 %v2790
        %3081 = vmatprep.subr.mxu0 %v2794
        %3082 = vmatpush1.msra.mxu0 %v2793
        %3083 = vmatprep.subr.mxu0 %v2797
        %3084 = vmatpush1.msra.mxu0 %v2796
        %3085 = vmatprep.subr.mxu0 %v2800
        %3086 = vmatpush1.msra.mxu0 %v2799
        %3087 = vmatprep.subr.mxu0 %v2803
        %3088 = vmatpush1.msra.mxu0 %v2802
        %3089 = vmatprep.mubr.f32.mxu0 %v2494
        %3090 = vmatmul.mubr.f32.gmra.mrb[0].mxu0 %v2492
        %v3091 = vpop.f32.mrb[0].mxu0
        %v3092 = vadd.f32 0.0, %v3091
        %v3093 = vpop.f32.mrb[0].mxu0
        %v3094 = vadd.f32 0.0, %v3093
        %3095 = vdwg.mxu0
        %3096 = vmatprep.subr.mxu0 %v2806
        %3097 = vmatpush1.msra.mxu0 %v2805
        %3098 = vmatprep.subr.mxu0 %v2809
        %3099 = vmatpush1.msra.mxu0 %v2808
        %3100 = vmatprep.subr.mxu0 %v2812
        %3101 = vmatpush1.msra.mxu0 %v2811
        %3102 = vmatprep.subr.mxu0 %v2815
        %3103 = vmatpush1.msra.mxu0 %v2814
        %3104 = vmatprep.subr.mxu0 %v2818
        %3105 = vmatpush1.msra.mxu0 %v2817
        %3106 = vmatprep.subr.mxu0 %v2821
        %3107 = vmatpush1.msra.mxu0 %v2820
        %3108 = vmatprep.subr.mxu0 %v2824
        %3109 = vmatpush1.msra.mxu0 %v2823
        %3110 = vmatprep.subr.mxu0 %v2827
        %3111 = vmatpush1.msra.mxu0 %v2826
        %3112 = vmatprep.subr.mxu0 %v2830
        %3113 = vmatpush1.msra.mxu0 %v2829
        %3114 = vmatprep.subr.mxu0 %v2833
        %3115 = vmatpush1.msra.mxu0 %v2832
        %3116 = vmatprep.subr.mxu0 %v2836
        %3117 = vmatpush1.msra.mxu0 %v2835
        %3118 = vmatprep.subr.mxu0 %v2839
        %3119 = vmatpush1.msra.mxu0 %v2838
        %3120 = vmatprep.subr.mxu0 %v2842
        %3121 = vmatpush1.msra.mxu0 %v2841
        %3122 = vmatprep.subr.mxu0 %v2845
        %3123 = vmatpush1.msra.mxu0 %v2844
        %3124 = vmatprep.subr.mxu0 %v2848
        %3125 = vmatpush1.msra.mxu0 %v2847
        %3126 = vmatprep.subr.mxu0 %v2851
        %3127 = vmatpush1.msra.mxu0 %v2850
        %3128 = vmatprep.subr.mxu0 %v2854
        %3129 = vmatpush1.msra.mxu0 %v2853
        %3130 = vmatprep.subr.mxu0 %v2857
        %3131 = vmatpush1.msra.mxu0 %v2856
        %3132 = vmatprep.subr.mxu0 %v2860
        %3133 = vmatpush1.msra.mxu0 %v2859
        %3134 = vmatprep.subr.mxu0 %v2863
        %3135 = vmatpush1.msra.mxu0 %v2862
        %3136 = vmatprep.subr.mxu0 %v2866
        %3137 = vmatpush1.msra.mxu0 %v2865
        %3138 = vmatprep.subr.mxu0 %v2869
        %3139 = vmatpush1.msra.mxu0 %v2868
        %3140 = vmatprep.subr.mxu0 %v2872
        %3141 = vmatpush1.msra.mxu0 %v2871
        %3142 = vmatprep.subr.mxu0 %v2875
        %3143 = vmatpush1.msra.mxu0 %v2874
        %3144 = vmatprep.subr.mxu0 %v2878
        %3145 = vmatpush1.msra.mxu0 %v2877
        %3146 = vmatprep.subr.mxu0 %v2881
        %3147 = vmatpush1.msra.mxu0 %v2880
        %3148 = vmatprep.subr.mxu0 %v2884
        %3149 = vmatpush1.msra.mxu0 %v2883
        %3150 = vmatprep.subr.mxu0 %v2887
        %3151 = vmatpush1.msra.mxu0 %v2886
        %3152 = vmatprep.subr.mxu0 %v2890
        %3153 = vmatpush1.msra.mxu0 %v2889
        %3154 = vmatprep.subr.mxu0 %v2893
        %3155 = vmatpush1.msra.mxu0 %v2892
        %3156 = vmatprep.subr.mxu0 %v2896
        %3157 = vmatpush1.msra.mxu0 %v2895
        %3158 = vmatprep.subr.mxu0 %v2899
        %3159 = vmatpush1.msra.mxu0 %v2898
        %3160 = vmatprep.mubr.f32.mxu0 %v2565
        %3161 = vmatmul.mubr.f32.gmra.mrb[0].mxu0 %v2563
        %v3162 = vpop.f32.mrb[0].mxu0
        %v3163 = vadd.f32 %v3092, %v3162
        %v3164 = vpop.f32.mrb[0].mxu0
        %v3165 = vadd.f32 %v3094, %v3164
        %3166 = vdwg.mxu0
        %3167 = vmatprep.subr.mxu0 %v2902
        %3168 = vmatpush1.msra.mxu0 %v2901
        %3169 = vmatprep.subr.mxu0 %v2905
        %3170 = vmatpush1.msra.mxu0 %v2904
        %3171 = vmatprep.subr.mxu0 %v2908
        %3172 = vmatpush1.msra.mxu0 %v2907
        %3173 = vmatprep.subr.mxu0 %v2911
        %3174 = vmatpush1.msra.mxu0 %v2910
        %3175 = vmatprep.subr.mxu0 %v2914
        %3176 = vmatpush1.msra.mxu0 %v2913
        %3177 = vmatprep.subr.mxu0 %v2917
        %3178 = vmatpush1.msra.mxu0 %v2916
        %3179 = vmatprep.subr.mxu0 %v2920
        %3180 = vmatpush1.msra.mxu0 %v2919
        %3181 = vmatprep.subr.mxu0 %v2923
        %3182 = vmatpush1.msra.mxu0 %v2922
        %3183 = vmatprep.subr.mxu0 %v2926
        %3184 = vmatpush1.msra.mxu0 %v2925
        %3185 = vmatprep.subr.mxu0 %v2929
        %3186 = vmatpush1.msra.mxu0 %v2928
        %3187 = vmatprep.subr.mxu0 %v2932
        %3188 = vmatpush1.msra.mxu0 %v2931
        %3189 = vmatprep.subr.mxu0 %v2935
        %3190 = vmatpush1.msra.mxu0 %v2934
        %3191 = vmatprep.subr.mxu0 %v2938
        %3192 = vmatpush1.msra.mxu0 %v2937
        %3193 = vmatprep.subr.mxu0 %v2941
        %3194 = vmatpush1.msra.mxu0 %v2940
        %3195 = vmatprep.subr.mxu0 %v2944
        %3196 = vmatpush1.msra.mxu0 %v2943
        %3197 = vmatprep.subr.mxu0 %v2947
        %3198 = vmatpush1.msra.mxu0 %v2946
        %3199 = vmatprep.subr.mxu0 %v2950
        %3200 = vmatpush1.msra.mxu0 %v2949
        %3201 = vmatprep.subr.mxu0 %v2953
        %3202 = vmatpush1.msra.mxu0 %v2952
        %3203 = vmatprep.subr.mxu0 %v2956
        %3204 = vmatpush1.msra.mxu0 %v2955
        %3205 = vmatprep.subr.mxu0 %v2959
        %3206 = vmatpush1.msra.mxu0 %v2958
        %3207 = vmatprep.subr.mxu0 %v2962
        %3208 = vmatpush1.msra.mxu0 %v2961
        %3209 = vmatprep.subr.mxu0 %v2965
        %3210 = vmatpush1.msra.mxu0 %v2964
        %3211 = vmatprep.subr.mxu0 %v2968
        %3212 = vmatpush1.msra.mxu0 %v2967
        %3213 = vmatprep.subr.mxu0 %v2971
        %3214 = vmatpush1.msra.mxu0 %v2970
        %3215 = vmatprep.subr.mxu0 %v2974
        %3216 = vmatpush1.msra.mxu0 %v2973
        %3217 = vmatprep.subr.mxu0 %v2977
        %3218 = vmatpush1.msra.mxu0 %v2976
        %3219 = vmatprep.subr.mxu0 %v2980
        %3220 = vmatpush1.msra.mxu0 %v2979
        %3221 = vmatprep.subr.mxu0 %v2983
        %3222 = vmatpush1.msra.mxu0 %v2982
        %3223 = vmatprep.subr.mxu0 %v2986
        %3224 = vmatpush1.msra.mxu0 %v2985
        %3225 = vmatprep.subr.mxu0 %v2989
        %3226 = vmatpush1.msra.mxu0 %v2988
        %3227 = vmatprep.subr.mxu0 %v2992
        %3228 = vmatpush1.msra.mxu0 %v2991
        %3229 = vmatprep.subr.mxu0 %v2995
        %3230 = vmatpush1.msra.mxu0 %v2994
        %3231 = vmatprep.mubr.f32.mxu0 %v2636
        %3232 = vmatmul.mubr.f32.gmra.mrb[0].mxu0 %v2634
        %v3233 = vpop.f32.mrb[0].mxu0
        %v3234 = vadd.f32 %v3163, %v3233
        %v3235 = vpop.f32.mrb[0].mxu0
        %v3236 = vadd.f32 %v3165, %v3235
        %3237 = vdwg.mxu0
        %3238 = vmatprep.subr.mxu0 %v2998
        %3239 = vmatpush1.msra.mxu0 %v2997
        %3240 = vmatprep.subr.mxu0 %v3001
        %3241 = vmatpush1.msra.mxu0 %v3000
        %3242 = vmatprep.subr.mxu0 %v3004
        %3243 = vmatpush1.msra.mxu0 %v3003
        %3244 = vmatprep.subr.mxu0 %v3007
        %3245 = vmatpush1.msra.mxu0 %v3006
        %3246 = vmatprep.subr.mxu0 %v3010
        %3247 = vmatpush1.msra.mxu0 %v3009
        %3248 = vmatprep.subr.mxu0 %v3013
        %3249 = vmatpush1.msra.mxu0 %v3012
        %3250 = vmatprep.subr.mxu0 %v3016
        %3251 = vmatpush1.msra.mxu0 %v3015
        %3252 = vmatprep.subr.mxu0 %v3019
        %3253 = vmatpush1.msra.mxu0 %v3018
        %3254 = vmatprep.subr.mxu0 0.0
        %3255 = vmatpush1.msra.mxu0 0.0
        %3256 = vmatprep.subr.mxu0 0.0
        %3257 = vmatpush1.msra.mxu0 0.0
        %3258 = vmatprep.subr.mxu0 0.0
        %3259 = vmatpush1.msra.mxu0 0.0
        %3260 = vmatprep.subr.mxu0 0.0
        %3261 = vmatpush1.msra.mxu0 0.0
        %3262 = vmatprep.subr.mxu0 0.0
        %3263 = vmatpush1.msra.mxu0 0.0
        %3264 = vmatprep.subr.mxu0 0.0
        %3265 = vmatpush1.msra.mxu0 0.0
        %3266 = vmatprep.subr.mxu0 0.0
        %3267 = vmatpush1.msra.mxu0 0.0
        %3268 = vmatprep.subr.mxu0 0.0
        %3269 = vmatpush1.msra.mxu0 0.0
        %3270 = vmatprep.subr.mxu0 0.0
        %3271 = vmatpush1.msra.mxu0 0.0
        %3272 = vmatprep.subr.mxu0 0.0
        %3273 = vmatpush1.msra.mxu0 0.0
        %3274 = vmatprep.subr.mxu0 0.0
        %3275 = vmatpush1.msra.mxu0 0.0
        %3276 = vmatprep.subr.mxu0 0.0
        %3277 = vmatpush1.msra.mxu0 0.0
        %3278 = vmatprep.subr.mxu0 0.0
        %3279 = vmatpush1.msra.mxu0 0.0
        %3280 = vmatprep.subr.mxu0 0.0
        %3281 = vmatpush1.msra.mxu0 0.0
        %3282 = vmatprep.subr.mxu0 0.0
        %3283 = vmatpush1.msra.mxu0 0.0
        %3284 = vmatprep.subr.mxu0 0.0
        %3285 = vmatpush1.msra.mxu0 0.0
        %3286 = vmatprep.subr.mxu0 0.0
        %3287 = vmatpush1.msra.mxu0 0.0
        %3288 = vmatprep.subr.mxu0 0.0
        %3289 = vmatpush1.msra.mxu0 0.0
        %3290 = vmatprep.subr.mxu0 0.0
        %3291 = vmatpush1.msra.mxu0 0.0
        %3292 = vmatprep.subr.mxu0 0.0
        %3293 = vmatpush1.msra.mxu0 0.0
        %3294 = vmatprep.subr.mxu0 0.0
        %3295 = vmatpush1.msra.mxu0 0.0
        %3296 = vmatprep.subr.mxu0 0.0
        %3297 = vmatpush1.msra.mxu0 0.0
        %3298 = vmatprep.subr.mxu0 0.0
        %3299 = vmatpush1.msra.mxu0 0.0
        %3300 = vmatprep.subr.mxu0 0.0
        %3301 = vmatpush1.msra.mxu0 0.0
        %3302 = vmatprep.mubr.f32.mxu0 0.0
        %3303 = vmatmul.mubr.f32.gmra.mrb[0].mxu0 %v3023
        %v3304 = vpop.f32.mrb[0].mxu0
        %v3305 = vadd.f32 %v3234, %v3304
        %v3306 = vpop.f32.mrb[0].mxu0
        %v3307 = vadd.f32 %v3236, %v3306
        %3308 = vdwg.mxu0
        %3309 = vmatprep.subr.mxu0 0.0
        %3310 = vmatpush1.msra.mxu0 %v2711
        %3311 = vmatprep.subr.mxu0 0.0
        %3312 = vmatpush1.msra.mxu0 %v2714
        %3313 = vmatprep.subr.mxu0 0.0
        %3314 = vmatpush1.msra.mxu0 %v2717
        %3315 = vmatprep.subr.mxu0 0.0
        %3316 = vmatpush1.msra.mxu0 %v2720
        %3317 = vmatprep.subr.mxu0 0.0
        %3318 = vmatpush1.msra.mxu0 %v2723
        %3319 = vmatprep.subr.mxu0 0.0
        %3320 = vmatpush1.msra.mxu0 %v2726
        %3321 = vmatprep.subr.mxu0 0.0
        %3322 = vmatpush1.msra.mxu0 %v2729
        %3323 = vmatprep.subr.mxu0 0.0
        %3324 = vmatpush1.msra.mxu0 %v2732
        %3325 = vmatprep.subr.mxu0 0.0
        %3326 = vmatpush1.msra.mxu0 %v2735
        %3327 = vmatprep.subr.mxu0 0.0
        %3328 = vmatpush1.msra.mxu0 %v2738
        %3329 = vmatprep.subr.mxu0 0.0
        %3330 = vmatpush1.msra.mxu0 %v2741
        %3331 = vmatprep.subr.mxu0 0.0
        %3332 = vmatpush1.msra.mxu0 %v2744
        %3333 = vmatprep.subr.mxu0 0.0
        %3334 = vmatpush1.msra.mxu0 %v2747
        %3335 = vmatprep.subr.mxu0 0.0
        %3336 = vmatpush1.msra.mxu0 %v2750
        %3337 = vmatprep.subr.mxu0 0.0
        %3338 = vmatpush1.msra.mxu0 %v2753
        %3339 = vmatprep.subr.mxu0 0.0
        %3340 = vmatpush1.msra.mxu0 %v2756
        %3341 = vmatprep.subr.mxu0 0.0
        %3342 = vmatpush1.msra.mxu0 %v2759
        %3343 = vmatprep.subr.mxu0 0.0
        %3344 = vmatpush1.msra.mxu0 %v2762
        %3345 = vmatprep.subr.mxu0 0.0
        %3346 = vmatpush1.msra.mxu0 %v2765
        %3347 = vmatprep.subr.mxu0 0.0
        %3348 = vmatpush1.msra.mxu0 %v2768
        %3349 = vmatprep.subr.mxu0 0.0
        %3350 = vmatpush1.msra.mxu0 %v2771
        %3351 = vmatprep.subr.mxu0 0.0
        %3352 = vmatpush1.msra.mxu0 %v2774
        %3353 = vmatprep.subr.mxu0 0.0
        %3354 = vmatpush1.msra.mxu0 %v2777
        %3355 = vmatprep.subr.mxu0 0.0
        %3356 = vmatpush1.msra.mxu0 %v2780
        %3357 = vmatprep.subr.mxu0 0.0
        %3358 = vmatpush1.msra.mxu0 %v2783
        %3359 = vmatprep.subr.mxu0 0.0
        %3360 = vmatpush1.msra.mxu0 %v2786
        %3361 = vmatprep.subr.mxu0 0.0
        %3362 = vmatpush1.msra.mxu0 %v2789
        %3363 = vmatprep.subr.mxu0 0.0
        %3364 = vmatpush1.msra.mxu0 %v2792
        %3365 = vmatprep.subr.mxu0 0.0
        %3366 = vmatpush1.msra.mxu0 %v2795
        %3367 = vmatprep.subr.mxu0 0.0
        %3368 = vmatpush1.msra.mxu0 %v2798
        %3369 = vmatprep.subr.mxu0 0.0
        %3370 = vmatpush1.msra.mxu0 %v2801
        %3371 = vmatprep.subr.mxu0 0.0
        %3372 = vmatpush1.msra.mxu0 %v2804
        %3373 = vmatprep.mubr.f32.mxu0 %v2494
        %3374 = vmatmul.mubr.f32.gmra.mrb[0].mxu0 %v2492
        %v3375 = vpop.f32.mrb[0].mxu0
        %v3376 = vadd.f32 0.0, %v3375
        %v3377 = vpop.f32.mrb[0].mxu0
        %3378 = vdwg.mxu0
        %3379 = vmatprep.subr.mxu0 0.0
        %3380 = vmatpush1.msra.mxu0 %v2807
        %3381 = vmatprep.subr.mxu0 0.0
        %3382 = vmatpush1.msra.mxu0 %v2810
        %3383 = vmatprep.subr.mxu0 0.0
        %3384 = vmatpush1.msra.mxu0 %v2813
        %3385 = vmatprep.subr.mxu0 0.0
        %3386 = vmatpush1.msra.mxu0 %v2816
        %3387 = vmatprep.subr.mxu0 0.0
        %3388 = vmatpush1.msra.mxu0 %v2819
        %3389 = vmatprep.subr.mxu0 0.0
        %3390 = vmatpush1.msra.mxu0 %v2822
        %3391 = vmatprep.subr.mxu0 0.0
        %3392 = vmatpush1.msra.mxu0 %v2825
        %3393 = vmatprep.subr.mxu0 0.0
        %3394 = vmatpush1.msra.mxu0 %v2828
        %3395 = vmatprep.subr.mxu0 0.0
        %3396 = vmatpush1.msra.mxu0 %v2831
        %3397 = vmatprep.subr.mxu0 0.0
        %3398 = vmatpush1.msra.mxu0 %v2834
        %3399 = vmatprep.subr.mxu0 0.0
        %3400 = vmatpush1.msra.mxu0 %v2837
        %3401 = vmatprep.subr.mxu0 0.0
        %3402 = vmatpush1.msra.mxu0 %v2840
        %3403 = vmatprep.subr.mxu0 0.0
        %3404 = vmatpush1.msra.mxu0 %v2843
        %3405 = vmatprep.subr.mxu0 0.0
        %3406 = vmatpush1.msra.mxu0 %v2846
        %3407 = vmatprep.subr.mxu0 0.0
        %3408 = vmatpush1.msra.mxu0 %v2849
        %3409 = vmatprep.subr.mxu0 0.0
        %3410 = vmatpush1.msra.mxu0 %v2852
        %3411 = vmatprep.subr.mxu0 0.0
        %3412 = vmatpush1.msra.mxu0 %v2855
        %3413 = vmatprep.subr.mxu0 0.0
        %3414 = vmatpush1.msra.mxu0 %v2858
        %3415 = vmatprep.subr.mxu0 0.0
        %3416 = vmatpush1.msra.mxu0 %v2861
        %3417 = vmatprep.subr.mxu0 0.0
        %3418 = vmatpush1.msra.mxu0 %v2864
        %3419 = vmatprep.subr.mxu0 0.0
        %3420 = vmatpush1.msra.mxu0 %v2867
        %3421 = vmatprep.subr.mxu0 0.0
        %3422 = vmatpush1.msra.mxu0 %v2870
        %3423 = vmatprep.subr.mxu0 0.0
        %3424 = vmatpush1.msra.mxu0 %v2873
        %3425 = vmatprep.subr.mxu0 0.0
        %3426 = vmatpush1.msra.mxu0 %v2876
        %3427 = vmatprep.subr.mxu0 0.0
        %3428 = vmatpush1.msra.mxu0 %v2879
        %3429 = vmatprep.subr.mxu0 0.0
        %3430 = vmatpush1.msra.mxu0 %v2882
        %3431 = vmatprep.subr.mxu0 0.0
        %3432 = vmatpush1.msra.mxu0 %v2885
        %3433 = vmatprep.subr.mxu0 0.0
        %3434 = vmatpush1.msra.mxu0 %v2888
        %3435 = vmatprep.subr.mxu0 0.0
        %3436 = vmatpush1.msra.mxu0 %v2891
        %3437 = vmatprep.subr.mxu0 0.0
        %3438 = vmatpush1.msra.mxu0 %v2894
        %3439 = vmatprep.subr.mxu0 0.0
        %3440 = vmatpush1.msra.mxu0 %v2897
        %3441 = vmatprep.subr.mxu0 0.0
        %3442 = vmatpush1.msra.mxu0 %v2900
        %3443 = vmatprep.mubr.f32.mxu0 %v2565
        %3444 = vmatmul.mubr.f32.gmra.mrb[0].mxu0 %v2563
        %v3445 = vpop.f32.mrb[0].mxu0
        %v3446 = vadd.f32 %v3376, %v3445
        %v3447 = vpop.f32.mrb[0].mxu0
        %3448 = vdwg.mxu0
        %3449 = vmatprep.subr.mxu0 0.0
        %3450 = vmatpush1.msra.mxu0 %v2903
        %3451 = vmatprep.subr.mxu0 0.0
        %3452 = vmatpush1.msra.mxu0 %v2906
        %3453 = vmatprep.subr.mxu0 0.0
        %3454 = vmatpush1.msra.mxu0 %v2909
        %3455 = vmatprep.subr.mxu0 0.0
        %3456 = vmatpush1.msra.mxu0 %v2912
        %3457 = vmatprep.subr.mxu0 0.0
        %3458 = vmatpush1.msra.mxu0 %v2915
        %3459 = vmatprep.subr.mxu0 0.0
        %3460 = vmatpush1.msra.mxu0 %v2918
        %3461 = vmatprep.subr.mxu0 0.0
        %3462 = vmatpush1.msra.mxu0 %v2921
        %3463 = vmatprep.subr.mxu0 0.0
        %3464 = vmatpush1.msra.mxu0 %v2924
        %3465 = vmatprep.subr.mxu0 0.0
        %3466 = vmatpush1.msra.mxu0 %v2927
        %3467 = vmatprep.subr.mxu0 0.0
        %3468 = vmatpush1.msra.mxu0 %v2930
        %3469 = vmatprep.subr.mxu0 0.0
        %3470 = vmatpush1.msra.mxu0 %v2933
        %3471 = vmatprep.subr.mxu0 0.0
        %3472 = vmatpush1.msra.mxu0 %v2936
        %3473 = vmatprep.subr.mxu0 0.0
        %3474 = vmatpush1.msra.mxu0 %v2939
        %3475 = vmatprep.subr.mxu0 0.0
        %3476 = vmatpush1.msra.mxu0 %v2942
        %3477 = vmatprep.subr.mxu0 0.0
        %3478 = vmatpush1.msra.mxu0 %v2945
        %3479 = vmatprep.subr.mxu0 0.0
        %3480 = vmatpush1.msra.mxu0 %v2948
        %3481 = vmatprep.subr.mxu0 0.0
        %3482 = vmatpush1.msra.mxu0 %v2951
        %3483 = vmatprep.subr.mxu0 0.0
        %3484 = vmatpush1.msra.mxu0 %v2954
        %3485 = vmatprep.subr.mxu0 0.0
        %3486 = vmatpush1.msra.mxu0 %v2957
        %3487 = vmatprep.subr.mxu0 0.0
        %3488 = vmatpush1.msra.mxu0 %v2960
        %3489 = vmatprep.subr.mxu0 0.0
        %3490 = vmatpush1.msra.mxu0 %v2963
        %3491 = vmatprep.subr.mxu0 0.0
        %3492 = vmatpush1.msra.mxu0 %v2966
        %3493 = vmatprep.subr.mxu0 0.0
        %3494 = vmatpush1.msra.mxu0 %v2969
        %3495 = vmatprep.subr.mxu0 0.0
        %3496 = vmatpush1.msra.mxu0 %v2972
        %3497 = vmatprep.subr.mxu0 0.0
        %3498 = vmatpush1.msra.mxu0 %v2975
        %3499 = vmatprep.subr.mxu0 0.0
        %3500 = vmatpush1.msra.mxu0 %v2978
        %3501 = vmatprep.subr.mxu0 0.0
        %3502 = vmatpush1.msra.mxu0 %v2981
        %3503 = vmatprep.subr.mxu0 0.0
        %3504 = vmatpush1.msra.mxu0 %v2984
        %3505 = vmatprep.subr.mxu0 0.0
        %3506 = vmatpush1.msra.mxu0 %v2987
        %3507 = vmatprep.subr.mxu0 0.0
        %3508 = vmatpush1.msra.mxu0 %v2990
        %3509 = vmatprep.subr.mxu0 0.0
        %3510 = vmatpush1.msra.mxu0 %v2993
        %3511 = vmatprep.subr.mxu0 0.0
        %3512 = vmatpush1.msra.mxu0 %v2996
        %3513 = vmatprep.mubr.f32.mxu0 %v2636
        %3514 = vmatmul.mubr.f32.gmra.mrb[0].mxu0 %v2634
        %v3515 = vpop.f32.mrb[0].mxu0
        %v3516 = vadd.f32 %v3446, %v3515
        %v3517 = vpop.f32.mrb[0].mxu0
        %3518 = vdwg.mxu0
        %3519 = vmatprep.subr.mxu0 0.0
        %3520 = vmatpush1.msra.mxu0 %v2999
        %3521 = vmatprep.subr.mxu0 0.0
        %3522 = vmatpush1.msra.mxu0 %v3002
        %3523 = vmatprep.subr.mxu0 0.0
        %3524 = vmatpush1.msra.mxu0 %v3005
        %3525 = vmatprep.subr.mxu0 0.0
        %3526 = vmatpush1.msra.mxu0 %v3008
        %3527 = vmatprep.subr.mxu0 0.0
        %3528 = vmatpush1.msra.mxu0 %v3011
        %3529 = vmatprep.subr.mxu0 0.0
        %3530 = vmatpush1.msra.mxu0 %v3014
        %3531 = vmatprep.subr.mxu0 0.0
        %3532 = vmatpush1.msra.mxu0 %v3017
        %3533 = vmatprep.subr.mxu0 0.0
        %3534 = vmatpush1.msra.mxu0 %v3020
        %3535 = vmatprep.subr.mxu0 0.0
        %3536 = vmatpush1.msra.mxu0 0.0
        %3537 = vmatprep.subr.mxu0 0.0
        %3538 = vmatpush1.msra.mxu0 0.0
        %3539 = vmatprep.subr.mxu0 0.0
        %3540 = vmatpush1.msra.mxu0 0.0
        %3541 = vmatprep.subr.mxu0 0.0
        %3542 = vmatpush1.msra.mxu0 0.0
        %3543 = vmatprep.subr.mxu0 0.0
        %3544 = vmatpush1.msra.mxu0 0.0
        %3545 = vmatprep.subr.mxu0 0.0
        %3546 = vmatpush1.msra.mxu0 0.0
        %3547 = vmatprep.subr.mxu0 0.0
        %3548 = vmatpush1.msra.mxu0 0.0
        %3549 = vmatprep.subr.mxu0 0.0
        %3550 = vmatpush1.msra.mxu0 0.0
        %3551 = vmatprep.subr.mxu0 0.0
        %3552 = vmatpush1.msra.mxu0 0.0
        %3553 = vmatprep.subr.mxu0 0.0
        %3554 = vmatpush1.msra.mxu0 0.0
        %3555 = vmatprep.subr.mxu0 0.0
        %3556 = vmatpush1.msra.mxu0 0.0
        %3557 = vmatprep.subr.mxu0 0.0
        %3558 = vmatpush1.msra.mxu0 0.0
        %3559 = vmatprep.subr.mxu0 0.0
        %3560 = vmatpush1.msra.mxu0 0.0
        %3561 = vmatprep.subr.mxu0 0.0
        %3562 = vmatpush1.msra.mxu0 0.0
        %3563 = vmatprep.subr.mxu0 0.0
        %3564 = vmatpush1.msra.mxu0 0.0
        %3565 = vmatprep.subr.mxu0 0.0
        %3566 = vmatpush1.msra.mxu0 0.0
        %3567 = vmatprep.subr.mxu0 0.0
        %3568 = vmatpush1.msra.mxu0 0.0
        %3569 = vmatprep.subr.mxu0 0.0
        %3570 = vmatpush1.msra.mxu0 0.0
        %3571 = vmatprep.subr.mxu0 0.0
        %3572 = vmatpush1.msra.mxu0 0.0
        %3573 = vmatprep.subr.mxu0 0.0
        %3574 = vmatpush1.msra.mxu0 0.0
        %3575 = vmatprep.subr.mxu0 0.0
        %3576 = vmatpush1.msra.mxu0 0.0
        %3577 = vmatprep.subr.mxu0 0.0
        %3578 = vmatpush1.msra.mxu0 0.0
        %3579 = vmatprep.subr.mxu0 0.0
        %3580 = vmatpush1.msra.mxu0 0.0
        %3581 = vmatprep.subr.mxu0 0.0
        %3582 = vmatpush1.msra.mxu0 0.0
        %3583 = vmatprep.mubr.f32.mxu0 0.0
        %3584 = vmatmul.mubr.f32.gmra.mrb[0].mxu0 %v3023
        %v3585 = vpop.f32.mrb[0].mxu0
        %v3586 = vadd.f32 %v3516, %v3585
        %v3587 = vpop.f32.mrb[0].mxu0
        %3588 = vdwg.mxu0
        %v3590 = vsel %vm3021, %v2108, 0
        %3592 = vmatprep.subr.mxu0 %v2112
        %3593 = vmatpush1.msra.mxu0 %v2111
        %3594 = vmatprep.subr.mxu0 %v2115
        %3595 = vmatpush1.msra.mxu0 %v2114
        %3596 = vmatprep.subr.mxu0 %v2118
        %3597 = vmatpush1.msra.mxu0 %v2117
        %3598 = vmatprep.subr.mxu0 %v2121
        %3599 = vmatpush1.msra.mxu0 %v2120
        %3600 = vmatprep.subr.mxu0 %v2124
        %3601 = vmatpush1.msra.mxu0 %v2123
        %3602 = vmatprep.subr.mxu0 %v2127
        %3603 = vmatpush1.msra.mxu0 %v2126
        %3604 = vmatprep.subr.mxu0 %v2130
        %3605 = vmatpush1.msra.mxu0 %v2129
        %3606 = vmatprep.subr.mxu0 %v2133
        %3607 = vmatpush1.msra.mxu0 %v2132
        %3608 = vmatprep.subr.mxu0 %v2136
        %3609 = vmatpush1.msra.mxu0 %v2135
        %3610 = vmatprep.subr.mxu0 %v2139
        %3611 = vmatpush1.msra.mxu0 %v2138
        %3612 = vmatprep.subr.mxu0 %v2142
        %3613 = vmatpush1.msra.mxu0 %v2141
        %3614 = vmatprep.subr.mxu0 %v2145
        %3615 = vmatpush1.msra.mxu0 %v2144
        %3616 = vmatprep.subr.mxu0 %v2148
        %3617 = vmatpush1.msra.mxu0 %v2147
        %3618 = vmatprep.subr.mxu0 %v2151
        %3619 = vmatpush1.msra.mxu0 %v2150
        %3620 = vmatprep.subr.mxu0 %v2154
        %3621 = vmatpush1.msra.mxu0 %v2153
        %3622 = vmatprep.subr.mxu0 %v2157
        %3623 = vmatpush1.msra.mxu0 %v2156
        %3624 = vmatprep.subr.mxu0 %v2160
        %3625 = vmatpush1.msra.mxu0 %v2159
        %3626 = vmatprep.subr.mxu0 %v2163
        %3627 = vmatpush1.msra.mxu0 %v2162
        %3628 = vmatprep.subr.mxu0 %v2166
        %3629 = vmatpush1.msra.mxu0 %v2165
        %3630 = vmatprep.subr.mxu0 %v2169
        %3631 = vmatpush1.msra.mxu0 %v2168
        %3632 = vmatprep.subr.mxu0 %v2172
        %3633 = vmatpush1.msra.mxu0 %v2171
        %3634 = vmatprep.subr.mxu0 %v2175
        %3635 = vmatpush1.msra.mxu0 %v2174
        %3636 = vmatprep.subr.mxu0 %v2178
        %3637 = vmatpush1.msra.mxu0 %v2177
        %3638 = vmatprep.subr.mxu0 %v2181
        %3639 = vmatpush1.msra.mxu0 %v2180
        %3640 = vmatprep.subr.mxu0 %v2184
        %3641 = vmatpush1.msra.mxu0 %v2183
        %3642 = vmatprep.subr.mxu0 %v2187
        %3643 = vmatpush1.msra.mxu0 %v2186
        %3644 = vmatprep.subr.mxu0 %v2190
        %3645 = vmatpush1.msra.mxu0 %v2189
        %3646 = vmatprep.subr.mxu0 %v2193
        %3647 = vmatpush1.msra.mxu0 %v2192
        %3648 = vmatprep.subr.mxu0 %v2196
        %3649 = vmatpush1.msra.mxu0 %v2195
        %3650 = vmatprep.subr.mxu0 %v2199
        %3651 = vmatpush1.msra.mxu0 %v2198
        %3652 = vmatprep.subr.mxu0 %v2202
        %3653 = vmatpush1.msra.mxu0 %v2201
        %3654 = vmatprep.subr.mxu0 %v2205
        %3655 = vmatpush1.msra.mxu0 %v2204
        %3656 = vmatprep.mubr.f32.mxu0 %v1897
        %3657 = vmatmul.mubr.f32.gmra.mrb[0].mxu0 %v1895
        %v3658 = vpop.f32.mrb[0].mxu0
        %v3659 = vadd.f32 %v3305, %v3658
        %v3660 = vpop.f32.mrb[0].mxu0
        %v3661 = vadd.f32 %v3307, %v3660
        %3662 = vdwg.mxu0
        %3663 = vmatprep.subr.mxu0 %v2208
        %3664 = vmatpush1.msra.mxu0 %v2207
        %3665 = vmatprep.subr.mxu0 %v2211
        %3666 = vmatpush1.msra.mxu0 %v2210
        %3667 = vmatprep.subr.mxu0 %v2214
        %3668 = vmatpush1.msra.mxu0 %v2213
        %3669 = vmatprep.subr.mxu0 %v2217
        %3670 = vmatpush1.msra.mxu0 %v2216
        %3671 = vmatprep.subr.mxu0 %v2220
        %3672 = vmatpush1.msra.mxu0 %v2219
        %3673 = vmatprep.subr.mxu0 %v2223
        %3674 = vmatpush1.msra.mxu0 %v2222
        %3675 = vmatprep.subr.mxu0 %v2226
        %3676 = vmatpush1.msra.mxu0 %v2225
        %3677 = vmatprep.subr.mxu0 %v2229
        %3678 = vmatpush1.msra.mxu0 %v2228
        %3679 = vmatprep.subr.mxu0 %v2232
        %3680 = vmatpush1.msra.mxu0 %v2231
        %3681 = vmatprep.subr.mxu0 %v2235
        %3682 = vmatpush1.msra.mxu0 %v2234
        %3683 = vmatprep.subr.mxu0 %v2238
        %3684 = vmatpush1.msra.mxu0 %v2237
        %3685 = vmatprep.subr.mxu0 %v2241
        %3686 = vmatpush1.msra.mxu0 %v2240
        %3687 = vmatprep.subr.mxu0 %v2244
        %3688 = vmatpush1.msra.mxu0 %v2243
        %3689 = vmatprep.subr.mxu0 %v2247
        %3690 = vmatpush1.msra.mxu0 %v2246
        %3691 = vmatprep.subr.mxu0 %v2250
        %3692 = vmatpush1.msra.mxu0 %v2249
        %3693 = vmatprep.subr.mxu0 %v2253
        %3694 = vmatpush1.msra.mxu0 %v2252
        %3695 = vmatprep.subr.mxu0 %v2256
        %3696 = vmatpush1.msra.mxu0 %v2255
        %3697 = vmatprep.subr.mxu0 %v2259
        %3698 = vmatpush1.msra.mxu0 %v2258
        %3699 = vmatprep.subr.mxu0 %v2262
        %3700 = vmatpush1.msra.mxu0 %v2261
        %3701 = vmatprep.subr.mxu0 %v2265
        %3702 = vmatpush1.msra.mxu0 %v2264
        %3703 = vmatprep.subr.mxu0 %v2268
        %3704 = vmatpush1.msra.mxu0 %v2267
        %3705 = vmatprep.subr.mxu0 %v2271
        %3706 = vmatpush1.msra.mxu0 %v2270
        %3707 = vmatprep.subr.mxu0 %v2274
        %3708 = vmatpush1.msra.mxu0 %v2273
        %3709 = vmatprep.subr.mxu0 %v2277
        %3710 = vmatpush1.msra.mxu0 %v2276
        %3711 = vmatprep.subr.mxu0 %v2280
        %3712 = vmatpush1.msra.mxu0 %v2279
        %3713 = vmatprep.subr.mxu0 %v2283
        %3714 = vmatpush1.msra.mxu0 %v2282
        %3715 = vmatprep.subr.mxu0 %v2286
        %3716 = vmatpush1.msra.mxu0 %v2285
        %3717 = vmatprep.subr.mxu0 %v2289
        %3718 = vmatpush1.msra.mxu0 %v2288
        %3719 = vmatprep.subr.mxu0 %v2292
        %3720 = vmatpush1.msra.mxu0 %v2291
        %3721 = vmatprep.subr.mxu0 %v2295
        %3722 = vmatpush1.msra.mxu0 %v2294
        %3723 = vmatprep.subr.mxu0 %v2298
        %3724 = vmatpush1.msra.mxu0 %v2297
        %3725 = vmatprep.subr.mxu0 %v2301
        %3726 = vmatpush1.msra.mxu0 %v2300
        %3727 = vmatprep.mubr.f32.mxu0 %v1968
        %3728 = vmatmul.mubr.f32.gmra.mrb[0].mxu0 %v1966
        %v3729 = vpop.f32.mrb[0].mxu0
        %v3730 = vadd.f32 %v3659, %v3729
        %v3731 = vpop.f32.mrb[0].mxu0
        %v3732 = vadd.f32 %v3661, %v3731
        %3733 = vdwg.mxu0
        %3734 = vmatprep.subr.mxu0 %v2304
        %3735 = vmatpush1.msra.mxu0 %v2303
        %3736 = vmatprep.subr.mxu0 %v2307
        %3737 = vmatpush1.msra.mxu0 %v2306
        %3738 = vmatprep.subr.mxu0 %v2310
        %3739 = vmatpush1.msra.mxu0 %v2309
        %3740 = vmatprep.subr.mxu0 %v2313
        %3741 = vmatpush1.msra.mxu0 %v2312
        %3742 = vmatprep.subr.mxu0 %v2316
        %3743 = vmatpush1.msra.mxu0 %v2315
        %3744 = vmatprep.subr.mxu0 %v2319
        %3745 = vmatpush1.msra.mxu0 %v2318
        %3746 = vmatprep.subr.mxu0 %v2322
        %3747 = vmatpush1.msra.mxu0 %v2321
        %3748 = vmatprep.subr.mxu0 %v2325
        %3749 = vmatpush1.msra.mxu0 %v2324
        %3750 = vmatprep.subr.mxu0 %v2328
        %3751 = vmatpush1.msra.mxu0 %v2327
        %3752 = vmatprep.subr.mxu0 %v2331
        %3753 = vmatpush1.msra.mxu0 %v2330
        %3754 = vmatprep.subr.mxu0 %v2334
        %3755 = vmatpush1.msra.mxu0 %v2333
        %3756 = vmatprep.subr.mxu0 %v2337
        %3757 = vmatpush1.msra.mxu0 %v2336
        %3758 = vmatprep.subr.mxu0 %v2340
        %3759 = vmatpush1.msra.mxu0 %v2339
        %3760 = vmatprep.subr.mxu0 %v2343
        %3761 = vmatpush1.msra.mxu0 %v2342
        %3762 = vmatprep.subr.mxu0 %v2346
        %3763 = vmatpush1.msra.mxu0 %v2345
        %3764 = vmatprep.subr.mxu0 %v2349
        %3765 = vmatpush1.msra.mxu0 %v2348
        %3766 = vmatprep.subr.mxu0 %v2352
        %3767 = vmatpush1.msra.mxu0 %v2351
        %3768 = vmatprep.subr.mxu0 %v2355
        %3769 = vmatpush1.msra.mxu0 %v2354
        %3770 = vmatprep.subr.mxu0 %v2358
        %3771 = vmatpush1.msra.mxu0 %v2357
        %3772 = vmatprep.subr.mxu0 %v2361
        %3773 = vmatpush1.msra.mxu0 %v2360
        %3774 = vmatprep.subr.mxu0 %v2364
        %3775 = vmatpush1.msra.mxu0 %v2363
        %3776 = vmatprep.subr.mxu0 %v2367
        %3777 = vmatpush1.msra.mxu0 %v2366
        %3778 = vmatprep.subr.mxu0 %v2370
        %3779 = vmatpush1.msra.mxu0 %v2369
        %3780 = vmatprep.subr.mxu0 %v2373
        %3781 = vmatpush1.msra.mxu0 %v2372
        %3782 = vmatprep.subr.mxu0 %v2376
        %3783 = vmatpush1.msra.mxu0 %v2375
        %3784 = vmatprep.subr.mxu0 %v2379
        %3785 = vmatpush1.msra.mxu0 %v2378
        %3786 = vmatprep.subr.mxu0 %v2382
        %3787 = vmatpush1.msra.mxu0 %v2381
        %3788 = vmatprep.subr.mxu0 %v2385
        %3789 = vmatpush1.msra.mxu0 %v2384
        %3790 = vmatprep.subr.mxu0 %v2388
        %3791 = vmatpush1.msra.mxu0 %v2387
        %3792 = vmatprep.subr.mxu0 %v2391
        %3793 = vmatpush1.msra.mxu0 %v2390
        %3794 = vmatprep.subr.mxu0 %v2394
        %3795 = vmatpush1.msra.mxu0 %v2393
        %3796 = vmatprep.subr.mxu0 %v2397
        %3797 = vmatpush1.msra.mxu0 %v2396
        %3798 = vmatprep.mubr.f32.mxu0 %v2039
        %3799 = vmatmul.mubr.f32.gmra.mrb[0].mxu0 %v2037
        %v3800 = vpop.f32.mrb[0].mxu0
        %v3801 = vadd.f32 %v3730, %v3800
        %v3802 = vpop.f32.mrb[0].mxu0
        %v3803 = vadd.f32 %v3732, %v3802
        %3804 = vdwg.mxu0
        %3805 = vmatprep.subr.mxu0 %v2400
        %3806 = vmatpush1.msra.mxu0 %v2399
        %3807 = vmatprep.subr.mxu0 %v2403
        %3808 = vmatpush1.msra.mxu0 %v2402
        %3809 = vmatprep.subr.mxu0 %v2406
        %3810 = vmatpush1.msra.mxu0 %v2405
        %3811 = vmatprep.subr.mxu0 %v2409
        %3812 = vmatpush1.msra.mxu0 %v2408
        %3813 = vmatprep.subr.mxu0 %v2412
        %3814 = vmatpush1.msra.mxu0 %v2411
        %3815 = vmatprep.subr.mxu0 %v2415
        %3816 = vmatpush1.msra.mxu0 %v2414
        %3817 = vmatprep.subr.mxu0 %v2418
        %3818 = vmatpush1.msra.mxu0 %v2417
        %3819 = vmatprep.subr.mxu0 %v2421
        %3820 = vmatpush1.msra.mxu0 %v2420
        %3821 = vmatprep.subr.mxu0 0.0
        %3822 = vmatpush1.msra.mxu0 0.0
        %3823 = vmatprep.subr.mxu0 0.0
        %3824 = vmatpush1.msra.mxu0 0.0
        %3825 = vmatprep.subr.mxu0 0.0
        %3826 = vmatpush1.msra.mxu0 0.0
        %3827 = vmatprep.subr.mxu0 0.0
        %3828 = vmatpush1.msra.mxu0 0.0
        %3829 = vmatprep.subr.mxu0 0.0
        %3830 = vmatpush1.msra.mxu0 0.0
        %3831 = vmatprep.subr.mxu0 0.0
        %3832 = vmatpush1.msra.mxu0 0.0
        %3833 = vmatprep.subr.mxu0 0.0
        %3834 = vmatpush1.msra.mxu0 0.0
        %3835 = vmatprep.subr.mxu0 0.0
        %3836 = vmatpush1.msra.mxu0 0.0
        %3837 = vmatprep.subr.mxu0 0.0
        %3838 = vmatpush1.msra.mxu0 0.0
        %3839 = vmatprep.subr.mxu0 0.0
        %3840 = vmatpush1.msra.mxu0 0.0
        %3841 = vmatprep.subr.mxu0 0.0
        %3842 = vmatpush1.msra.mxu0 0.0
        %3843 = vmatprep.subr.mxu0 0.0
        %3844 = vmatpush1.msra.mxu0 0.0
        %3845 = vmatprep.subr.mxu0 0.0
        %3846 = vmatpush1.msra.mxu0 0.0
        %3847 = vmatprep.subr.mxu0 0.0
        %3848 = vmatpush1.msra.mxu0 0.0
        %3849 = vmatprep.subr.mxu0 0.0
        %3850 = vmatpush1.msra.mxu0 0.0
        %3851 = vmatprep.subr.mxu0 0.0
        %3852 = vmatpush1.msra.mxu0 0.0
        %3853 = vmatprep.subr.mxu0 0.0
        %3854 = vmatpush1.msra.mxu0 0.0
        %3855 = vmatprep.subr.mxu0 0.0
        %3856 = vmatpush1.msra.mxu0 0.0
        %3857 = vmatprep.subr.mxu0 0.0
        %3858 = vmatpush1.msra.mxu0 0.0
        %3859 = vmatprep.subr.mxu0 0.0
        %3860 = vmatpush1.msra.mxu0 0.0
        %3861 = vmatprep.subr.mxu0 0.0
        %3862 = vmatpush1.msra.mxu0 0.0
        %3863 = vmatprep.subr.mxu0 0.0
        %3864 = vmatpush1.msra.mxu0 0.0
        %3865 = vmatprep.subr.mxu0 0.0
        %3866 = vmatpush1.msra.mxu0 0.0
        %3867 = vmatprep.subr.mxu0 0.0
        %3868 = vmatpush1.msra.mxu0 0.0
        %3869 = vmatprep.mubr.f32.mxu0 0.0
        %3870 = vmatmul.mubr.f32.gmra.mrb[0].mxu0 %v3590
        %v3871 = vpop.f32.mrb[0].mxu0
        %v3872 = vadd.f32 %v3801, %v3871
        %v3873 = vpop.f32.mrb[0].mxu0
        %v3874 = vadd.f32 %v3803, %v3873
        %3875 = vdwg.mxu0
        %3876 = vmatprep.subr.mxu0 0.0
        %3877 = vmatpush1.msra.mxu0 %v2113
        %3878 = vmatprep.subr.mxu0 0.0
        %3879 = vmatpush1.msra.mxu0 %v2116
        %3880 = vmatprep.subr.mxu0 0.0
        %3881 = vmatpush1.msra.mxu0 %v2119
        %3882 = vmatprep.subr.mxu0 0.0
        %3883 = vmatpush1.msra.mxu0 %v2122
        %3884 = vmatprep.subr.mxu0 0.0
        %3885 = vmatpush1.msra.mxu0 %v2125
        %3886 = vmatprep.subr.mxu0 0.0
        %3887 = vmatpush1.msra.mxu0 %v2128
        %3888 = vmatprep.subr.mxu0 0.0
        %3889 = vmatpush1.msra.mxu0 %v2131
        %3890 = vmatprep.subr.mxu0 0.0
        %3891 = vmatpush1.msra.mxu0 %v2134
        %3892 = vmatprep.subr.mxu0 0.0
        %3893 = vmatpush1.msra.mxu0 %v2137
        %3894 = vmatprep.subr.mxu0 0.0
        %3895 = vmatpush1.msra.mxu0 %v2140
        %3896 = vmatprep.subr.mxu0 0.0
        %3897 = vmatpush1.msra.mxu0 %v2143
        %3898 = vmatprep.subr.mxu0 0.0
        %3899 = vmatpush1.msra.mxu0 %v2146
        %3900 = vmatprep.subr.mxu0 0.0
        %3901 = vmatpush1.msra.mxu0 %v2149
        %3902 = vmatprep.subr.mxu0 0.0
        %3903 = vmatpush1.msra.mxu0 %v2152
        %3904 = vmatprep.subr.mxu0 0.0
        %3905 = vmatpush1.msra.mxu0 %v2155
        %3906 = vmatprep.subr.mxu0 0.0
        %3907 = vmatpush1.msra.mxu0 %v2158
        %3908 = vmatprep.subr.mxu0 0.0
        %3909 = vmatpush1.msra.mxu0 %v2161
        %3910 = vmatprep.subr.mxu0 0.0
        %3911 = vmatpush1.msra.mxu0 %v2164
        %3912 = vmatprep.subr.mxu0 0.0
        %3913 = vmatpush1.msra.mxu0 %v2167
        %3914 = vmatprep.subr.mxu0 0.0
        %3915 = vmatpush1.msra.mxu0 %v2170
        %3916 = vmatprep.subr.mxu0 0.0
        %3917 = vmatpush1.msra.mxu0 %v2173
        %3918 = vmatprep.subr.mxu0 0.0
        %3919 = vmatpush1.msra.mxu0 %v2176
        %3920 = vmatprep.subr.mxu0 0.0
        %3921 = vmatpush1.msra.mxu0 %v2179
        %3922 = vmatprep.subr.mxu0 0.0
        %3923 = vmatpush1.msra.mxu0 %v2182
        %3924 = vmatprep.subr.mxu0 0.0
        %3925 = vmatpush1.msra.mxu0 %v2185
        %3926 = vmatprep.subr.mxu0 0.0
        %3927 = vmatpush1.msra.mxu0 %v2188
        %3928 = vmatprep.subr.mxu0 0.0
        %3929 = vmatpush1.msra.mxu0 %v2191
        %3930 = vmatprep.subr.mxu0 0.0
        %3931 = vmatpush1.msra.mxu0 %v2194
        %3932 = vmatprep.subr.mxu0 0.0
        %3933 = vmatpush1.msra.mxu0 %v2197
        %3934 = vmatprep.subr.mxu0 0.0
        %3935 = vmatpush1.msra.mxu0 %v2200
        %3936 = vmatprep.subr.mxu0 0.0
        %3937 = vmatpush1.msra.mxu0 %v2203
        %3938 = vmatprep.subr.mxu0 0.0
        %3939 = vmatpush1.msra.mxu0 %v2206
        %3940 = vmatprep.mubr.f32.mxu0 %v1897
        %3941 = vmatmul.mubr.f32.gmra.mrb[0].mxu0 %v1895
        %v3942 = vpop.f32.mrb[0].mxu0
        %v3943 = vadd.f32 %v3586, %v3942
        %v3944 = vpop.f32.mrb[0].mxu0
        %3945 = vdwg.mxu0
        %3946 = vmatprep.subr.mxu0 0.0
        %3947 = vmatpush1.msra.mxu0 %v2209
        %3948 = vmatprep.subr.mxu0 0.0
        %3949 = vmatpush1.msra.mxu0 %v2212
        %3950 = vmatprep.subr.mxu0 0.0
        %3951 = vmatpush1.msra.mxu0 %v2215
        %3952 = vmatprep.subr.mxu0 0.0
        %3953 = vmatpush1.msra.mxu0 %v2218
        %3954 = vmatprep.subr.mxu0 0.0
        %3955 = vmatpush1.msra.mxu0 %v2221
        %3956 = vmatprep.subr.mxu0 0.0
        %3957 = vmatpush1.msra.mxu0 %v2224
        %3958 = vmatprep.subr.mxu0 0.0
        %3959 = vmatpush1.msra.mxu0 %v2227
        %3960 = vmatprep.subr.mxu0 0.0
        %3961 = vmatpush1.msra.mxu0 %v2230
        %3962 = vmatprep.subr.mxu0 0.0
        %3963 = vmatpush1.msra.mxu0 %v2233
        %3964 = vmatprep.subr.mxu0 0.0
        %3965 = vmatpush1.msra.mxu0 %v2236
        %3966 = vmatprep.subr.mxu0 0.0
        %3967 = vmatpush1.msra.mxu0 %v2239
        %3968 = vmatprep.subr.mxu0 0.0
        %3969 = vmatpush1.msra.mxu0 %v2242
        %3970 = vmatprep.subr.mxu0 0.0
        %3971 = vmatpush1.msra.mxu0 %v2245
        %3972 = vmatprep.subr.mxu0 0.0
        %3973 = vmatpush1.msra.mxu0 %v2248
        %3974 = vmatprep.subr.mxu0 0.0
        %3975 = vmatpush1.msra.mxu0 %v2251
        %3976 = vmatprep.subr.mxu0 0.0
        %3977 = vmatpush1.msra.mxu0 %v2254
        %3978 = vmatprep.subr.mxu0 0.0
        %3979 = vmatpush1.msra.mxu0 %v2257
        %3980 = vmatprep.subr.mxu0 0.0
        %3981 = vmatpush1.msra.mxu0 %v2260
        %3982 = vmatprep.subr.mxu0 0.0
        %3983 = vmatpush1.msra.mxu0 %v2263
        %3984 = vmatprep.subr.mxu0 0.0
        %3985 = vmatpush1.msra.mxu0 %v2266
        %3986 = vmatprep.subr.mxu0 0.0
        %3987 = vmatpush1.msra.mxu0 %v2269
        %3988 = vmatprep.subr.mxu0 0.0
        %3989 = vmatpush1.msra.mxu0 %v2272
        %3990 = vmatprep.subr.mxu0 0.0
        %3991 = vmatpush1.msra.mxu0 %v2275
        %3992 = vmatprep.subr.mxu0 0.0
        %3993 = vmatpush1.msra.mxu0 %v2278
        %3994 = vmatprep.subr.mxu0 0.0
        %3995 = vmatpush1.msra.mxu0 %v2281
        %3996 = vmatprep.subr.mxu0 0.0
        %3997 = vmatpush1.msra.mxu0 %v2284
        %3998 = vmatprep.subr.mxu0 0.0
        %3999 = vmatpush1.msra.mxu0 %v2287
        %4000 = vmatprep.subr.mxu0 0.0
        %4001 = vmatpush1.msra.mxu0 %v2290
        %4002 = vmatprep.subr.mxu0 0.0
        %4003 = vmatpush1.msra.mxu0 %v2293
        %4004 = vmatprep.subr.mxu0 0.0
        %4005 = vmatpush1.msra.mxu0 %v2296
        %4006 = vmatprep.subr.mxu0 0.0
        %4007 = vmatpush1.msra.mxu0 %v2299
        %4008 = vmatprep.subr.mxu0 0.0
        %4009 = vmatpush1.msra.mxu0 %v2302
        %4010 = vmatprep.mubr.f32.mxu0 %v1968
        %4011 = vmatmul.mubr.f32.gmra.mrb[0].mxu0 %v1966
        %v4012 = vpop.f32.mrb[0].mxu0
        %v4013 = vadd.f32 %v3943, %v4012
        %v4014 = vpop.f32.mrb[0].mxu0
        %4015 = vdwg.mxu0
        %4016 = vmatprep.subr.mxu0 0.0
        %4017 = vmatpush1.msra.mxu0 %v2305
        %4018 = vmatprep.subr.mxu0 0.0
        %4019 = vmatpush1.msra.mxu0 %v2308
        %4020 = vmatprep.subr.mxu0 0.0
        %4021 = vmatpush1.msra.mxu0 %v2311
        %4022 = vmatprep.subr.mxu0 0.0
        %4023 = vmatpush1.msra.mxu0 %v2314
        %4024 = vmatprep.subr.mxu0 0.0
        %4025 = vmatpush1.msra.mxu0 %v2317
        %4026 = vmatprep.subr.mxu0 0.0
        %4027 = vmatpush1.msra.mxu0 %v2320
        %4028 = vmatprep.subr.mxu0 0.0
        %4029 = vmatpush1.msra.mxu0 %v2323
        %4030 = vmatprep.subr.mxu0 0.0
        %4031 = vmatpush1.msra.mxu0 %v2326
        %4032 = vmatprep.subr.mxu0 0.0
        %4033 = vmatpush1.msra.mxu0 %v2329
        %4034 = vmatprep.subr.mxu0 0.0
        %4035 = vmatpush1.msra.mxu0 %v2332
        %4036 = vmatprep.subr.mxu0 0.0
        %4037 = vmatpush1.msra.mxu0 %v2335
        %4038 = vmatprep.subr.mxu0 0.0
        %4039 = vmatpush1.msra.mxu0 %v2338
        %4040 = vmatprep.subr.mxu0 0.0
        %4041 = vmatpush1.msra.mxu0 %v2341
        %4042 = vmatprep.subr.mxu0 0.0
        %4043 = vmatpush1.msra.mxu0 %v2344
        %4044 = vmatprep.subr.mxu0 0.0
        %4045 = vmatpush1.msra.mxu0 %v2347
        %4046 = vmatprep.subr.mxu0 0.0
        %4047 = vmatpush1.msra.mxu0 %v2350
        %4048 = vmatprep.subr.mxu0 0.0
        %4049 = vmatpush1.msra.mxu0 %v2353
        %4050 = vmatprep.subr.mxu0 0.0
        %4051 = vmatpush1.msra.mxu0 %v2356
        %4052 = vmatprep.subr.mxu0 0.0
        %4053 = vmatpush1.msra.mxu0 %v2359
        %4054 = vmatprep.subr.mxu0 0.0
        %4055 = vmatpush1.msra.mxu0 %v2362
        %4056 = vmatprep.subr.mxu0 0.0
        %4057 = vmatpush1.msra.mxu0 %v2365
        %4058 = vmatprep.subr.mxu0 0.0
        %4059 = vmatpush1.msra.mxu0 %v2368
        %4060 = vmatprep.subr.mxu0 0.0
        %4061 = vmatpush1.msra.mxu0 %v2371
        %4062 = vmatprep.subr.mxu0 0.0
        %4063 = vmatpush1.msra.mxu0 %v2374
        %4064 = vmatprep.subr.mxu0 0.0
        %4065 = vmatpush1.msra.mxu0 %v2377
        %4066 = vmatprep.subr.mxu0 0.0
        %4067 = vmatpush1.msra.mxu0 %v2380
        %4068 = vmatprep.subr.mxu0 0.0
        %4069 = vmatpush1.msra.mxu0 %v2383
        %4070 = vmatprep.subr.mxu0 0.0
        %4071 = vmatpush1.msra.mxu0 %v2386
        %4072 = vmatprep.subr.mxu0 0.0
        %4073 = vmatpush1.msra.mxu0 %v2389
        %4074 = vmatprep.subr.mxu0 0.0
        %4075 = vmatpush1.msra.mxu0 %v2392
        %4076 = vmatprep.subr.mxu0 0.0
        %4077 = vmatpush1.msra.mxu0 %v2395
        %4078 = vmatprep.subr.mxu0 0.0
        %4079 = vmatpush1.msra.mxu0 %v2398
        %4080 = vmatprep.mubr.f32.mxu0 %v2039
        %4081 = vmatmul.mubr.f32.gmra.mrb[0].mxu0 %v2037
        %v4082 = vpop.f32.mrb[0].mxu0
        %v4083 = vadd.f32 %v4013, %v4082
        %v4084 = vpop.f32.mrb[0].mxu0
        %4085 = vdwg.mxu0
        %4086 = vmatprep.subr.mxu0 0.0
        %4087 = vmatpush1.msra.mxu0 %v2401
        %4088 = vmatprep.subr.mxu0 0.0
        %4089 = vmatpush1.msra.mxu0 %v2404
        %4090 = vmatprep.subr.mxu0 0.0
        %4091 = vmatpush1.msra.mxu0 %v2407
        %4092 = vmatprep.subr.mxu0 0.0
        %4093 = vmatpush1.msra.mxu0 %v2410
        %4094 = vmatprep.subr.mxu0 0.0
        %4095 = vmatpush1.msra.mxu0 %v2413
        %4096 = vmatprep.subr.mxu0 0.0
        %4097 = vmatpush1.msra.mxu0 %v2416
        %4098 = vmatprep.subr.mxu0 0.0
        %4099 = vmatpush1.msra.mxu0 %v2419
        %4100 = vmatprep.subr.mxu0 0.0
        %4101 = vmatpush1.msra.mxu0 %v2422
        %4102 = vmatprep.subr.mxu0 0.0
        %4103 = vmatpush1.msra.mxu0 0.0
        %4104 = vmatprep.subr.mxu0 0.0
        %4105 = vmatpush1.msra.mxu0 0.0
        %4106 = vmatprep.subr.mxu0 0.0
        %4107 = vmatpush1.msra.mxu0 0.0
        %4108 = vmatprep.subr.mxu0 0.0
        %4109 = vmatpush1.msra.mxu0 0.0
        %4110 = vmatprep.subr.mxu0 0.0
        %4111 = vmatpush1.msra.mxu0 0.0
        %4112 = vmatprep.subr.mxu0 0.0
        %4113 = vmatpush1.msra.mxu0 0.0
        %4114 = vmatprep.subr.mxu0 0.0
        %4115 = vmatpush1.msra.mxu0 0.0
        %4116 = vmatprep.subr.mxu0 0.0
        %4117 = vmatpush1.msra.mxu0 0.0
        %4118 = vmatprep.subr.mxu0 0.0
        %4119 = vmatpush1.msra.mxu0 0.0
        %4120 = vmatprep.subr.mxu0 0.0
        %4121 = vmatpush1.msra.mxu0 0.0
        %4122 = vmatprep.subr.mxu0 0.0
        %4123 = vmatpush1.msra.mxu0 0.0
        %4124 = vmatprep.subr.mxu0 0.0
        %4125 = vmatpush1.msra.mxu0 0.0
        %4126 = vmatprep.subr.mxu0 0.0
        %4127 = vmatpush1.msra.mxu0 0.0
        %4128 = vmatprep.subr.mxu0 0.0
        %4129 = vmatpush1.msra.mxu0 0.0
        %4130 = vmatprep.subr.mxu0 0.0
        %4131 = vmatpush1.msra.mxu0 0.0
        %4132 = vmatprep.subr.mxu0 0.0
        %4133 = vmatpush1.msra.mxu0 0.0
        %4134 = vmatprep.subr.mxu0 0.0
        %4135 = vmatpush1.msra.mxu0 0.0
        %4136 = vmatprep.subr.mxu0 0.0
        %4137 = vmatpush1.msra.mxu0 0.0
        %4138 = vmatprep.subr.mxu0 0.0
        %4139 = vmatpush1.msra.mxu0 0.0
        %4140 = vmatprep.subr.mxu0 0.0
        %4141 = vmatpush1.msra.mxu0 0.0
        %4142 = vmatprep.subr.mxu0 0.0
        %4143 = vmatpush1.msra.mxu0 0.0
        %4144 = vmatprep.subr.mxu0 0.0
        %4145 = vmatpush1.msra.mxu0 0.0
        %4146 = vmatprep.subr.mxu0 0.0
        %4147 = vmatpush1.msra.mxu0 0.0
        %4148 = vmatprep.subr.mxu0 0.0
        %4149 = vmatpush1.msra.mxu0 0.0
        %4150 = vmatprep.mubr.f32.mxu0 0.0
        %4151 = vmatmul.mubr.f32.gmra.mrb[0].mxu0 %v3590
        %v4152 = vpop.f32.mrb[0].mxu0
        %v4153 = vadd.f32 %v4083, %v4152
        %v4154 = vpop.f32.mrb[0].mxu0
        %4155 = vdwg.mxu0
        %v4156 = vsel %vm1803, %v1265, 0
        %4158 = vmatprep.subr.mxu0 %v1790
        %4159 = vmatpush1.msra.mxu0 %v1789
        %4160 = vmatprep.subr.mxu0 %v1811
        %4161 = vmatpush1.msra.mxu0 %v1808
        %4162 = vmatprep.subr.mxu0 0.0
        %4163 = vmatpush1.msra.mxu0 0.0
        %4164 = vmatprep.subr.mxu0 0.0
        %4165 = vmatpush1.msra.mxu0 0.0
        %4166 = vmatprep.subr.mxu0 0.0
        %4167 = vmatpush1.msra.mxu0 0.0
        %4168 = vmatprep.subr.mxu0 0.0
        %4169 = vmatpush1.msra.mxu0 0.0
        %4170 = vmatprep.subr.mxu0 0.0
        %4171 = vmatpush1.msra.mxu0 0.0
        %4172 = vmatprep.subr.mxu0 0.0
        %4173 = vmatpush1.msra.mxu0 0.0
        %4174 = vmatprep.subr.mxu0 0.0
        %4175 = vmatpush1.msra.mxu0 0.0
        %4176 = vmatprep.subr.mxu0 0.0
        %4177 = vmatpush1.msra.mxu0 0.0
        %4178 = vmatprep.subr.mxu0 0.0
        %4179 = vmatpush1.msra.mxu0 0.0
        %4180 = vmatprep.subr.mxu0 0.0
        %4181 = vmatpush1.msra.mxu0 0.0
        %4182 = vmatprep.subr.mxu0 0.0
        %4183 = vmatpush1.msra.mxu0 0.0
        %4184 = vmatprep.subr.mxu0 0.0
        %4185 = vmatpush1.msra.mxu0 0.0
        %4186 = vmatprep.subr.mxu0 0.0
        %4187 = vmatpush1.msra.mxu0 0.0
        %4188 = vmatprep.subr.mxu0 0.0
        %4189 = vmatpush1.msra.mxu0 0.0
        %4190 = vmatprep.subr.mxu0 0.0
        %4191 = vmatpush1.msra.mxu0 0.0
        %4192 = vmatprep.subr.mxu0 0.0
        %4193 = vmatpush1.msra.mxu0 0.0
        %4194 = vmatprep.subr.mxu0 0.0
        %4195 = vmatpush1.msra.mxu0 0.0
        %4196 = vmatprep.subr.mxu0 0.0
        %4197 = vmatpush1.msra.mxu0 0.0
        %4198 = vmatprep.subr.mxu0 0.0
        %4199 = vmatpush1.msra.mxu0 0.0
        %4200 = vmatprep.subr.mxu0 0.0
        %4201 = vmatpush1.msra.mxu0 0.0
        %4202 = vmatprep.subr.mxu0 0.0
        %4203 = vmatpush1.msra.mxu0 0.0
        %4204 = vmatprep.subr.mxu0 0.0
        %4205 = vmatpush1.msra.mxu0 0.0
        %4206 = vmatprep.subr.mxu0 0.0
        %4207 = vmatpush1.msra.mxu0 0.0
        %4208 = vmatprep.subr.mxu0 0.0
        %4209 = vmatpush1.msra.mxu0 0.0
        %4210 = vmatprep.subr.mxu0 0.0
        %4211 = vmatpush1.msra.mxu0 0.0
        %4212 = vmatprep.subr.mxu0 0.0
        %4213 = vmatpush1.msra.mxu0 0.0
        %4214 = vmatprep.subr.mxu0 0.0
        %4215 = vmatpush1.msra.mxu0 0.0
        %4216 = vmatprep.subr.mxu0 0.0
        %4217 = vmatpush1.msra.mxu0 0.0
        %4218 = vmatprep.subr.mxu0 0.0
        %4219 = vmatpush1.msra.mxu0 0.0
        %4220 = vmatprep.subr.mxu0 0.0
        %4221 = vmatpush1.msra.mxu0 0.0
        %4222 = vmatprep.mubr.f32.mxu0 0.0
        %4223 = vmatmul.mubr.f32.gmra.mrb[0].mxu0 %v4156
        %v4224 = vpop.f32.mrb[0].mxu0
        %v4225 = vadd.f32 0.0, %v4224
        %v4226 = vpop.f32.mrb[0].mxu0
        %v4227 = vadd.f32 0.0, %v4226
        %4228 = vdwg.mxu0
        %4229 = vmatprep.subr.mxu0 %v1792
        %4230 = vmatpush1.msra.mxu0 %v1791
        %4231 = vmatprep.subr.mxu0 %v1817
        %4232 = vmatpush1.msra.mxu0 %v1814
        %4233 = vmatprep.subr.mxu0 0.0
        %4234 = vmatpush1.msra.mxu0 0.0
        %4235 = vmatprep.subr.mxu0 0.0
        %4236 = vmatpush1.msra.mxu0 0.0
        %4237 = vmatprep.subr.mxu0 0.0
        %4238 = vmatpush1.msra.mxu0 0.0
        %4239 = vmatprep.subr.mxu0 0.0
        %4240 = vmatpush1.msra.mxu0 0.0
        %4241 = vmatprep.subr.mxu0 0.0
        %4242 = vmatpush1.msra.mxu0 0.0
        %4243 = vmatprep.subr.mxu0 0.0
        %4244 = vmatpush1.msra.mxu0 0.0
        %4245 = vmatprep.subr.mxu0 0.0
        %4246 = vmatpush1.msra.mxu0 0.0
        %4247 = vmatprep.subr.mxu0 0.0
        %4248 = vmatpush1.msra.mxu0 0.0
        %4249 = vmatprep.subr.mxu0 0.0
        %4250 = vmatpush1.msra.mxu0 0.0
        %4251 = vmatprep.subr.mxu0 0.0
        %4252 = vmatpush1.msra.mxu0 0.0
        %4253 = vmatprep.subr.mxu0 0.0
        %4254 = vmatpush1.msra.mxu0 0.0
        %4255 = vmatprep.subr.mxu0 0.0
        %4256 = vmatpush1.msra.mxu0 0.0
        %4257 = vmatprep.subr.mxu0 0.0
        %4258 = vmatpush1.msra.mxu0 0.0
        %4259 = vmatprep.subr.mxu0 0.0
        %4260 = vmatpush1.msra.mxu0 0.0
        %4261 = vmatprep.subr.mxu0 0.0
        %4262 = vmatpush1.msra.mxu0 0.0
        %4263 = vmatprep.subr.mxu0 0.0
        %4264 = vmatpush1.msra.mxu0 0.0
        %4265 = vmatprep.subr.mxu0 0.0
        %4266 = vmatpush1.msra.mxu0 0.0
        %4267 = vmatprep.subr.mxu0 0.0
        %4268 = vmatpush1.msra.mxu0 0.0
        %4269 = vmatprep.subr.mxu0 0.0
        %4270 = vmatpush1.msra.mxu0 0.0
        %4271 = vmatprep.subr.mxu0 0.0
        %4272 = vmatpush1.msra.mxu0 0.0
        %4273 = vmatprep.subr.mxu0 0.0
        %4274 = vmatpush1.msra.mxu0 0.0
        %4275 = vmatprep.subr.mxu0 0.0
        %4276 = vmatpush1.msra.mxu0 0.0
        %4277 = vmatprep.subr.mxu0 0.0
        %4278 = vmatpush1.msra.mxu0 0.0
        %4279 = vmatprep.subr.mxu0 0.0
        %4280 = vmatpush1.msra.mxu0 0.0
        %4281 = vmatprep.subr.mxu0 0.0
        %4282 = vmatpush1.msra.mxu0 0.0
        %4283 = vmatprep.subr.mxu0 0.0
        %4284 = vmatpush1.msra.mxu0 0.0
        %4285 = vmatprep.subr.mxu0 0.0
        %4286 = vmatpush1.msra.mxu0 0.0
        %4287 = vmatprep.subr.mxu0 0.0
        %4288 = vmatpush1.msra.mxu0 0.0
        %4289 = vmatprep.subr.mxu0 0.0
        %4290 = vmatpush1.msra.mxu0 0.0
        %4291 = vmatprep.subr.mxu0 0.0
        %4292 = vmatpush1.msra.mxu0 0.0
        %4293 = vmatprep.mubr.f32.mxu0 0.0
        %4294 = vmatmul.mubr.f32.gmra.mrb[0].mxu0 %v4156
        %v4295 = vpop.f32.mrb[0].mxu0
        %v4296 = vadd.f32 0.0, %v4295
        %v4297 = vpop.f32.mrb[0].mxu0
        %v4298 = vadd.f32 0.0, %v4297
        %4299 = vdwg.mxu0
        %4300 = vmatprep.subr.mxu0 %v1794
        %4301 = vmatpush1.msra.mxu0 %v1793
        %4302 = vmatprep.subr.mxu0 %v1823
        %4303 = vmatpush1.msra.mxu0 %v1820
        %4304 = vmatprep.subr.mxu0 0.0
        %4305 = vmatpush1.msra.mxu0 0.0
        %4306 = vmatprep.subr.mxu0 0.0
        %4307 = vmatpush1.msra.mxu0 0.0
        %4308 = vmatprep.subr.mxu0 0.0
        %4309 = vmatpush1.msra.mxu0 0.0
        %4310 = vmatprep.subr.mxu0 0.0
        %4311 = vmatpush1.msra.mxu0 0.0
        %4312 = vmatprep.subr.mxu0 0.0
        %4313 = vmatpush1.msra.mxu0 0.0
        %4314 = vmatprep.subr.mxu0 0.0
        %4315 = vmatpush1.msra.mxu0 0.0
        %4316 = vmatprep.subr.mxu0 0.0
        %4317 = vmatpush1.msra.mxu0 0.0
        %4318 = vmatprep.subr.mxu0 0.0
        %4319 = vmatpush1.msra.mxu0 0.0
        %4320 = vmatprep.subr.mxu0 0.0
        %4321 = vmatpush1.msra.mxu0 0.0
        %4322 = vmatprep.subr.mxu0 0.0
        %4323 = vmatpush1.msra.mxu0 0.0
        %4324 = vmatprep.subr.mxu0 0.0
        %4325 = vmatpush1.msra.mxu0 0.0
        %4326 = vmatprep.subr.mxu0 0.0
        %4327 = vmatpush1.msra.mxu0 0.0
        %4328 = vmatprep.subr.mxu0 0.0
        %4329 = vmatpush1.msra.mxu0 0.0
        %4330 = vmatprep.subr.mxu0 0.0
        %4331 = vmatpush1.msra.mxu0 0.0
        %4332 = vmatprep.subr.mxu0 0.0
        %4333 = vmatpush1.msra.mxu0 0.0
        %4334 = vmatprep.subr.mxu0 0.0
        %4335 = vmatpush1.msra.mxu0 0.0
        %4336 = vmatprep.subr.mxu0 0.0
        %4337 = vmatpush1.msra.mxu0 0.0
        %4338 = vmatprep.subr.mxu0 0.0
        %4339 = vmatpush1.msra.mxu0 0.0
        %4340 = vmatprep.subr.mxu0 0.0
        %4341 = vmatpush1.msra.mxu0 0.0
        %4342 = vmatprep.subr.mxu0 0.0
        %4343 = vmatpush1.msra.mxu0 0.0
        %4344 = vmatprep.subr.mxu0 0.0
        %4345 = vmatpush1.msra.mxu0 0.0
        %4346 = vmatprep.subr.mxu0 0.0
        %4347 = vmatpush1.msra.mxu0 0.0
        %4348 = vmatprep.subr.mxu0 0.0
        %4349 = vmatpush1.msra.mxu0 0.0
        %4350 = vmatprep.subr.mxu0 0.0
        %4351 = vmatpush1.msra.mxu0 0.0
        %4352 = vmatprep.subr.mxu0 0.0
        %4353 = vmatpush1.msra.mxu0 0.0
        %4354 = vmatprep.subr.mxu0 0.0
        %4355 = vmatpush1.msra.mxu0 0.0
        %4356 = vmatprep.subr.mxu0 0.0
        %4357 = vmatpush1.msra.mxu0 0.0
        %4358 = vmatprep.subr.mxu0 0.0
        %4359 = vmatpush1.msra.mxu0 0.0
        %4360 = vmatprep.subr.mxu0 0.0
        %4361 = vmatpush1.msra.mxu0 0.0
        %4362 = vmatprep.subr.mxu0 0.0
        %4363 = vmatpush1.msra.mxu0 0.0
        %4364 = vmatprep.mubr.f32.mxu0 0.0
        %4365 = vmatmul.mubr.f32.gmra.mrb[0].mxu0 %v4156
        %v4366 = vpop.f32.mrb[0].mxu0
        %v4367 = vadd.f32 0.0, %v4366
        %v4368 = vpop.f32.mrb[0].mxu0
        %v4369 = vadd.f32 0.0, %v4368
        %4370 = vdwg.mxu0
        %4371 = vmatprep.subr.mxu0 0.0
        %4372 = vmatpush1.msra.mxu0 %v1795
        %4373 = vmatprep.subr.mxu0 0.0
        %4374 = vmatpush1.msra.mxu0 %v1826
        %4375 = vmatprep.subr.mxu0 0.0
        %4376 = vmatpush1.msra.mxu0 0.0
        %4377 = vmatprep.subr.mxu0 0.0
        %4378 = vmatpush1.msra.mxu0 0.0
        %4379 = vmatprep.subr.mxu0 0.0
        %4380 = vmatpush1.msra.mxu0 0.0
        %4381 = vmatprep.subr.mxu0 0.0
        %4382 = vmatpush1.msra.mxu0 0.0
        %4383 = vmatprep.subr.mxu0 0.0
        %4384 = vmatpush1.msra.mxu0 0.0
        %4385 = vmatprep.subr.mxu0 0.0
        %4386 = vmatpush1.msra.mxu0 0.0
        %4387 = vmatprep.subr.mxu0 0.0
        %4388 = vmatpush1.msra.mxu0 0.0
        %4389 = vmatprep.subr.mxu0 0.0
        %4390 = vmatpush1.msra.mxu0 0.0
        %4391 = vmatprep.subr.mxu0 0.0
        %4392 = vmatpush1.msra.mxu0 0.0
        %4393 = vmatprep.subr.mxu0 0.0
        %4394 = vmatpush1.msra.mxu0 0.0
        %4395 = vmatprep.subr.mxu0 0.0
        %4396 = vmatpush1.msra.mxu0 0.0
        %4397 = vmatprep.subr.mxu0 0.0
        %4398 = vmatpush1.msra.mxu0 0.0
        %4399 = vmatprep.subr.mxu0 0.0
        %4400 = vmatpush1.msra.mxu0 0.0
        %4401 = vmatprep.subr.mxu0 0.0
        %4402 = vmatpush1.msra.mxu0 0.0
        %4403 = vmatprep.subr.mxu0 0.0
        %4404 = vmatpush1.msra.mxu0 0.0
        %4405 = vmatprep.subr.mxu0 0.0
        %4406 = vmatpush1.msra.mxu0 0.0
        %4407 = vmatprep.subr.mxu0 0.0
        %4408 = vmatpush1.msra.mxu0 0.0
        %4409 = vmatprep.subr.mxu0 0.0
        %4410 = vmatpush1.msra.mxu0 0.0
        %4411 = vmatprep.subr.mxu0 0.0
        %4412 = vmatpush1.msra.mxu0 0.0
        %4413 = vmatprep.subr.mxu0 0.0
        %4414 = vmatpush1.msra.mxu0 0.0
        %4415 = vmatprep.subr.mxu0 0.0
        %4416 = vmatpush1.msra.mxu0 0.0
        %4417 = vmatprep.subr.mxu0 0.0
        %4418 = vmatpush1.msra.mxu0 0.0
        %4419 = vmatprep.subr.mxu0 0.0
        %4420 = vmatpush1.msra.mxu0 0.0
        %4421 = vmatprep.subr.mxu0 0.0
        %4422 = vmatpush1.msra.mxu0 0.0
        %4423 = vmatprep.subr.mxu0 0.0
        %4424 = vmatpush1.msra.mxu0 0.0
        %4425 = vmatprep.subr.mxu0 0.0
        %4426 = vmatpush1.msra.mxu0 0.0
        %4427 = vmatprep.subr.mxu0 0.0
        %4428 = vmatpush1.msra.mxu0 0.0
        %4429 = vmatprep.subr.mxu0 0.0
        %4430 = vmatpush1.msra.mxu0 0.0
        %4431 = vmatprep.subr.mxu0 0.0
        %4432 = vmatpush1.msra.mxu0 0.0
        %4433 = vmatprep.subr.mxu0 0.0
        %4434 = vmatpush1.msra.mxu0 0.0
        %4435 = vmatprep.mubr.f32.mxu0 0.0
        %4436 = vmatmul.mubr.f32.gmra.mrb[0].mxu0 %v4156
        %v4437 = vpop.f32.mrb[0].mxu0
        %v4438 = vadd.f32 0.0, %v4437
        %v4439 = vpop.f32.mrb[0].mxu0
        %4440 = vdwg.mxu0
        %s4441 = scalar_lea.vmem [#allocation7], 4992
        %v4442 = vld [vmem:[%s4441] sm:$0xff]
        %v4443 = vld [vmem:[%s4441 + $0x8] sm:$0xff]
        %v4444 = vld [vmem:[%s4441 + $0x10] sm:$0xff]
        %v4445 = vld [vmem:[%s4441 + $0x18] sm:$0xff]
        %v4446 = vld [vmem:[%s4441 + $0x20] sm:$0xff]
        %v4447 = vld [vmem:[%s4441 + $0x28] sm:$0xff]
        %v4448 = vld [vmem:[%s4441 + $0x30] sm:$0xff]
        %v4449 = vld [vmem:[%s4441 + $0x38] sm:$0xff]
        %v4450 = vld [vmem:[%s4441 + $0x40] sm:$0xff]
        %v4451 = vld [vmem:[%s4441 + $0x48] sm:$0xff]
        %v4452 = vld [vmem:[%s4441 + $0x50] sm:$0xff]
        %v4453 = vld [vmem:[%s4441 + $0x58] sm:$0xff]
        %v4454 = vld [vmem:[%s4441 + $0x60] sm:$0xff]
        %v4455 = vld [vmem:[%s4441 + $0x68] sm:$0xff]
        %v4456 = vld [vmem:[%s4441 + $0x70] sm:$0xff]
        %v4457 = vld [vmem:[%s4441 + $0x78] sm:$0xff]
        %v4458 = vld [vmem:[%s4441 + $0x80] sm:$0xff]
        %v4459 = vld [vmem:[%s4441 + $0x88] sm:$0xff]
        %v4460 = vld [vmem:[%s4441 + $0x90] sm:$0xff]
        %v4461 = vld [vmem:[%s4441 + $0x98] sm:$0xff]
        %v4462 = vld [vmem:[%s4441 + $0xa0] sm:$0xff]
        %v4463 = vld [vmem:[%s4441 + $0xa8] sm:$0xff]
        %v4464 = vld [vmem:[%s4441 + $0xb0] sm:$0xff]
        %v4465 = vld [vmem:[%s4441 + $0xb8] sm:$0xff]
        %v4466 = vld [vmem:[%s4441 + $0xc0] sm:$0xff]
        %v4467 = vld [vmem:[%s4441 + $0xc8] sm:$0xff]
        %v4468 = vld [vmem:[%s4441 + $0xd0] sm:$0xff]
        %v4469 = vld [vmem:[%s4441 + $0xd8] sm:$0xff]
        %v4470 = vld [vmem:[%s4441 + $0xe0] sm:$0xff]
        %v4471 = vld [vmem:[%s4441 + $0xe8] sm:$0xff]
        %v4472 = vld [vmem:[%s4441 + $0xf0] sm:$0xff]
        %v4473 = vld [vmem:[%s4441 + $0xf8] sm:$0xff]
        %v4474 = vld [vmem:[%s4441 + $0x100] sm:$0xff]
        %v4475 = vld [vmem:[%s4441 + $0x108] sm:$0xff]
        %v4476 = vld [vmem:[%s4441 + $0x110] sm:$0xff]
        %v4477 = vld [vmem:[%s4441 + $0x118] sm:$0xff]
        %v4478 = vld [vmem:[%s4441 + $0x120] sm:$0xff]
        %v4479 = vld [vmem:[%s4441 + $0x128] sm:$0xff]
        %v4480 = vld [vmem:[%s4441 + $0x130] sm:$0xff]
        %v4481 = vld [vmem:[%s4441 + $0x138] sm:$0xff]
        %v4482 = vld [vmem:[%s4441 + $0x140] sm:$0xff]
        %v4483 = vld [vmem:[%s4441 + $0x148] sm:$0xff]
        %v4484 = vld [vmem:[%s4441 + $0x150] sm:$0xff]
        %v4485 = vld [vmem:[%s4441 + $0x158] sm:$0xff]
        %v4486 = vld [vmem:[%s4441 + $0x160] sm:$0xff]
        %v4487 = vld [vmem:[%s4441 + $0x168] sm:$0xff]
        %v4488 = vld [vmem:[%s4441 + $0x170] sm:$0xff]
        %v4489 = vld [vmem:[%s4441 + $0x178] sm:$0xff]
        %v4490 = vld [vmem:[%s4441 + $0x180] sm:$0xff]
        %v4491 = vld [vmem:[%s4441 + $0x188] sm:$0xff]
        %v4492 = vld [vmem:[%s4441 + $0x190] sm:$0xff]
        %v4493 = vld [vmem:[%s4441 + $0x198] sm:$0xff]
        %v4494 = vld [vmem:[%s4441 + $0x1a0] sm:$0xff]
        %v4495 = vld [vmem:[%s4441 + $0x1a8] sm:$0xff]
        %v4496 = vld [vmem:[%s4441 + $0x1b0] sm:$0xff]
        %v4497 = vld [vmem:[%s4441 + $0x1b8] sm:$0xff]
        %v4498 = vld [vmem:[%s4441 + $0x1c0] sm:$0xff]
        %v4499 = vld [vmem:[%s4441 + $0x1c8] sm:$0xff]
        %v4500 = vld [vmem:[%s4441 + $0x1d0] sm:$0xff]
        %v4501 = vld [vmem:[%s4441 + $0x1d8] sm:$0xff]
        %v4502 = vld [vmem:[%s4441 + $0x1e0] sm:$0xff]
        %v4503 = vld [vmem:[%s4441 + $0x1e8] sm:$0xff]
        %v4504 = vld [vmem:[%s4441 + $0x1f0] sm:$0xff]
        %v4505 = vld [vmem:[%s4441 + $0x1f8] sm:$0xff]
        %v4506 = vld [vmem:[%s4441 + $0x200] sm:$0xff]
        %v4507 = vld [vmem:[%s4441 + $0x208] sm:$0xff]
        %v4508 = vld [vmem:[%s4441 + $0x210] sm:$0xff]
        %v4509 = vld [vmem:[%s4441 + $0x218] sm:$0xff]
        %v4510 = vld [vmem:[%s4441 + $0x220] sm:$0xff]
        %v4511 = vld [vmem:[%s4441 + $0x228] sm:$0xff]
        %v4512 = vld [vmem:[%s4441 + $0x230] sm:$0xff]
        %v4513 = vld [vmem:[%s4441 + $0x238] sm:$0xff]
        %v4514 = vld [vmem:[%s4441 + $0x240] sm:$0xff]
        %v4515 = vld [vmem:[%s4441 + $0x248] sm:$0xff]
        %v4516 = vld [vmem:[%s4441 + $0x250] sm:$0xff]
        %v4517 = vld [vmem:[%s4441 + $0x258] sm:$0xff]
        %v4518 = vld [vmem:[%s4441 + $0x260] sm:$0xff]
        %v4519 = vld [vmem:[%s4441 + $0x268] sm:$0xff]
        %v4520 = vld [vmem:[%s4441 + $0x270] sm:$0xff]
        %v4521 = vld [vmem:[%s4441 + $0x278] sm:$0xff]
        %v4522 = vld [vmem:[%s4441 + $0x280] sm:$0xff]
        %v4523 = vld [vmem:[%s4441 + $0x288] sm:$0xff]
        %v4524 = vld [vmem:[%s4441 + $0x290] sm:$0xff]
        %v4525 = vld [vmem:[%s4441 + $0x298] sm:$0xff]
        %v4526 = vld [vmem:[%s4441 + $0x2a0] sm:$0xff]
        %v4527 = vld [vmem:[%s4441 + $0x2a8] sm:$0xff]
        %v4528 = vld [vmem:[%s4441 + $0x2b0] sm:$0xff]
        %v4529 = vld [vmem:[%s4441 + $0x2b8] sm:$0xff]
        %v4530 = vld [vmem:[%s4441 + $0x2c0] sm:$0xff]
        %v4531 = vld [vmem:[%s4441 + $0x2c8] sm:$0xff]
        %v4532 = vld [vmem:[%s4441 + $0x2d0] sm:$0xff]
        %v4533 = vld [vmem:[%s4441 + $0x2d8] sm:$0xff]
        %v4534 = vld [vmem:[%s4441 + $0x2e0] sm:$0xff]
        %v4535 = vld [vmem:[%s4441 + $0x2e8] sm:$0xff]
        %v4536 = vld [vmem:[%s4441 + $0x2f0] sm:$0xff]
        %v4537 = vld [vmem:[%s4441 + $0x2f8] sm:$0xff]
        %v4538 = vld [vmem:[%s4441 + $0x300] sm:$0xff]
        %v4539 = vld [vmem:[%s4441 + $0x308] sm:$0xff]
        %v4540 = vld [vmem:[%s4441 + $0x310] sm:$0xff]
        %v4541 = vld [vmem:[%s4441 + $0x318] sm:$0xff]
        %v4542 = vld [vmem:[%s4441 + $0x320] sm:$0xff]
        %v4543 = vld [vmem:[%s4441 + $0x328] sm:$0xff]
        %v4544 = vld [vmem:[%s4441 + $0x330] sm:$0xff]
        %v4545 = vld [vmem:[%s4441 + $0x338] sm:$0xff]
        %v4546 = vld [vmem:[%s4441 + $0x340] sm:$0xff]
        %v4547 = vld [vmem:[%s4441 + $0x348] sm:$0xff]
        %v4548 = vld [vmem:[%s4441 + $0x350] sm:$0xff]
        %v4549 = vld [vmem:[%s4441 + $0x358] sm:$0xff]
        %v4550 = vld [vmem:[%s4441 + $0x360] sm:$0xff]
        %v4551 = vld [vmem:[%s4441 + $0x368] sm:$0xff]
        %v4552 = vld [vmem:[%s4441 + $0x370] sm:$0xff]
        %v4553 = vld [vmem:[%s4441 + $0x378] sm:$0xff]
        %v4554 = vld [vmem:[%s4441 + $0x380] sm:$0xff]
        %v4555 = vld [vmem:[%s4441 + $0x388] sm:$0xff]
        %v4556 = vld [vmem:[%s4441 + $0x390] sm:$0xff]
        %v4557 = vld [vmem:[%s4441 + $0x398] sm:$0xff]
        %v4558 = vld [vmem:[%s4441 + $0x3a0] sm:$0xff]
        %v4559 = vld [vmem:[%s4441 + $0x3a8] sm:$0xff]
        %v4560 = vld [vmem:[%s4441 + $0x3b0] sm:$0xff]
        %v4561 = vld [vmem:[%s4441 + $0x3b8] sm:$0xff]
        %v4562 = vld [vmem:[%s4441 + $0x3c0] sm:$0xff]
        %v4563 = vld [vmem:[%s4441 + $0x3c8] sm:$0xff]
        %v4564 = vld [vmem:[%s4441 + $0x3d0] sm:$0xff]
        %v4565 = vld [vmem:[%s4441 + $0x3d8] sm:$0xff]
        %v4566 = vld [vmem:[%s4441 + $0x3e0] sm:$0xff]
        %v4567 = vld [vmem:[%s4441 + $0x3e8] sm:$0xff]
        %v4568 = vld [vmem:[%s4441 + $0x3f0] sm:$0xff]
        %v4569 = vld [vmem:[%s4441 + $0x3f8] sm:$0xff]
        %v4570 = vld [vmem:[%s4441 + $0x400] sm:$0xff]
        %v4571 = vld [vmem:[%s4441 + $0x408] sm:$0xff]
        %v4572 = vld [vmem:[%s4441 + $0x410] sm:$0xff]
        %v4573 = vld [vmem:[%s4441 + $0x418] sm:$0xff]
        %v4574 = vld [vmem:[%s4441 + $0x420] sm:$0xff]
        %v4575 = vld [vmem:[%s4441 + $0x428] sm:$0xff]
        %v4576 = vld [vmem:[%s4441 + $0x430] sm:$0xff]
        %v4577 = vld [vmem:[%s4441 + $0x438] sm:$0xff]
        %v4578 = vld [vmem:[%s4441 + $0x440] sm:$0xff]
        %v4579 = vld [vmem:[%s4441 + $0x448] sm:$0xff]
        %v4580 = vld [vmem:[%s4441 + $0x450] sm:$0xff]
        %v4581 = vld [vmem:[%s4441 + $0x458] sm:$0xff]
        %v4582 = vld [vmem:[%s4441 + $0x460] sm:$0xff]
        %v4583 = vld [vmem:[%s4441 + $0x468] sm:$0xff]
        %v4584 = vld [vmem:[%s4441 + $0x470] sm:$0xff]
        %v4585 = vld [vmem:[%s4441 + $0x478] sm:$0xff]
        %v4586 = vld [vmem:[%s4441 + $0x480] sm:$0xff]
        %v4587 = vld [vmem:[%s4441 + $0x488] sm:$0xff]
        %v4588 = vld [vmem:[%s4441 + $0x490] sm:$0xff]
        %v4589 = vld [vmem:[%s4441 + $0x498] sm:$0xff]
        %v4590 = vld [vmem:[%s4441 + $0x4a0] sm:$0xff]
        %v4591 = vld [vmem:[%s4441 + $0x4a8] sm:$0xff]
        %v4592 = vld [vmem:[%s4441 + $0x4b0] sm:$0xff]
        %v4593 = vld [vmem:[%s4441 + $0x4b8] sm:$0xff]
        %v4594 = vld [vmem:[%s4441 + $0x4c0] sm:$0xff]
        %v4595 = vld [vmem:[%s4441 + $0x4c8] sm:$0xff]
        %v4596 = vld [vmem:[%s4441 + $0x4d0] sm:$0xff]
        %v4597 = vld [vmem:[%s4441 + $0x4d8] sm:$0xff]
        %v4598 = vld [vmem:[%s4441 + $0x4e0] sm:$0xff]
        %v4599 = vld [vmem:[%s4441 + $0x4e8] sm:$0xff]
        %v4600 = vld [vmem:[%s4441 + $0x4f0] sm:$0xff]
        %v4601 = vld [vmem:[%s4441 + $0x4f8] sm:$0xff]
        %v4602 = vld [vmem:[%s4441 + $0x500] sm:$0xff]
        %v4603 = vld [vmem:[%s4441 + $0x508] sm:$0xff]
        %v4604 = vld [vmem:[%s4441 + $0x510] sm:$0xff]
        %v4605 = vld [vmem:[%s4441 + $0x518] sm:$0xff]
        %v4606 = vld [vmem:[%s4441 + $0x520] sm:$0xff]
        %v4607 = vld [vmem:[%s4441 + $0x528] sm:$0xff]
        %v4608 = vld [vmem:[%s4441 + $0x530] sm:$0xff]
        %v4609 = vld [vmem:[%s4441 + $0x538] sm:$0xff]
        %v4610 = vld [vmem:[%s4441 + $0x540] sm:$0xff]
        %v4611 = vld [vmem:[%s4441 + $0x548] sm:$0xff]
        %v4612 = vld [vmem:[%s4441 + $0x550] sm:$0xff]
        %v4613 = vld [vmem:[%s4441 + $0x558] sm:$0xff]
        %v4614 = vld [vmem:[%s4441 + $0x560] sm:$0xff]
        %v4615 = vld [vmem:[%s4441 + $0x568] sm:$0xff]
        %v4616 = vld [vmem:[%s4441 + $0x570] sm:$0xff]
        %v4617 = vld [vmem:[%s4441 + $0x578] sm:$0xff]
        %v4618 = vld [vmem:[%s4441 + $0x580] sm:$0xff]
        %v4619 = vld [vmem:[%s4441 + $0x588] sm:$0xff]
        %v4620 = vld [vmem:[%s4441 + $0x590] sm:$0xff]
        %v4621 = vld [vmem:[%s4441 + $0x598] sm:$0xff]
        %v4622 = vld [vmem:[%s4441 + $0x5a0] sm:$0xff]
        %v4623 = vld [vmem:[%s4441 + $0x5a8] sm:$0xff]
        %v4624 = vld [vmem:[%s4441 + $0x5b0] sm:$0xff]
        %v4625 = vld [vmem:[%s4441 + $0x5b8] sm:$0xff]
        %v4626 = vld [vmem:[%s4441 + $0x5c0] sm:$0xff]
        %v4627 = vld [vmem:[%s4441 + $0x5c8] sm:$0xff]
        %v4628 = vld [vmem:[%s4441 + $0x5d0] sm:$0xff]
        %v4629 = vld [vmem:[%s4441 + $0x5d8] sm:$0xff]
        %v4630 = vld [vmem:[%s4441 + $0x5e0] sm:$0xff]
        %v4631 = vld [vmem:[%s4441 + $0x5e8] sm:$0xff]
        %v4632 = vld [vmem:[%s4441 + $0x5f0] sm:$0xff]
        %v4633 = vld [vmem:[%s4441 + $0x5f8] sm:$0xff]
        %v4634 = vld [vmem:[%s4441 + $0x600] sm:$0xff]
        %v4635 = vld [vmem:[%s4441 + $0x608] sm:$0xff]
        %v4636 = vld [vmem:[%s4441 + $0x610] sm:$0xff]
        %v4637 = vld [vmem:[%s4441 + $0x618] sm:$0xff]
        %v4638 = vld [vmem:[%s4441 + $0x620] sm:$0xff]
        %v4639 = vld [vmem:[%s4441 + $0x628] sm:$0xff]
        %v4640 = vld [vmem:[%s4441 + $0x630] sm:$0xff]
        %v4641 = vld [vmem:[%s4441 + $0x638] sm:$0xff]
        %v4642 = vld [vmem:[%s4441 + $0x640] sm:$0xff]
        %v4643 = vld [vmem:[%s4441 + $0x648] sm:$0xff]
        %v4644 = vld [vmem:[%s4441 + $0x650] sm:$0xff]
        %v4645 = vld [vmem:[%s4441 + $0x658] sm:$0xff]
        %v4646 = vld [vmem:[%s4441 + $0x660] sm:$0xff]
        %v4647 = vld [vmem:[%s4441 + $0x668] sm:$0xff]
        %v4648 = vld [vmem:[%s4441 + $0x670] sm:$0xff]
        %v4649 = vld [vmem:[%s4441 + $0x678] sm:$0xff]
        %v4650 = vld [vmem:[%s4441 + $0x680] sm:$0xff]
        %v4651 = vld [vmem:[%s4441 + $0x688] sm:$0xff]
        %v4652 = vld [vmem:[%s4441 + $0x690] sm:$0xff]
        %v4653 = vld [vmem:[%s4441 + $0x698] sm:$0xff]
        %v4654 = vld [vmem:[%s4441 + $0x6a0] sm:$0xff]
        %v4655 = vld [vmem:[%s4441 + $0x6a8] sm:$0xff]
        %v4656 = vld [vmem:[%s4441 + $0x6b0] sm:$0xff]
        %v4657 = vld [vmem:[%s4441 + $0x6b8] sm:$0xff]
        %v4658 = vld [vmem:[%s4441 + $0x6c0] sm:$0xff]
        %v4659 = vld [vmem:[%s4441 + $0x6c8] sm:$0xff]
        %v4660 = vld [vmem:[%s4441 + $0x6d0] sm:$0xff]
        %v4661 = vld [vmem:[%s4441 + $0x6d8] sm:$0xff]
        %v4662 = vld [vmem:[%s4441 + $0x6e0] sm:$0xff]
        %v4663 = vld [vmem:[%s4441 + $0x6e8] sm:$0xff]
        %v4664 = vld [vmem:[%s4441 + $0x6f0] sm:$0xff]
        %v4665 = vld [vmem:[%s4441 + $0x6f8] sm:$0xff]
        %v4666 = vld [vmem:[%s4441 + $0x700] sm:$0xff]
        %v4667 = vld [vmem:[%s4441 + $0x708] sm:$0xff]
        %v4668 = vld [vmem:[%s4441 + $0x710] sm:$0xff]
        %v4669 = vld [vmem:[%s4441 + $0x718] sm:$0xff]
        %v4670 = vld [vmem:[%s4441 + $0x720] sm:$0xff]
        %v4671 = vld [vmem:[%s4441 + $0x728] sm:$0xff]
        %v4672 = vld [vmem:[%s4441 + $0x730] sm:$0xff]
        %v4673 = vld [vmem:[%s4441 + $0x738] sm:$0xff]
        %v4674 = vld [vmem:[%s4441 + $0x740] sm:$0xff]
        %v4675 = vld [vmem:[%s4441 + $0x748] sm:$0xff]
        %v4676 = vld [vmem:[%s4441 + $0x750] sm:$0xff]
        %v4677 = vld [vmem:[%s4441 + $0x758] sm:$0xff]
        %v4678 = vld [vmem:[%s4441 + $0x760] sm:$0xff]
        %v4679 = vld [vmem:[%s4441 + $0x768] sm:$0xff]
        %v4680 = vld [vmem:[%s4441 + $0x770] sm:$0xff]
        %v4681 = vld [vmem:[%s4441 + $0x778] sm:$0xff]
        %v4682 = vld [vmem:[%s4441 + $0x780] sm:$0xff]
        %v4683 = vld [vmem:[%s4441 + $0x788] sm:$0xff]
        %v4684 = vld [vmem:[%s4441 + $0x790] sm:$0xff]
        %v4685 = vld [vmem:[%s4441 + $0x798] sm:$0xff]
        %v4686 = vld [vmem:[%s4441 + $0x7a0] sm:$0xff]
        %v4687 = vld [vmem:[%s4441 + $0x7a8] sm:$0xff]
        %v4688 = vld [vmem:[%s4441 + $0x7b0] sm:$0xff]
        %v4689 = vld [vmem:[%s4441 + $0x7b8] sm:$0xff]
        %v4690 = vld [vmem:[%s4441 + $0x7c0] sm:$0xff]
        %v4691 = vld [vmem:[%s4441 + $0x7c8] sm:$0xff]
        %v4692 = vld [vmem:[%s4441 + $0x7d0] sm:$0xff]
        %v4693 = vld [vmem:[%s4441 + $0x7d8] sm:$0xff]
        %v4694 = vld [vmem:[%s4441 + $0x7e0] sm:$0xff]
        %v4695 = vld [vmem:[%s4441 + $0x7e8] sm:$0xff]
        %v4696 = vld [vmem:[%s4441 + $0x7f0] sm:$0xff]
        %v4697 = vld [vmem:[%s4441 + $0x7f8] sm:$0xff]
        %v4698 = vld [vmem:[%s4441 + $0x800] sm:$0xff]
        %v4699 = vld [vmem:[%s4441 + $0x808] sm:$0xff]
        %v4700 = vld [vmem:[%s4441 + $0x810] sm:$0xff]
        %v4701 = vld [vmem:[%s4441 + $0x818] sm:$0xff]
        %v4702 = vld [vmem:[%s4441 + $0x820] sm:$0xff]
        %v4703 = vld [vmem:[%s4441 + $0x828] sm:$0xff]
        %v4704 = vld [vmem:[%s4441 + $0x830] sm:$0xff]
        %v4705 = vld [vmem:[%s4441 + $0x838] sm:$0xff]
        %v4706 = vld [vmem:[%s4441 + $0x840] sm:$0xff]
        %v4707 = vld [vmem:[%s4441 + $0x848] sm:$0xff]
        %v4708 = vld [vmem:[%s4441 + $0x850] sm:$0xff]
        %v4709 = vld [vmem:[%s4441 + $0x858] sm:$0xff]
        %v4710 = vld [vmem:[%s4441 + $0x860] sm:$0xff]
        %v4711 = vld [vmem:[%s4441 + $0x868] sm:$0xff]
        %v4712 = vld [vmem:[%s4441 + $0x870] sm:$0xff]
        %v4713 = vld [vmem:[%s4441 + $0x878] sm:$0xff]
        %v4714 = vld [vmem:[%s4441 + $0x880] sm:$0xff]
        %v4715 = vld [vmem:[%s4441 + $0x888] sm:$0xff]
        %v4716 = vld [vmem:[%s4441 + $0x890] sm:$0xff]
        %v4717 = vld [vmem:[%s4441 + $0x898] sm:$0xff]
        %v4718 = vld [vmem:[%s4441 + $0x8a0] sm:$0xff]
        %v4719 = vld [vmem:[%s4441 + $0x8a8] sm:$0xff]
        %v4720 = vld [vmem:[%s4441 + $0x8b0] sm:$0xff]
        %v4721 = vld [vmem:[%s4441 + $0x8b8] sm:$0xff]
        %v4722 = vld [vmem:[%s4441 + $0x8c0] sm:$0xff]
        %v4723 = vld [vmem:[%s4441 + $0x8c8] sm:$0xff]
        %v4724 = vld [vmem:[%s4441 + $0x8d0] sm:$0xff]
        %v4725 = vld [vmem:[%s4441 + $0x8d8] sm:$0xff]
        %v4726 = vld [vmem:[%s4441 + $0x8e0] sm:$0xff]
        %v4727 = vld [vmem:[%s4441 + $0x8e8] sm:$0xff]
        %v4728 = vld [vmem:[%s4441 + $0x8f0] sm:$0xff]
        %v4729 = vld [vmem:[%s4441 + $0x8f8] sm:$0xff]
        %v4730 = vld [vmem:[%s4441 + $0x900] sm:$0xff]
        %v4731 = vld [vmem:[%s4441 + $0x908] sm:$0xff]
        %v4732 = vld [vmem:[%s4441 + $0x910] sm:$0xff]
        %v4733 = vld [vmem:[%s4441 + $0x918] sm:$0xff]
        %v4734 = vld [vmem:[%s4441 + $0x920] sm:$0xff]
        %v4735 = vld [vmem:[%s4441 + $0x928] sm:$0xff]
        %v4736 = vld [vmem:[%s4441 + $0x930] sm:$0xff]
        %v4737 = vld [vmem:[%s4441 + $0x938] sm:$0xff]
        %v4738 = vld [vmem:[%s4441 + $0x940] sm:$0xff]
        %v4739 = vld [vmem:[%s4441 + $0x948] sm:$0xff]
        %v4740 = vld [vmem:[%s4441 + $0x950] sm:$0xff]
        %v4741 = vld [vmem:[%s4441 + $0x958] sm:$0xff]
        %v4742 = vld [vmem:[%s4441 + $0x960] sm:$0xff]
        %v4743 = vld [vmem:[%s4441 + $0x968] sm:$0xff]
        %v4744 = vld [vmem:[%s4441 + $0x970] sm:$0xff]
        %v4745 = vld [vmem:[%s4441 + $0x978] sm:$0xff]
        %v4746 = vld [vmem:[%s4441 + $0x980] sm:$0xff]
        %v4747 = vld [vmem:[%s4441 + $0x988] sm:$0xff]
        %v4748 = vld [vmem:[%s4441 + $0x990] sm:$0xff]
        %v4749 = vld [vmem:[%s4441 + $0x998] sm:$0xff]
        %v4750 = vld [vmem:[%s4441 + $0x9a0] sm:$0xff]
        %v4751 = vld [vmem:[%s4441 + $0x9a8] sm:$0xff]
        %v4752 = vld [vmem:[%s4441 + $0x9b0] sm:$0xff]
        %v4753 = vld [vmem:[%s4441 + $0x9b8] sm:$0xff]
        %v4755 = vsel %vm3021, %v4438, 0
        %4757 = vmatprep.subr.mxu0 %v4443
        %4758 = vmatpush1.msra.mxu0 %v4442
        %4759 = vmatprep.subr.mxu0 %v4446
        %4760 = vmatpush1.msra.mxu0 %v4445
        %4761 = vmatprep.subr.mxu0 %v4449
        %4762 = vmatpush1.msra.mxu0 %v4448
        %4763 = vmatprep.subr.mxu0 %v4452
        %4764 = vmatpush1.msra.mxu0 %v4451
        %4765 = vmatprep.subr.mxu0 %v4455
        %4766 = vmatpush1.msra.mxu0 %v4454
        %4767 = vmatprep.subr.mxu0 %v4458
        %4768 = vmatpush1.msra.mxu0 %v4457
        %4769 = vmatprep.subr.mxu0 %v4461
        %4770 = vmatpush1.msra.mxu0 %v4460
        %4771 = vmatprep.subr.mxu0 %v4464
        %4772 = vmatpush1.msra.mxu0 %v4463
        %4773 = vmatprep.subr.mxu0 %v4467
        %4774 = vmatpush1.msra.mxu0 %v4466
        %4775 = vmatprep.subr.mxu0 %v4470
        %4776 = vmatpush1.msra.mxu0 %v4469
        %4777 = vmatprep.subr.mxu0 %v4473
        %4778 = vmatpush1.msra.mxu0 %v4472
        %4779 = vmatprep.subr.mxu0 %v4476
        %4780 = vmatpush1.msra.mxu0 %v4475
        %4781 = vmatprep.subr.mxu0 %v4479
        %4782 = vmatpush1.msra.mxu0 %v4478
        %4783 = vmatprep.subr.mxu0 %v4482
        %4784 = vmatpush1.msra.mxu0 %v4481
        %4785 = vmatprep.subr.mxu0 %v4485
        %4786 = vmatpush1.msra.mxu0 %v4484
        %4787 = vmatprep.subr.mxu0 %v4488
        %4788 = vmatpush1.msra.mxu0 %v4487
        %4789 = vmatprep.subr.mxu0 %v4491
        %4790 = vmatpush1.msra.mxu0 %v4490
        %4791 = vmatprep.subr.mxu0 %v4494
        %4792 = vmatpush1.msra.mxu0 %v4493
        %4793 = vmatprep.subr.mxu0 %v4497
        %4794 = vmatpush1.msra.mxu0 %v4496
        %4795 = vmatprep.subr.mxu0 %v4500
        %4796 = vmatpush1.msra.mxu0 %v4499
        %4797 = vmatprep.subr.mxu0 %v4503
        %4798 = vmatpush1.msra.mxu0 %v4502
        %4799 = vmatprep.subr.mxu0 %v4506
        %4800 = vmatpush1.msra.mxu0 %v4505
        %4801 = vmatprep.subr.mxu0 %v4509
        %4802 = vmatpush1.msra.mxu0 %v4508
        %4803 = vmatprep.subr.mxu0 %v4512
        %4804 = vmatpush1.msra.mxu0 %v4511
        %4805 = vmatprep.subr.mxu0 %v4515
        %4806 = vmatpush1.msra.mxu0 %v4514
        %4807 = vmatprep.subr.mxu0 %v4518
        %4808 = vmatpush1.msra.mxu0 %v4517
        %4809 = vmatprep.subr.mxu0 %v4521
        %4810 = vmatpush1.msra.mxu0 %v4520
        %4811 = vmatprep.subr.mxu0 %v4524
        %4812 = vmatpush1.msra.mxu0 %v4523
        %4813 = vmatprep.subr.mxu0 %v4527
        %4814 = vmatpush1.msra.mxu0 %v4526
        %4815 = vmatprep.subr.mxu0 %v4530
        %4816 = vmatpush1.msra.mxu0 %v4529
        %4817 = vmatprep.subr.mxu0 %v4533
        %4818 = vmatpush1.msra.mxu0 %v4532
        %4819 = vmatprep.subr.mxu0 %v4536
        %4820 = vmatpush1.msra.mxu0 %v4535
        %4821 = vmatprep.mubr.f32.mxu0 %v4227
        %4822 = vmatmul.mubr.f32.gmra.mrb[0].mxu0 %v4225
        %v4823 = vpop.f32.mrb[0].mxu0
        %v4824 = vadd.f32 0.0, %v4823
        %v4825 = vpop.f32.mrb[0].mxu0
        %v4826 = vadd.f32 0.0, %v4825
        %4827 = vdwg.mxu0
        %4828 = vmatprep.subr.mxu0 %v4539
        %4829 = vmatpush1.msra.mxu0 %v4538
        %4830 = vmatprep.subr.mxu0 %v4542
        %4831 = vmatpush1.msra.mxu0 %v4541
        %4832 = vmatprep.subr.mxu0 %v4545
        %4833 = vmatpush1.msra.mxu0 %v4544
        %4834 = vmatprep.subr.mxu0 %v4548
        %4835 = vmatpush1.msra.mxu0 %v4547
        %4836 = vmatprep.subr.mxu0 %v4551
        %4837 = vmatpush1.msra.mxu0 %v4550
        %4838 = vmatprep.subr.mxu0 %v4554
        %4839 = vmatpush1.msra.mxu0 %v4553
        %4840 = vmatprep.subr.mxu0 %v4557
        %4841 = vmatpush1.msra.mxu0 %v4556
        %4842 = vmatprep.subr.mxu0 %v4560
        %4843 = vmatpush1.msra.mxu0 %v4559
        %4844 = vmatprep.subr.mxu0 %v4563
        %4845 = vmatpush1.msra.mxu0 %v4562
        %4846 = vmatprep.subr.mxu0 %v4566
        %4847 = vmatpush1.msra.mxu0 %v4565
        %4848 = vmatprep.subr.mxu0 %v4569
        %4849 = vmatpush1.msra.mxu0 %v4568
        %4850 = vmatprep.subr.mxu0 %v4572
        %4851 = vmatpush1.msra.mxu0 %v4571
        %4852 = vmatprep.subr.mxu0 %v4575
        %4853 = vmatpush1.msra.mxu0 %v4574
        %4854 = vmatprep.subr.mxu0 %v4578
        %4855 = vmatpush1.msra.mxu0 %v4577
        %4856 = vmatprep.subr.mxu0 %v4581
        %4857 = vmatpush1.msra.mxu0 %v4580
        %4858 = vmatprep.subr.mxu0 %v4584
        %4859 = vmatpush1.msra.mxu0 %v4583
        %4860 = vmatprep.subr.mxu0 %v4587
        %4861 = vmatpush1.msra.mxu0 %v4586
        %4862 = vmatprep.subr.mxu0 %v4590
        %4863 = vmatpush1.msra.mxu0 %v4589
        %4864 = vmatprep.subr.mxu0 %v4593
        %4865 = vmatpush1.msra.mxu0 %v4592
        %4866 = vmatprep.subr.mxu0 %v4596
        %4867 = vmatpush1.msra.mxu0 %v4595
        %4868 = vmatprep.subr.mxu0 %v4599
        %4869 = vmatpush1.msra.mxu0 %v4598
        %4870 = vmatprep.subr.mxu0 %v4602
        %4871 = vmatpush1.msra.mxu0 %v4601
        %4872 = vmatprep.subr.mxu0 %v4605
        %4873 = vmatpush1.msra.mxu0 %v4604
        %4874 = vmatprep.subr.mxu0 %v4608
        %4875 = vmatpush1.msra.mxu0 %v4607
        %4876 = vmatprep.subr.mxu0 %v4611
        %4877 = vmatpush1.msra.mxu0 %v4610
        %4878 = vmatprep.subr.mxu0 %v4614
        %4879 = vmatpush1.msra.mxu0 %v4613
        %4880 = vmatprep.subr.mxu0 %v4617
        %4881 = vmatpush1.msra.mxu0 %v4616
        %4882 = vmatprep.subr.mxu0 %v4620
        %4883 = vmatpush1.msra.mxu0 %v4619
        %4884 = vmatprep.subr.mxu0 %v4623
        %4885 = vmatpush1.msra.mxu0 %v4622
        %4886 = vmatprep.subr.mxu0 %v4626
        %4887 = vmatpush1.msra.mxu0 %v4625
        %4888 = vmatprep.subr.mxu0 %v4629
        %4889 = vmatpush1.msra.mxu0 %v4628
        %4890 = vmatprep.subr.mxu0 %v4632
        %4891 = vmatpush1.msra.mxu0 %v4631
        %4892 = vmatprep.mubr.f32.mxu0 %v4298
        %4893 = vmatmul.mubr.f32.gmra.mrb[0].mxu0 %v4296
        %v4894 = vpop.f32.mrb[0].mxu0
        %v4895 = vadd.f32 %v4824, %v4894
        %v4896 = vpop.f32.mrb[0].mxu0
        %v4897 = vadd.f32 %v4826, %v4896
        %4898 = vdwg.mxu0
        %4899 = vmatprep.subr.mxu0 %v4635
        %4900 = vmatpush1.msra.mxu0 %v4634
        %4901 = vmatprep.subr.mxu0 %v4638
        %4902 = vmatpush1.msra.mxu0 %v4637
        %4903 = vmatprep.subr.mxu0 %v4641
        %4904 = vmatpush1.msra.mxu0 %v4640
        %4905 = vmatprep.subr.mxu0 %v4644
        %4906 = vmatpush1.msra.mxu0 %v4643
        %4907 = vmatprep.subr.mxu0 %v4647
        %4908 = vmatpush1.msra.mxu0 %v4646
        %4909 = vmatprep.subr.mxu0 %v4650
        %4910 = vmatpush1.msra.mxu0 %v4649
        %4911 = vmatprep.subr.mxu0 %v4653
        %4912 = vmatpush1.msra.mxu0 %v4652
        %4913 = vmatprep.subr.mxu0 %v4656
        %4914 = vmatpush1.msra.mxu0 %v4655
        %4915 = vmatprep.subr.mxu0 %v4659
        %4916 = vmatpush1.msra.mxu0 %v4658
        %4917 = vmatprep.subr.mxu0 %v4662
        %4918 = vmatpush1.msra.mxu0 %v4661
        %4919 = vmatprep.subr.mxu0 %v4665
        %4920 = vmatpush1.msra.mxu0 %v4664
        %4921 = vmatprep.subr.mxu0 %v4668
        %4922 = vmatpush1.msra.mxu0 %v4667
        %4923 = vmatprep.subr.mxu0 %v4671
        %4924 = vmatpush1.msra.mxu0 %v4670
        %4925 = vmatprep.subr.mxu0 %v4674
        %4926 = vmatpush1.msra.mxu0 %v4673
        %4927 = vmatprep.subr.mxu0 %v4677
        %4928 = vmatpush1.msra.mxu0 %v4676
        %4929 = vmatprep.subr.mxu0 %v4680
        %4930 = vmatpush1.msra.mxu0 %v4679
        %4931 = vmatprep.subr.mxu0 %v4683
        %4932 = vmatpush1.msra.mxu0 %v4682
        %4933 = vmatprep.subr.mxu0 %v4686
        %4934 = vmatpush1.msra.mxu0 %v4685
        %4935 = vmatprep.subr.mxu0 %v4689
        %4936 = vmatpush1.msra.mxu0 %v4688
        %4937 = vmatprep.subr.mxu0 %v4692
        %4938 = vmatpush1.msra.mxu0 %v4691
        %4939 = vmatprep.subr.mxu0 %v4695
        %4940 = vmatpush1.msra.mxu0 %v4694
        %4941 = vmatprep.subr.mxu0 %v4698
        %4942 = vmatpush1.msra.mxu0 %v4697
        %4943 = vmatprep.subr.mxu0 %v4701
        %4944 = vmatpush1.msra.mxu0 %v4700
        %4945 = vmatprep.subr.mxu0 %v4704
        %4946 = vmatpush1.msra.mxu0 %v4703
        %4947 = vmatprep.subr.mxu0 %v4707
        %4948 = vmatpush1.msra.mxu0 %v4706
        %4949 = vmatprep.subr.mxu0 %v4710
        %4950 = vmatpush1.msra.mxu0 %v4709
        %4951 = vmatprep.subr.mxu0 %v4713
        %4952 = vmatpush1.msra.mxu0 %v4712
        %4953 = vmatprep.subr.mxu0 %v4716
        %4954 = vmatpush1.msra.mxu0 %v4715
        %4955 = vmatprep.subr.mxu0 %v4719
        %4956 = vmatpush1.msra.mxu0 %v4718
        %4957 = vmatprep.subr.mxu0 %v4722
        %4958 = vmatpush1.msra.mxu0 %v4721
        %4959 = vmatprep.subr.mxu0 %v4725
        %4960 = vmatpush1.msra.mxu0 %v4724
        %4961 = vmatprep.subr.mxu0 %v4728
        %4962 = vmatpush1.msra.mxu0 %v4727
        %4963 = vmatprep.mubr.f32.mxu0 %v4369
        %4964 = vmatmul.mubr.f32.gmra.mrb[0].mxu0 %v4367
        %v4965 = vpop.f32.mrb[0].mxu0
        %v4966 = vadd.f32 %v4895, %v4965
        %v4967 = vpop.f32.mrb[0].mxu0
        %v4968 = vadd.f32 %v4897, %v4967
        %4969 = vdwg.mxu0
        %4970 = vmatprep.subr.mxu0 %v4731
        %4971 = vmatpush1.msra.mxu0 %v4730
        %4972 = vmatprep.subr.mxu0 %v4734
        %4973 = vmatpush1.msra.mxu0 %v4733
        %4974 = vmatprep.subr.mxu0 %v4737
        %4975 = vmatpush1.msra.mxu0 %v4736
        %4976 = vmatprep.subr.mxu0 %v4740
        %4977 = vmatpush1.msra.mxu0 %v4739
        %4978 = vmatprep.subr.mxu0 %v4743
        %4979 = vmatpush1.msra.mxu0 %v4742
        %4980 = vmatprep.subr.mxu0 %v4746
        %4981 = vmatpush1.msra.mxu0 %v4745
        %4982 = vmatprep.subr.mxu0 %v4749
        %4983 = vmatpush1.msra.mxu0 %v4748
        %4984 = vmatprep.subr.mxu0 %v4752
        %4985 = vmatpush1.msra.mxu0 %v4751
        %4986 = vmatprep.subr.mxu0 0.0
        %4987 = vmatpush1.msra.mxu0 0.0
        %4988 = vmatprep.subr.mxu0 0.0
        %4989 = vmatpush1.msra.mxu0 0.0
        %4990 = vmatprep.subr.mxu0 0.0
        %4991 = vmatpush1.msra.mxu0 0.0
        %4992 = vmatprep.subr.mxu0 0.0
        %4993 = vmatpush1.msra.mxu0 0.0
        %4994 = vmatprep.subr.mxu0 0.0
        %4995 = vmatpush1.msra.mxu0 0.0
        %4996 = vmatprep.subr.mxu0 0.0
        %4997 = vmatpush1.msra.mxu0 0.0
        %4998 = vmatprep.subr.mxu0 0.0
        %4999 = vmatpush1.msra.mxu0 0.0
        %5000 = vmatprep.subr.mxu0 0.0
        %5001 = vmatpush1.msra.mxu0 0.0
        %5002 = vmatprep.subr.mxu0 0.0
        %5003 = vmatpush1.msra.mxu0 0.0
        %5004 = vmatprep.subr.mxu0 0.0
        %5005 = vmatpush1.msra.mxu0 0.0
        %5006 = vmatprep.subr.mxu0 0.0
        %5007 = vmatpush1.msra.mxu0 0.0
        %5008 = vmatprep.subr.mxu0 0.0
        %5009 = vmatpush1.msra.mxu0 0.0
        %5010 = vmatprep.subr.mxu0 0.0
        %5011 = vmatpush1.msra.mxu0 0.0
        %5012 = vmatprep.subr.mxu0 0.0
        %5013 = vmatpush1.msra.mxu0 0.0
        %5014 = vmatprep.subr.mxu0 0.0
        %5015 = vmatpush1.msra.mxu0 0.0
        %5016 = vmatprep.subr.mxu0 0.0
        %5017 = vmatpush1.msra.mxu0 0.0
        %5018 = vmatprep.subr.mxu0 0.0
        %5019 = vmatpush1.msra.mxu0 0.0
        %5020 = vmatprep.subr.mxu0 0.0
        %5021 = vmatpush1.msra.mxu0 0.0
        %5022 = vmatprep.subr.mxu0 0.0
        %5023 = vmatpush1.msra.mxu0 0.0
        %5024 = vmatprep.subr.mxu0 0.0
        %5025 = vmatpush1.msra.mxu0 0.0
        %5026 = vmatprep.subr.mxu0 0.0
        %5027 = vmatpush1.msra.mxu0 0.0
        %5028 = vmatprep.subr.mxu0 0.0
        %5029 = vmatpush1.msra.mxu0 0.0
        %5030 = vmatprep.subr.mxu0 0.0
        %5031 = vmatpush1.msra.mxu0 0.0
        %5032 = vmatprep.subr.mxu0 0.0
        %5033 = vmatpush1.msra.mxu0 0.0
        %5034 = vmatprep.mubr.f32.mxu0 0.0
        %5035 = vmatmul.mubr.f32.gmra.mrb[0].mxu0 %v4755
        %v5036 = vpop.f32.mrb[0].mxu0
        %v5037 = vadd.f32 %v4966, %v5036
        %v5038 = vpop.f32.mrb[0].mxu0
        %v5039 = vadd.f32 %v4968, %v5038
        %5040 = vdwg.mxu0
        %5041 = vmatprep.subr.mxu0 0.0
        %5042 = vmatpush1.msra.mxu0 %v4444
        %5043 = vmatprep.subr.mxu0 0.0
        %5044 = vmatpush1.msra.mxu0 %v4447
        %5045 = vmatprep.subr.mxu0 0.0
        %5046 = vmatpush1.msra.mxu0 %v4450
        %5047 = vmatprep.subr.mxu0 0.0
        %5048 = vmatpush1.msra.mxu0 %v4453
        %5049 = vmatprep.subr.mxu0 0.0
        %5050 = vmatpush1.msra.mxu0 %v4456
        %5051 = vmatprep.subr.mxu0 0.0
        %5052 = vmatpush1.msra.mxu0 %v4459
        %5053 = vmatprep.subr.mxu0 0.0
        %5054 = vmatpush1.msra.mxu0 %v4462
        %5055 = vmatprep.subr.mxu0 0.0
        %5056 = vmatpush1.msra.mxu0 %v4465
        %5057 = vmatprep.subr.mxu0 0.0
        %5058 = vmatpush1.msra.mxu0 %v4468
        %5059 = vmatprep.subr.mxu0 0.0
        %5060 = vmatpush1.msra.mxu0 %v4471
        %5061 = vmatprep.subr.mxu0 0.0
        %5062 = vmatpush1.msra.mxu0 %v4474
        %5063 = vmatprep.subr.mxu0 0.0
        %5064 = vmatpush1.msra.mxu0 %v4477
        %5065 = vmatprep.subr.mxu0 0.0
        %5066 = vmatpush1.msra.mxu0 %v4480
        %5067 = vmatprep.subr.mxu0 0.0
        %5068 = vmatpush1.msra.mxu0 %v4483
        %5069 = vmatprep.subr.mxu0 0.0
        %5070 = vmatpush1.msra.mxu0 %v4486
        %5071 = vmatprep.subr.mxu0 0.0
        %5072 = vmatpush1.msra.mxu0 %v4489
        %5073 = vmatprep.subr.mxu0 0.0
        %5074 = vmatpush1.msra.mxu0 %v4492
        %5075 = vmatprep.subr.mxu0 0.0
        %5076 = vmatpush1.msra.mxu0 %v4495
        %5077 = vmatprep.subr.mxu0 0.0
        %5078 = vmatpush1.msra.mxu0 %v4498
        %5079 = vmatprep.subr.mxu0 0.0
        %5080 = vmatpush1.msra.mxu0 %v4501
        %5081 = vmatprep.subr.mxu0 0.0
        %5082 = vmatpush1.msra.mxu0 %v4504
        %5083 = vmatprep.subr.mxu0 0.0
        %5084 = vmatpush1.msra.mxu0 %v4507
        %5085 = vmatprep.subr.mxu0 0.0
        %5086 = vmatpush1.msra.mxu0 %v4510
        %5087 = vmatprep.subr.mxu0 0.0
        %5088 = vmatpush1.msra.mxu0 %v4513
        %5089 = vmatprep.subr.mxu0 0.0
        %5090 = vmatpush1.msra.mxu0 %v4516
        %5091 = vmatprep.subr.mxu0 0.0
        %5092 = vmatpush1.msra.mxu0 %v4519
        %5093 = vmatprep.subr.mxu0 0.0
        %5094 = vmatpush1.msra.mxu0 %v4522
        %5095 = vmatprep.subr.mxu0 0.0
        %5096 = vmatpush1.msra.mxu0 %v4525
        %5097 = vmatprep.subr.mxu0 0.0
        %5098 = vmatpush1.msra.mxu0 %v4528
        %5099 = vmatprep.subr.mxu0 0.0
        %5100 = vmatpush1.msra.mxu0 %v4531
        %5101 = vmatprep.subr.mxu0 0.0
        %5102 = vmatpush1.msra.mxu0 %v4534
        %5103 = vmatprep.subr.mxu0 0.0
        %5104 = vmatpush1.msra.mxu0 %v4537
        %5105 = vmatprep.mubr.f32.mxu0 %v4227
        %5106 = vmatmul.mubr.f32.gmra.mrb[0].mxu0 %v4225
        %v5107 = vpop.f32.mrb[0].mxu0
        %v5108 = vadd.f32 0.0, %v5107
        %v5109 = vpop.f32.mrb[0].mxu0
        %5110 = vdwg.mxu0
        %5111 = vmatprep.subr.mxu0 0.0
        %5112 = vmatpush1.msra.mxu0 %v4540
        %5113 = vmatprep.subr.mxu0 0.0
        %5114 = vmatpush1.msra.mxu0 %v4543
        %5115 = vmatprep.subr.mxu0 0.0
        %5116 = vmatpush1.msra.mxu0 %v4546
        %5117 = vmatprep.subr.mxu0 0.0
        %5118 = vmatpush1.msra.mxu0 %v4549
        %5119 = vmatprep.subr.mxu0 0.0
        %5120 = vmatpush1.msra.mxu0 %v4552
        %5121 = vmatprep.subr.mxu0 0.0
        %5122 = vmatpush1.msra.mxu0 %v4555
        %5123 = vmatprep.subr.mxu0 0.0
        %5124 = vmatpush1.msra.mxu0 %v4558
        %5125 = vmatprep.subr.mxu0 0.0
        %5126 = vmatpush1.msra.mxu0 %v4561
        %5127 = vmatprep.subr.mxu0 0.0
        %5128 = vmatpush1.msra.mxu0 %v4564
        %5129 = vmatprep.subr.mxu0 0.0
        %5130 = vmatpush1.msra.mxu0 %v4567
        %5131 = vmatprep.subr.mxu0 0.0
        %5132 = vmatpush1.msra.mxu0 %v4570
        %5133 = vmatprep.subr.mxu0 0.0
        %5134 = vmatpush1.msra.mxu0 %v4573
        %5135 = vmatprep.subr.mxu0 0.0
        %5136 = vmatpush1.msra.mxu0 %v4576
        %5137 = vmatprep.subr.mxu0 0.0
        %5138 = vmatpush1.msra.mxu0 %v4579
        %5139 = vmatprep.subr.mxu0 0.0
        %5140 = vmatpush1.msra.mxu0 %v4582
        %5141 = vmatprep.subr.mxu0 0.0
        %5142 = vmatpush1.msra.mxu0 %v4585
        %5143 = vmatprep.subr.mxu0 0.0
        %5144 = vmatpush1.msra.mxu0 %v4588
        %5145 = vmatprep.subr.mxu0 0.0
        %5146 = vmatpush1.msra.mxu0 %v4591
        %5147 = vmatprep.subr.mxu0 0.0
        %5148 = vmatpush1.msra.mxu0 %v4594
        %5149 = vmatprep.subr.mxu0 0.0
        %5150 = vmatpush1.msra.mxu0 %v4597
        %5151 = vmatprep.subr.mxu0 0.0
        %5152 = vmatpush1.msra.mxu0 %v4600
        %5153 = vmatprep.subr.mxu0 0.0
        %5154 = vmatpush1.msra.mxu0 %v4603
        %5155 = vmatprep.subr.mxu0 0.0
        %5156 = vmatpush1.msra.mxu0 %v4606
        %5157 = vmatprep.subr.mxu0 0.0
        %5158 = vmatpush1.msra.mxu0 %v4609
        %5159 = vmatprep.subr.mxu0 0.0
        %5160 = vmatpush1.msra.mxu0 %v4612
        %5161 = vmatprep.subr.mxu0 0.0
        %5162 = vmatpush1.msra.mxu0 %v4615
        %5163 = vmatprep.subr.mxu0 0.0
        %5164 = vmatpush1.msra.mxu0 %v4618
        %5165 = vmatprep.subr.mxu0 0.0
        %5166 = vmatpush1.msra.mxu0 %v4621
        %5167 = vmatprep.subr.mxu0 0.0
        %5168 = vmatpush1.msra.mxu0 %v4624
        %5169 = vmatprep.subr.mxu0 0.0
        %5170 = vmatpush1.msra.mxu0 %v4627
        %5171 = vmatprep.subr.mxu0 0.0
        %5172 = vmatpush1.msra.mxu0 %v4630
        %5173 = vmatprep.subr.mxu0 0.0
        %5174 = vmatpush1.msra.mxu0 %v4633
        %5175 = vmatprep.mubr.f32.mxu0 %v4298
        %5176 = vmatmul.mubr.f32.gmra.mrb[0].mxu0 %v4296
        %v5177 = vpop.f32.mrb[0].mxu0
        %v5178 = vadd.f32 %v5108, %v5177
        %v5179 = vpop.f32.mrb[0].mxu0
        %5180 = vdwg.mxu0
        %5181 = vmatprep.subr.mxu0 0.0
        %5182 = vmatpush1.msra.mxu0 %v4636
        %5183 = vmatprep.subr.mxu0 0.0
        %5184 = vmatpush1.msra.mxu0 %v4639
        %5185 = vmatprep.subr.mxu0 0.0
        %5186 = vmatpush1.msra.mxu0 %v4642
        %5187 = vmatprep.subr.mxu0 0.0
        %5188 = vmatpush1.msra.mxu0 %v4645
        %5189 = vmatprep.subr.mxu0 0.0
        %5190 = vmatpush1.msra.mxu0 %v4648
        %5191 = vmatprep.subr.mxu0 0.0
        %5192 = vmatpush1.msra.mxu0 %v4651
        %5193 = vmatprep.subr.mxu0 0.0
        %5194 = vmatpush1.msra.mxu0 %v4654
        %5195 = vmatprep.subr.mxu0 0.0
        %5196 = vmatpush1.msra.mxu0 %v4657
        %5197 = vmatprep.subr.mxu0 0.0
        %5198 = vmatpush1.msra.mxu0 %v4660
        %5199 = vmatprep.subr.mxu0 0.0
        %5200 = vmatpush1.msra.mxu0 %v4663
        %5201 = vmatprep.subr.mxu0 0.0
        %5202 = vmatpush1.msra.mxu0 %v4666
        %5203 = vmatprep.subr.mxu0 0.0
        %5204 = vmatpush1.msra.mxu0 %v4669
        %5205 = vmatprep.subr.mxu0 0.0
        %5206 = vmatpush1.msra.mxu0 %v4672
        %5207 = vmatprep.subr.mxu0 0.0
        %5208 = vmatpush1.msra.mxu0 %v4675
        %5209 = vmatprep.subr.mxu0 0.0
        %5210 = vmatpush1.msra.mxu0 %v4678
        %5211 = vmatprep.subr.mxu0 0.0
        %5212 = vmatpush1.msra.mxu0 %v4681
        %5213 = vmatprep.subr.mxu0 0.0
        %5214 = vmatpush1.msra.mxu0 %v4684
        %5215 = vmatprep.subr.mxu0 0.0
        %5216 = vmatpush1.msra.mxu0 %v4687
        %5217 = vmatprep.subr.mxu0 0.0
        %5218 = vmatpush1.msra.mxu0 %v4690
        %5219 = vmatprep.subr.mxu0 0.0
        %5220 = vmatpush1.msra.mxu0 %v4693
        %5221 = vmatprep.subr.mxu0 0.0
        %5222 = vmatpush1.msra.mxu0 %v4696
        %5223 = vmatprep.subr.mxu0 0.0
        %5224 = vmatpush1.msra.mxu0 %v4699
        %5225 = vmatprep.subr.mxu0 0.0
        %5226 = vmatpush1.msra.mxu0 %v4702
        %5227 = vmatprep.subr.mxu0 0.0
        %5228 = vmatpush1.msra.mxu0 %v4705
        %5229 = vmatprep.subr.mxu0 0.0
        %5230 = vmatpush1.msra.mxu0 %v4708
        %5231 = vmatprep.subr.mxu0 0.0
        %5232 = vmatpush1.msra.mxu0 %v4711
        %5233 = vmatprep.subr.mxu0 0.0
        %5234 = vmatpush1.msra.mxu0 %v4714
        %5235 = vmatprep.subr.mxu0 0.0
        %5236 = vmatpush1.msra.mxu0 %v4717
        %5237 = vmatprep.subr.mxu0 0.0
        %5238 = vmatpush1.msra.mxu0 %v4720
        %5239 = vmatprep.subr.mxu0 0.0
        %5240 = vmatpush1.msra.mxu0 %v4723
        %5241 = vmatprep.subr.mxu0 0.0
        %5242 = vmatpush1.msra.mxu0 %v4726
        %5243 = vmatprep.subr.mxu0 0.0
        %5244 = vmatpush1.msra.mxu0 %v4729
        %5245 = vmatprep.mubr.f32.mxu0 %v4369
        %5246 = vmatmul.mubr.f32.gmra.mrb[0].mxu0 %v4367
        %v5247 = vpop.f32.mrb[0].mxu0
        %v5248 = vadd.f32 %v5178, %v5247
        %v5249 = vpop.f32.mrb[0].mxu0
        %5250 = vdwg.mxu0
        %5251 = vmatprep.subr.mxu0 0.0
        %5252 = vmatpush1.msra.mxu0 %v4732
        %5253 = vmatprep.subr.mxu0 0.0
        %5254 = vmatpush1.msra.mxu0 %v4735
        %5255 = vmatprep.subr.mxu0 0.0
        %5256 = vmatpush1.msra.mxu0 %v4738
        %5257 = vmatprep.subr.mxu0 0.0
        %5258 = vmatpush1.msra.mxu0 %v4741
        %5259 = vmatprep.subr.mxu0 0.0
        %5260 = vmatpush1.msra.mxu0 %v4744
        %5261 = vmatprep.subr.mxu0 0.0
        %5262 = vmatpush1.msra.mxu0 %v4747
        %5263 = vmatprep.subr.mxu0 0.0
        %5264 = vmatpush1.msra.mxu0 %v4750
        %5265 = vmatprep.subr.mxu0 0.0
        %5266 = vmatpush1.msra.mxu0 %v4753
        %5267 = vmatprep.subr.mxu0 0.0
        %5268 = vmatpush1.msra.mxu0 0.0
        %5269 = vmatprep.subr.mxu0 0.0
        %5270 = vmatpush1.msra.mxu0 0.0
        %5271 = vmatprep.subr.mxu0 0.0
        %5272 = vmatpush1.msra.mxu0 0.0
        %5273 = vmatprep.subr.mxu0 0.0
        %5274 = vmatpush1.msra.mxu0 0.0
        %5275 = vmatprep.subr.mxu0 0.0
        %5276 = vmatpush1.msra.mxu0 0.0
        %5277 = vmatprep.subr.mxu0 0.0
        %5278 = vmatpush1.msra.mxu0 0.0
        %5279 = vmatprep.subr.mxu0 0.0
        %5280 = vmatpush1.msra.mxu0 0.0
        %5281 = vmatprep.subr.mxu0 0.0
        %5282 = vmatpush1.msra.mxu0 0.0
        %5283 = vmatprep.subr.mxu0 0.0
        %5284 = vmatpush1.msra.mxu0 0.0
        %5285 = vmatprep.subr.mxu0 0.0
        %5286 = vmatpush1.msra.mxu0 0.0
        %5287 = vmatprep.subr.mxu0 0.0
        %5288 = vmatpush1.msra.mxu0 0.0
        %5289 = vmatprep.subr.mxu0 0.0
        %5290 = vmatpush1.msra.mxu0 0.0
        %5291 = vmatprep.subr.mxu0 0.0
        %5292 = vmatpush1.msra.mxu0 0.0
        %5293 = vmatprep.subr.mxu0 0.0
        %5294 = vmatpush1.msra.mxu0 0.0
        %5295 = vmatprep.subr.mxu0 0.0
        %5296 = vmatpush1.msra.mxu0 0.0
        %5297 = vmatprep.subr.mxu0 0.0
        %5298 = vmatpush1.msra.mxu0 0.0
        %5299 = vmatprep.subr.mxu0 0.0
        %5300 = vmatpush1.msra.mxu0 0.0
        %5301 = vmatprep.subr.mxu0 0.0
        %5302 = vmatpush1.msra.mxu0 0.0
        %5303 = vmatprep.subr.mxu0 0.0
        %5304 = vmatpush1.msra.mxu0 0.0
        %5305 = vmatprep.subr.mxu0 0.0
        %5306 = vmatpush1.msra.mxu0 0.0
        %5307 = vmatprep.subr.mxu0 0.0
        %5308 = vmatpush1.msra.mxu0 0.0
        %5309 = vmatprep.subr.mxu0 0.0
        %5310 = vmatpush1.msra.mxu0 0.0
        %5311 = vmatprep.subr.mxu0 0.0
        %5312 = vmatpush1.msra.mxu0 0.0
        %5313 = vmatprep.subr.mxu0 0.0
        %5314 = vmatpush1.msra.mxu0 0.0
        %5315 = vmatprep.mubr.f32.mxu0 0.0
        %5316 = vmatmul.mubr.f32.gmra.mrb[0].mxu0 %v4755
        %v5317 = vpop.f32.mrb[0].mxu0
        %v5318 = vadd.f32 %v5248, %v5317
        %v5319 = vpop.f32.mrb[0].mxu0
        %5320 = vdwg.mxu0
        %v5321 = vadd.f32 %v3872, %v5037
        %v5322 = vadd.f32 %v3874, %v5039
        %v5323 = vadd.f32 %v4153, %v5318
        %v5324 = vld [vmem:[#allocation8] sm:$0x7]
        %v5326 = vlaneseq
        %v5327 = vshrl.u32 %v5326, 7
        %v5328 = vsub.s32 0, %v5327
        %v5329 = vrot.slane %v5324, %v5328
        %v5330 = vlaneseq
        %v5331 = vshrl.u32 %v5330, 7
        %v5332 = vsub.s32 1, %v5331
        %v5333 = vrot.slane %v5324, %v5332
        %v5334 = vlaneseq
        %v5335 = vshrl.u32 %v5334, 7
        %v5336 = vsub.s32 2, %v5335
        %v5337 = vrot.slane %v5324, %v5336
        %v5341 = vadd.f32 %v5321, %v5329
        %v5342 = vadd.f32 %v5322, %v5333
        %v5343 = vadd.f32 %v5323, %v5337
        %v5344 = vmul.f32 %v5341, 0.2
        %v5345 = vmul.f32 %v5342, 0.2
        %v5346 = vmul.f32 %v5343, 0.2
        %v5347 = vmax.f32 %v5341, %v5344
        %v5348 = vmax.f32 %v5342, %v5345
        %v5349 = vmax.f32 %v5343, %v5346
        %v5350 = vld [vmem:[#allocation10] sm:$0x3f]
        %v5351 = vld [vmem:[#allocation10 + $0x8] sm:$0x3f]
        %v5352 = vld [vmem:[#allocation10 + $0x10] sm:$0x3f]
        %v5353 = vmul.f32 %v5347, %v5350
        %v5354 = vmul.f32 %v5348, %v5351
        %v5355 = vmul.f32 %v5349, %v5352
        %vm5356 = vcmask 1045504
        %v5357 = vsel %vm5356, %v5353, 0.0
        %v5358 = vsel %vm5356, %v5354, 0.0
        %v5359 = vadd.f32 %v5357, %v5358
        %v5360 = vsel %vm5356, %v5355, 0.0
        %v5361 = vadd.f32 %v5359, %v5360
        %5362 = vadd.xlane.f32.xlu0 %v5361
        %v5363 = vpop.xlane.xlu0 %5362
        %v5364 = vsel %vm5356, %v5363, 0.0
        %v5365 = vrot.slane %v5364, 4
        %v5366 = vadd.f32 %v5364, %v5365
        %v5367 = vrot.slane %v5366, 2
        %v5368 = vadd.f32 %v5366, %v5367
        %v5369 = vrot.slane %v5368, 1
        %v5370 = vadd.f32 %v5368, %v5369
        %v5371 = vld [vmem:[#allocation2] sm:$0x1]
        %v5372 = vadd.f32 %v5370, %v5371
        %v5373 = vsub.f32 0.0, %v5372
        %v5374 = vmul.f32 %v5373, 1.442695
        %v5375 = vpow.pop %v5374
        %v5376 = vadd.f32 %v5375, 1.0
        %v5377 = vrcp.pop %v5376
        %v5378 = vmul.f32 1.0, %v5377
        %vm5379 = vcmask 0
        %5380 = vst.msk [vmem:[%s343] sm:$0x1] %vm5379, %v5378
        %p5381 = scmp.lt.s32.totalorder %s23, 1
        %s5382 = scalar_select %p5381, %s23, 1
        %s5383 = scalar_lea.vmem %s7, %s5382
        // Predicated region
        $region69: #{discriminator_forward.1} parent=47 // pred_check
          %p5384 = pneg %p193
        $region70: #{discriminator_forward.1} parent=47 // pred_check_branch
          %5386 = sbr.rel (%p5384) target = $region72
        $region71: #{discriminator_forward.1} parent=47 // pred_region
          _
        $region72: #{discriminator_forward.1} parent=47 // pred_fallthru
          _
      $region48: #{discriminator_forward.1} parent=5 // pred_fallthru
        _
      %p5387 = scmp.le.s32.totalorder 2, %s18
      // Predicated region
      $region73: #{discriminator_forward.1} parent=5 // pred_check
        %p5388 = pneg %p5387
      $region74: #{discriminator_forward.1} parent=5 // pred_check_branch
        %5390 = sbr.rel (%p5388) target = $region76
      $region75: #{discriminator_forward.1} parent=5 // pred_region
        %s5391 = ssub.s32 %s18, 2
        // Predicated region
        $region77: #{discriminator_forward.1} parent=75 // pred_check
          %p5392 = pneg %p199
        $region78: #{discriminator_forward.1} parent=75 // pred_check_branch
          %5394 = sbr.rel (%p5392) target = $region80
        $region79: #{discriminator_forward.1} parent=75 // pred_region
          %p5395 = scmp.lt.s32.totalorder %s24, 1
          %s5396 = scalar_select %p5395, %s24, 1
          %s5397 = scalar_lea.vmem %s7, %s5396
        $region80: #{discriminator_forward.1} parent=75 // pred_fallthru
          _
      $region76: #{discriminator_forward.1} parent=5 // pred_fallthru
        _
    $region6: #{discriminator_forward.1} parent=1 // loop_footer
      %s22 = sadd.s32 1, %s18
    $region7: #{discriminator_forward.1} parent=1 // loop_footer_branch
      %17 = sbr.rel target = $region3
    $region8: #{discriminator_forward.1} parent=1 // loop_exit
      _
    %5398 = vsyncpa [#allocation4], 1
    %s5399 = scalar_lea.sflag [#allocation4], 1
    %5400 = vsyncpa %s5399, 1
    %5401 = vsyncpa [#allocation6], 1
    %5402 = vsyncpa [#allocation9], 1

</llo_original>
